<compile_context>
chip_gen: v5e
topology: v5e:2x2
jax: 0.10.0
libtpu: 0.0.40
codegen_flags: <defaults>
</compile_context>

<pallas_src>
import jax
import jax.numpy as jnp
from jax.experimental import pallas as pl
from jax.experimental.pallas import tpu as pltpu

# ----------------------------- model dims (small) -----------------------------
VOCAB = 16
PAD_IDX = 0          # lm.config['model']['embedding'].padding_idx (synthetic)
D_MODEL = 32         # lm transformer embed_dim  (== pred-head c_in)
N_LAYERS = 2
N_HEADS = 4
D_HEAD = D_MODEL // N_HEADS
D_FF = 64
HEAD_EMBED = 32      # head_embed_dim
HEAD_BLOCKS = 6      # head_num_blocks
BATCH = 2
SEQ = 16

# Order in which constant (grid-invariant) arrays are passed to the kernel.
_CONST_ORDER = (
    "rope_cos", "rope_sin", "rope_rot", "head_mask", "shift_pn",
    "ln1_g", "ln1_b", "wq", "bq", "wk", "bk", "wv", "bv", "wo", "bo",
    "ln2_g", "ln2_b", "w1", "w3", "w2",
    "lnf_g", "lnf_b",
    "head_win", "head_bin", "conv_w", "conv_b", "head_wout", "head_bout",
    "scaler_mean", "scaler_scale",
)


# ============================== fused Pallas kernel ============================
def _fused_forward_kernel(
    # data-dependent inputs (whole batch folded into rows)
    x_ref, bias_ref, keep_ref, pool_ref,
    # layout constants
    cos_ref, sin_ref, rot_ref, hmask_ref, shift_ref,
    # stacked transformer layer weights (leading dim = layer)
    ln1g_ref, ln1b_ref, wq_ref, bq_ref, wk_ref, bk_ref, wv_ref, bv_ref,
    wo_ref, bo_ref, ln2g_ref, ln2b_ref, w1_ref, w3_ref, w2_ref,
    # final LN
    lnfg_ref, lnfb_ref,
    # prediction head
    hwin_ref, hbin_ref, convw_ref, convb_ref, hwout_ref, hbout_ref,
    # scaler
    smean_ref, sscale_ref,
    # outputs
    pred_ref, unscaled_ref,
):
    def mm(a, b):
        return jnp.dot(a, b, preferred_element_type=jnp.float32)

    def layer_norm(v, g, b):
        mu = jnp.mean(v, axis=-1, keepdims=True)
        var = jnp.mean((v - mu) * (v - mu), axis=-1, keepdims=True)
        return (v - mu) * jax.lax.rsqrt(var + 1e-5) * g + b

    x = x_ref[...]                         # (BS, D)
    bias = bias_ref[...]                   # (BS, BS) key-pad + cross-batch bias
    keep = keep_ref[...]                   # (BS, 1)
    cos = cos_ref[...]                     # (BS, D) head-tiled rotary cos
    sin = sin_ref[...]                     # (BS, D)
    rot = rot_ref[...]                     # (D, D) block-diag rotate-half

    bs, d = x.shape
    n_layers = ln1g_ref.shape[0]
    n_heads = hmask_ref.shape[0]
    d_head = d // n_heads
    scale = 1.0 / float(d_head) ** 0.5

    def rope(t):                           # t: (BS, D), all heads at once
        return t * cos + mm(t, rot) * sin

    # ----------------------- transformer blocks (pre-LN) -----------------------
    for layer in range(n_layers):
        h = layer_norm(x, ln1g_ref[layer], ln1b_ref[layer])
        q = rope(mm(h, wq_ref[layer]) + bq_ref[layer])        # (BS, D)
        k = rope(mm(h, wk_ref[layer]) + bk_ref[layer])        # (BS, D)
        v = mm(h, wv_ref[layer]) + bv_ref[layer]              # (BS, D)

        attn = jnp.zeros((bs, d), jnp.float32)
        for hd in range(n_heads):
            msk = hmask_ref[hd]                               # (1, D) column mask
            # masking Q's columns makes the full-D contraction == per-head dot
            s = jnp.einsum("qd,kd->qk", q * msk, k,
                           preferred_element_type=jnp.float32) * scale + bias
            m = jnp.max(s, axis=-1, keepdims=True)
            p = jnp.exp(s - m)                                # EUP
            l = jnp.sum(p, axis=-1, keepdims=True)            # XLU
            p = p * pl.reciprocal(l, approx=True)             # EUP
            # V masked to this head's columns -> output lands in the right slot
            attn = attn + mm(p, v * msk)
        x = x + mm(attn, wo_ref[layer]) + bo_ref[layer]

        h = layer_norm(x, ln2g_ref[layer], ln2b_ref[layer])
        a = mm(h, w1_ref[layer])
        g = mm(h, w3_ref[layer])
        silu = a * (1.0 / (1.0 + jnp.exp(-a)))                # exp -> EUP
        x = x + mm(silu * g, w2_ref[layer])

    # final LN + zero out pad rows (x[pad_mask, :] = 0)
    x = layer_norm(x, lnfg_ref[...], lnfb_ref[...])
    x = x * keep

    # ----------------------------- prediction head -----------------------------
    # TODO(synk): exact RiNALMo RibosomeLoadingPredictionHead internals are not
    # available; reconstructed as linear_in -> residual Conv1d(k=3) blocks ->
    # masked mean pool -> linear_out, consistent with (c_in, embed_dim, num_blocks).
    hh = (mm(x, hwin_ref[...]) + hbin_ref[...]) * keep        # (BS, HE)
    shift = shift_ref[...]                                    # (2*BS, BS): [prev; next]
    n_blocks = convw_ref.shape[0]
    for blk in range(n_blocks):
        hpn = mm(shift, hh)                                   # one fused shift matmul
        hp = hpn[:bs]                                         # vreg-aligned row slices
        hn = hpn[bs:]
        conv = (mm(hp, convw_ref[blk, 0])
                + mm(hh, convw_ref[blk, 1])
                + mm(hn, convw_ref[blk, 2])
                + convb_ref[blk])
        hh = (hh + jnp.maximum(conv, 0.0)) * keep             # ReLU + residual + mask

    # masked mean pool -> Linear(embed_dim, 1) -> StandardScaler.inverse_transform
    pooled = mm(pool_ref[...], hh)                            # (B, HE)
    pred = mm(pooled, hwout_ref[...]) + hbout_ref[...]        # (B, 1)
    pred_ref[...] = pred
    unscaled_ref[...] = pred * sscale_ref[...] + smean_ref[...]


# ============================ pallas_call wrapper ==============================
def _zero_index_map(ndim):
    def imap(i):
        return (0,) * ndim
    return imap


def forward(params, tokens):
    B, S = tokens.shape
    BS = B * S
    f32 = jnp.float32

    keep = (tokens != PAD_IDX).astype(f32)                    # (B, S)
    keep_flat = keep.reshape(BS)

    # embedding gather stays in XLA glue; everything else runs in one kernel
    x = params["emb"][tokens].reshape(BS, D_MODEL)            # (BS, D)

    # additive attention bias: -1e9 for padded keys AND cross-batch keys
    same_batch = jnp.kron(jnp.eye(B, dtype=f32), jnp.ones((S, S), f32))   # (BS, BS)
    bias = (1.0 - same_batch * keep_flat[None, :]) * jnp.float32(-1e9)

    keep_col = keep_flat.reshape(BS, 1)

    # masked mean pool as a (B, BS) matrix
    counts = jnp.maximum(jnp.sum(keep, axis=1, keepdims=True), 1.0)       # (B, 1)
    batch_sel = jnp.kron(jnp.eye(B, dtype=f32), jnp.ones((1, S), f32))    # (B, BS)
    pool = batch_sel * keep_flat[None, :] / counts

    batch_inputs = [x, bias, keep_col, pool]
    const_inputs = [params[k] for k in _CONST_ORDER]
    all_inputs = batch_inputs + const_inputs

    in_specs = [pl.BlockSpec(a.shape, _zero_index_map(a.ndim)) for a in all_inputs]

    pred, unscaled = pl.pallas_call(
        _fused_forward_kernel,
        out_shape=(jax.ShapeDtypeStruct((B, 1), jnp.float32),
                   jax.ShapeDtypeStruct((B, 1), jnp.float32)),
        grid=(1,),
        in_specs=in_specs,
        out_specs=(pl.BlockSpec((B, 1), lambda i: (0, 0)),
                   pl.BlockSpec((B, 1), lambda i: (0, 0))),
        compiler_params=pltpu.CompilerParams(
            dimension_semantics=("arbitrary",)),
    )(*all_inputs)

    return pred, unscaled


# ============================ deterministic params =============================
def _layout_constants():
    f32 = jnp.float32
    half = D_HEAD // 2
    BS = BATCH * SEQ

    # rotary tables (per-head), tiled over heads (lanes) and batch (rows)
    inv_freq = 1.0 / (10000.0 ** (jnp.arange(half, dtype=f32) / half))
    freqs = jnp.outer(jnp.arange(SEQ, dtype=f32), inv_freq)            # (S, half)
    cos = jnp.concatenate([jnp.cos(freqs)] * 2, axis=-1)               # (S, Dh)
    sin = jnp.concatenate([jnp.sin(freqs)] * 2, axis=-1)               # (S, Dh)
    cos_bs = jnp.tile(jnp.tile(cos, (1, N_HEADS)), (BATCH, 1))         # (BS, D)
    sin_bs = jnp.tile(jnp.tile(sin, (1, N_HEADS)), (BATCH, 1))         # (BS, D)

    # rotate-half as a matmul: x @ rot == concat([-x2, x1]); block-diag per head
    rot = jnp.zeros((D_HEAD, D_HEAD), f32)
    rot = rot.at[half:, :half].set(-jnp.eye(half, dtype=f32))
    rot = rot.at[:half, half:].set(jnp.eye(half, dtype=f32))
    rot_full = jnp.kron(jnp.eye(N_HEADS, dtype=f32), rot)              # (D, D)

    # per-head column masks (VPU mul instead of gather/scatter matmuls)
    col_head = jnp.arange(D_MODEL) // D_HEAD                           # (D,)
    head_mask = (col_head[None, :] == jnp.arange(N_HEADS)[:, None]).astype(f32)
    head_mask = head_mask[:, None, :]                                  # (H, 1, D)

    # zero-padded k=3 conv shifts as matmuls, block-diagonal per batch element,
    # stacked [prev; next] so one matmul produces both shifted copies
    sprev = jnp.kron(jnp.eye(BATCH, dtype=f32), jnp.eye(SEQ, k=-1, dtype=f32))
    snext = jnp.kron(jnp.eye(BATCH, dtype=f32), jnp.eye(SEQ, k=1, dtype=f32))
    shift_pn = jnp.concatenate([sprev, snext], axis=0)                 # (2*BS, BS)

    return dict(rope_cos=cos_bs, rope_sin=sin_bs, rope_rot=rot_full,
                head_mask=head_mask, shift_pn=shift_pn)


def init_params(key):
    f32 = jnp.float32
    ks = jax.random.split(key, 16)

    def dense(k, shape, fan_in):
        return jax.random.normal(k, shape, f32) / jnp.sqrt(jnp.float32(fan_in))

    emb = jax.random.normal(ks[0], (VOCAB, D_MODEL), f32) * 0.02
    emb = emb.at[PAD_IDX].set(0.0)       # nn.Embedding(padding_idx=pad_idx)

    params = dict(
        emb=emb,
        # stacked transformer layer weights (leading dim = layer)
        ln1_g=jnp.ones((N_LAYERS, 1, D_MODEL), f32),
        ln1_b=jnp.zeros((N_LAYERS, 1, D_MODEL), f32),
        wq=dense(ks[1], (N_LAYERS, D_MODEL, D_MODEL), D_MODEL),
        bq=jnp.zeros((N_LAYERS, 1, D_MODEL), f32),
        wk=dense(ks[2], (N_LAYERS, D_MODEL, D_MODEL), D_MODEL),
        bk=jnp.zeros((N_LAYERS, 1, D_MODEL), f32),
        wv=dense(ks[3], (N_LAYERS, D_MODEL, D_MODEL), D_MODEL),
        bv=jnp.zeros((N_LAYERS, 1, D_MODEL), f32),
        wo=dense(ks[4], (N_LAYERS, D_MODEL, D_MODEL), D_MODEL),
        bo=jnp.zeros((N_LAYERS, 1, D_MODEL), f32),
        ln2_g=jnp.ones((N_LAYERS, 1, D_MODEL), f32),
        ln2_b=jnp.zeros((N_LAYERS, 1, D_MODEL), f32),
        w1=dense(ks[5], (N_LAYERS, D_MODEL, D_FF), D_MODEL),
        w3=dense(ks[6], (N_LAYERS, D_MODEL, D_FF), D_MODEL),
        w2=dense(ks[7], (N_LAYERS, D_FF, D_MODEL), D_FF),
        lnf_g=jnp.ones((1, D_MODEL), f32),
        lnf_b=jnp.zeros((1, D_MODEL), f32),
        # prediction head
        head_win=dense(ks[8], (D_MODEL, HEAD_EMBED), D_MODEL),
        head_bin=jnp.zeros((1, HEAD_EMBED), f32),
        conv_w=dense(ks[9], (HEAD_BLOCKS, 3, HEAD_EMBED, HEAD_EMBED), 3 * HEAD_EMBED),
        conv_b=jnp.zeros((HEAD_BLOCKS, 1, HEAD_EMBED), f32),
        head_wout=dense(ks[10], (HEAD_EMBED, 1), HEAD_EMBED),
        head_bout=jnp.zeros((1, 1), f32),
        # StandardScaler: inverse_transform(p) = p * scale_ + mean_
        scaler_mean=jnp.full((1, 1), 2.5, f32),
        scaler_scale=jnp.full((1, 1), 1.7, f32),
    )
    params.update(_layout_constants())
    return params


# =================================== main ======================================
if __name__ == "__main__":
    params = init_params(jax.random.PRNGKey(42))

    key = jax.random.PRNGKey(0)
    tokens = jax.random.randint(key, (BATCH, SEQ), 1, VOCAB, dtype=jnp.int32)
    # give the first sequence a padded tail so pad handling is exercised
    lengths = jnp.array([[SEQ - 3], [SEQ]], dtype=jnp.int32)
    tokens = jnp.where(jnp.arange(SEQ)[None, :] >= lengths, PAD_IDX, tokens)

    pred, pred_unscaled = jax.jit(forward)(params, tokens)
    jax.block_until_ready((pred, pred_unscaled))

    assert pred.shape == (BATCH, 1) and pred_unscaled.shape == (BATCH, 1)
    assert bool(jnp.all(jnp.isfinite(pred)))
    assert bool(jnp.all(jnp.isfinite(pred_unscaled)))
    # check scaler relation: unscaled = pred * scale + mean
    expect = pred * params["scaler_scale"] + params["scaler_mean"]
    assert bool(jnp.allclose(pred_unscaled, expect, atol=1e-5))

    print("KERNEL_OK")
</pallas_src>

<mosaic_0001>
module attributes {stable_mosaic.version = 11 : i64} {
  func.func @_fused_forward_kernel(%arg0: i32, %arg1: memref<32x32xf32, #tpu.memory_space<vmem>>, %arg2: memref<32x32xf32, #tpu.memory_space<vmem>>, %arg3: memref<32x1xf32, #tpu.memory_space<vmem>>, %arg4: memref<2x32xf32, #tpu.memory_space<vmem>>, %arg5: memref<32x32xf32, #tpu.memory_space<vmem>>, %arg6: memref<32x32xf32, #tpu.memory_space<vmem>>, %arg7: memref<32x32xf32, #tpu.memory_space<vmem>>, %arg8: memref<4x1x32xf32, #tpu.memory_space<vmem>>, %arg9: memref<64x32xf32, #tpu.memory_space<vmem>>, %arg10: memref<2x1x32xf32, #tpu.memory_space<vmem>>, %arg11: memref<2x1x32xf32, #tpu.memory_space<vmem>>, %arg12: memref<2x32x32xf32, #tpu.memory_space<vmem>>, %arg13: memref<2x1x32xf32, #tpu.memory_space<vmem>>, %arg14: memref<2x32x32xf32, #tpu.memory_space<vmem>>, %arg15: memref<2x1x32xf32, #tpu.memory_space<vmem>>, %arg16: memref<2x32x32xf32, #tpu.memory_space<vmem>>, %arg17: memref<2x1x32xf32, #tpu.memory_space<vmem>>, %arg18: memref<2x32x32xf32, #tpu.memory_space<vmem>>, %arg19: memref<2x1x32xf32, #tpu.memory_space<vmem>>, %arg20: memref<2x1x32xf32, #tpu.memory_space<vmem>>, %arg21: memref<2x1x32xf32, #tpu.memory_space<vmem>>, %arg22: memref<2x32x64xf32, #tpu.memory_space<vmem>>, %arg23: memref<2x32x64xf32, #tpu.memory_space<vmem>>, %arg24: memref<2x64x32xf32, #tpu.memory_space<vmem>>, %arg25: memref<1x32xf32, #tpu.memory_space<vmem>>, %arg26: memref<1x32xf32, #tpu.memory_space<vmem>>, %arg27: memref<32x32xf32, #tpu.memory_space<vmem>>, %arg28: memref<1x32xf32, #tpu.memory_space<vmem>>, %arg29: memref<6x3x32x32xf32, #tpu.memory_space<vmem>>, %arg30: memref<6x1x32xf32, #tpu.memory_space<vmem>>, %arg31: memref<32x1xf32, #tpu.memory_space<vmem>>, %arg32: memref<1x1xf32, #tpu.memory_space<vmem>>, %arg33: memref<1x1xf32, #tpu.memory_space<vmem>>, %arg34: memref<1x1xf32, #tpu.memory_space<vmem>>, %arg35: memref<2x1xf32, #tpu.memory_space<vmem>>, %arg36: memref<2x1xf32, #tpu.memory_space<vmem>>) attributes {dimension_semantics = [#tpu.dimension_semantics<arbitrary>], iteration_bounds = array<i64: 1>, scalar_prefetch = 0 : i64, scratch_operands = 0 : i64, tpu.core_type = #tpu.core_type<tc>, window_params = [{pipeline_mode = #tpu.pipeline_mode<synchronous>, transform_indices = @transform_0, window_bounds = array<i64: 32, 32>}, {pipeline_mode = #tpu.pipeline_mode<synchronous>, transform_indices = @transform_1, window_bounds = array<i64: 32, 32>}, {pipeline_mode = #tpu.pipeline_mode<synchronous>, transform_indices = @transform_2, window_bounds = array<i64: 32, 1>}, {pipeline_mode = #tpu.pipeline_mode<synchronous>, transform_indices = @transform_3, window_bounds = array<i64: 2, 32>}, {pipeline_mode = #tpu.pipeline_mode<synchronous>, transform_indices = @transform_4, window_bounds = array<i64: 32, 32>}, {pipeline_mode = #tpu.pipeline_mode<synchronous>, transform_indices = @transform_5, window_bounds = array<i64: 32, 32>}, {pipeline_mode = #tpu.pipeline_mode<synchronous>, transform_indices = @transform_6, window_bounds = array<i64: 32, 32>}, {pipeline_mode = #tpu.pipeline_mode<synchronous>, transform_indices = @transform_7, window_bounds = array<i64: 4, 1, 32>}, {pipeline_mode = #tpu.pipeline_mode<synchronous>, transform_indices = @transform_8, window_bounds = array<i64: 64, 32>}, {pipeline_mode = #tpu.pipeline_mode<synchronous>, transform_indices = @transform_9, window_bounds = array<i64: 2, 1, 32>}, {pipeline_mode = #tpu.pipeline_mode<synchronous>, transform_indices = @transform_10, window_bounds = array<i64: 2, 1, 32>}, {pipeline_mode = #tpu.pipeline_mode<synchronous>, transform_indices = @transform_11, window_bounds = array<i64: 2, 32, 32>}, {pipeline_mode = #tpu.pipeline_mode<synchronous>, transform_indices = @transform_12, window_bounds = array<i64: 2, 1, 32>}, {pipeline_mode = #tpu.pipeline_mode<synchronous>, transform_indices = @transform_13, window_bounds = array<i64: 2, 32, 32>}, {pipeline_mode = #tpu.pipeline_mode<synchronous>, transform_indices = @transform_14, window_bounds = array<i64: 2, 1, 32>}, {pipeline_mode = #tpu.pipeline_mode<synchronous>, transform_indices = @transform_15, window_bounds = array<i64: 2, 32, 32>}, {pipeline_mode = #tpu.pipeline_mode<synchronous>, transform_indices = @transform_16, window_bounds = array<i64: 2, 1, 32>}, {pipeline_mode = #tpu.pipeline_mode<synchronous>, transform_indices = @transform_17, window_bounds = array<i64: 2, 32, 32>}, {pipeline_mode = #tpu.pipeline_mode<synchronous>, transform_indices = @transform_18, window_bounds = array<i64: 2, 1, 32>}, {pipeline_mode = #tpu.pipeline_mode<synchronous>, transform_indices = @transform_19, window_bounds = array<i64: 2, 1, 32>}, {pipeline_mode = #tpu.pipeline_mode<synchronous>, transform_indices = @transform_20, window_bounds = array<i64: 2, 1, 32>}, {pipeline_mode = #tpu.pipeline_mode<synchronous>, transform_indices = @transform_21, window_bounds = array<i64: 2, 32, 64>}, {pipeline_mode = #tpu.pipeline_mode<synchronous>, transform_indices = @transform_22, window_bounds = array<i64: 2, 32, 64>}, {pipeline_mode = #tpu.pipeline_mode<synchronous>, transform_indices = @transform_23, window_bounds = array<i64: 2, 64, 32>}, {pipeline_mode = #tpu.pipeline_mode<synchronous>, transform_indices = @transform_24, window_bounds = array<i64: 1, 32>}, {pipeline_mode = #tpu.pipeline_mode<synchronous>, transform_indices = @transform_25, window_bounds = array<i64: 1, 32>}, {pipeline_mode = #tpu.pipeline_mode<synchronous>, transform_indices = @transform_26, window_bounds = array<i64: 32, 32>}, {pipeline_mode = #tpu.pipeline_mode<synchronous>, transform_indices = @transform_27, window_bounds = array<i64: 1, 32>}, {pipeline_mode = #tpu.pipeline_mode<synchronous>, transform_indices = @transform_28, window_bounds = array<i64: 6, 3, 32, 32>}, {pipeline_mode = #tpu.pipeline_mode<synchronous>, transform_indices = @transform_29, window_bounds = array<i64: 6, 1, 32>}, {pipeline_mode = #tpu.pipeline_mode<synchronous>, transform_indices = @transform_30, window_bounds = array<i64: 32, 1>}, {pipeline_mode = #tpu.pipeline_mode<synchronous>, transform_indices = @transform_31, window_bounds = array<i64: 1, 1>}, {pipeline_mode = #tpu.pipeline_mode<synchronous>, transform_indices = @transform_32, window_bounds = array<i64: 1, 1>}, {pipeline_mode = #tpu.pipeline_mode<synchronous>, transform_indices = @transform_33, window_bounds = array<i64: 1, 1>}, {pipeline_mode = #tpu.pipeline_mode<synchronous>, transform_indices = @transform_34, window_bounds = array<i64: 2, 1>}, {pipeline_mode = #tpu.pipeline_mode<synchronous>, transform_indices = @transform_35, window_bounds = array<i64: 2, 1>}]} {
    %c0 = arith.constant 0 : index
    %c0_0 = arith.constant 0 : index
    %0 = vector.load %arg1[%c0, %c0_0] : memref<32x32xf32, #tpu.memory_space<vmem>>, vector<32x32xf32>
    %c0_1 = arith.constant 0 : index
    %c0_2 = arith.constant 0 : index
    %1 = vector.load %arg2[%c0_1, %c0_2] : memref<32x32xf32, #tpu.memory_space<vmem>>, vector<32x32xf32>
    %c0_3 = arith.constant 0 : index
    %c0_4 = arith.constant 0 : index
    %2 = vector.load %arg3[%c0_3, %c0_4] : memref<32x1xf32, #tpu.memory_space<vmem>>, vector<32x1xf32>
    %c0_5 = arith.constant 0 : index
    %c0_6 = arith.constant 0 : index
    %3 = vector.load %arg5[%c0_5, %c0_6] : memref<32x32xf32, #tpu.memory_space<vmem>>, vector<32x32xf32>
    %c0_7 = arith.constant 0 : index
    %c0_8 = arith.constant 0 : index
    %4 = vector.load %arg6[%c0_7, %c0_8] : memref<32x32xf32, #tpu.memory_space<vmem>>, vector<32x32xf32>
    %c0_9 = arith.constant 0 : index
    %c0_10 = arith.constant 0 : index
    %5 = vector.load %arg7[%c0_9, %c0_10] : memref<32x32xf32, #tpu.memory_space<vmem>>, vector<32x32xf32>
    %c0_11 = arith.constant 0 : index
    %c0_12 = arith.constant 0 : index
    %c0_13 = arith.constant 0 : index
    %6 = vector.load %arg10[%c0_11, %c0_12, %c0_13] : memref<2x1x32xf32, #tpu.memory_space<vmem>>, vector<1x1x32xf32>
    %7 = vector.shape_cast %6 : vector<1x1x32xf32> to vector<1x32xf32>
    %c0_14 = arith.constant 0 : index
    %c0_15 = arith.constant 0 : index
    %c0_16 = arith.constant 0 : index
    %8 = vector.load %arg11[%c0_14, %c0_15, %c0_16] : memref<2x1x32xf32, #tpu.memory_space<vmem>>, vector<1x1x32xf32>
    %9 = vector.shape_cast %8 : vector<1x1x32xf32> to vector<1x32xf32>
    %cst = arith.constant dense<0.000000e+00> : vector<32xf32>
    %10 = vector.multi_reduction <add>, %0, %cst [1] : vector<32x32xf32> to vector<32xf32>
    %11 = vector.shape_cast %10 : vector<32xf32> to vector<32x1xf32>
    %cst_17 = arith.constant 3.200000e+01 : f32
    %12 = vector.broadcast %cst_17 : f32 to vector<32x1xf32>
    %13 = arith.divf %11, %12 : vector<32x1xf32>
    %14 = vector.broadcast %13 : vector<32x1xf32> to vector<32x32xf32>
    %15 = arith.subf %0, %14 : vector<32x32xf32>
    %16 = vector.broadcast %13 : vector<32x1xf32> to vector<32x32xf32>
    %17 = arith.subf %0, %16 : vector<32x32xf32>
    %18 = arith.mulf %15, %17 : vector<32x32xf32>
    %cst_18 = arith.constant dense<0.000000e+00> : vector<32xf32>
    %19 = vector.multi_reduction <add>, %18, %cst_18 [1] : vector<32x32xf32> to vector<32xf32>
    %20 = vector.shape_cast %19 : vector<32xf32> to vector<32x1xf32>
    %cst_19 = arith.constant 3.200000e+01 : f32
    %21 = vector.broadcast %cst_19 : f32 to vector<32x1xf32>
    %22 = arith.divf %20, %21 : vector<32x1xf32>
    %23 = vector.broadcast %13 : vector<32x1xf32> to vector<32x32xf32>
    %24 = arith.subf %0, %23 : vector<32x32xf32>
    %cst_20 = arith.constant 9.99999974E-6 : f32
    %25 = vector.broadcast %cst_20 : f32 to vector<32x1xf32>
    %26 = arith.addf %22, %25 : vector<32x1xf32>
    %27 = math.rsqrt %26 : vector<32x1xf32>
    %28 = vector.broadcast %27 : vector<32x1xf32> to vector<32x32xf32>
    %29 = arith.mulf %24, %28 : vector<32x32xf32>
    %30 = vector.broadcast %7 : vector<1x32xf32> to vector<32x32xf32>
    %31 = arith.mulf %29, %30 : vector<32x32xf32>
    %32 = vector.broadcast %9 : vector<1x32xf32> to vector<32x32xf32>
    %33 = arith.addf %31, %32 : vector<32x32xf32>
    %c0_21 = arith.constant 0 : index
    %c0_22 = arith.constant 0 : index
    %c0_23 = arith.constant 0 : index
    %34 = vector.load %arg12[%c0_21, %c0_22, %c0_23] : memref<2x32x32xf32, #tpu.memory_space<vmem>>, vector<1x32x32xf32>
    %35 = vector.shape_cast %34 : vector<1x32x32xf32> to vector<32x32xf32>
    %cst_24 = arith.constant dense<0.000000e+00> : vector<32x32xf32>
    %36 = tpu.matmul %33, %35, %cst_24 {dimension_numbers = #tpu.dot_dimension_numbers<[1], [0], [0], [1], [0, 0, 1, 1], [], []>} : vector<32x32xf32>, vector<32x32xf32>, vector<32x32xf32> -> vector<32x32xf32>
    %c0_25 = arith.constant 0 : index
    %c0_26 = arith.constant 0 : index
    %c0_27 = arith.constant 0 : index
    %37 = vector.load %arg13[%c0_25, %c0_26, %c0_27] : memref<2x1x32xf32, #tpu.memory_space<vmem>>, vector<1x1x32xf32>
    %38 = vector.shape_cast %37 : vector<1x1x32xf32> to vector<1x32xf32>
    %39 = vector.broadcast %38 : vector<1x32xf32> to vector<32x32xf32>
    %40 = arith.addf %36, %39 : vector<32x32xf32>
    %41 = arith.mulf %40, %3 : vector<32x32xf32>
    %cst_28 = arith.constant dense<0.000000e+00> : vector<32x32xf32>
    %42 = tpu.matmul %40, %5, %cst_28 {dimension_numbers = #tpu.dot_dimension_numbers<[1], [0], [0], [1], [0, 0, 1, 1], [], []>} : vector<32x32xf32>, vector<32x32xf32>, vector<32x32xf32> -> vector<32x32xf32>
    %43 = arith.mulf %42, %4 : vector<32x32xf32>
    %44 = arith.addf %41, %43 : vector<32x32xf32>
    %c0_29 = arith.constant 0 : index
    %c0_30 = arith.constant 0 : index
    %c0_31 = arith.constant 0 : index
    %45 = vector.load %arg14[%c0_29, %c0_30, %c0_31] : memref<2x32x32xf32, #tpu.memory_space<vmem>>, vector<1x32x32xf32>
    %46 = vector.shape_cast %45 : vector<1x32x32xf32> to vector<32x32xf32>
    %cst_32 = arith.constant dense<0.000000e+00> : vector<32x32xf32>
    %47 = tpu.matmul %33, %46, %cst_32 {dimension_numbers = #tpu.dot_dimension_numbers<[1], [0], [0], [1], [0, 0, 1, 1], [], []>} : vector<32x32xf32>, vector<32x32xf32>, vector<32x32xf32> -> vector<32x32xf32>
    %c0_33 = arith.constant 0 : index
    %c0_34 = arith.constant 0 : index
    %c0_35 = arith.constant 0 : index
    %48 = vector.load %arg15[%c0_33, %c0_34, %c0_35] : memref<2x1x32xf32, #tpu.memory_space<vmem>>, vector<1x1x32xf32>
    %49 = vector.shape_cast %48 : vector<1x1x32xf32> to vector<1x32xf32>
    %50 = vector.broadcast %49 : vector<1x32xf32> to vector<32x32xf32>
    %51 = arith.addf %47, %50 : vector<32x32xf32>
    %52 = arith.mulf %51, %3 : vector<32x32xf32>
    %cst_36 = arith.constant dense<0.000000e+00> : vector<32x32xf32>
    %53 = tpu.matmul %51, %5, %cst_36 {dimension_numbers = #tpu.dot_dimension_numbers<[1], [0], [0], [1], [0, 0, 1, 1], [], []>} : vector<32x32xf32>, vector<32x32xf32>, vector<32x32xf32> -> vector<32x32xf32>
    %54 = arith.mulf %53, %4 : vector<32x32xf32>
    %55 = arith.addf %52, %54 : vector<32x32xf32>
    %c0_37 = arith.constant 0 : index
    %c0_38 = arith.constant 0 : index
    %c0_39 = arith.constant 0 : index
    %56 = vector.load %arg16[%c0_37, %c0_38, %c0_39] : memref<2x32x32xf32, #tpu.memory_space<vmem>>, vector<1x32x32xf32>
    %57 = vector.shape_cast %56 : vector<1x32x32xf32> to vector<32x32xf32>
    %cst_40 = arith.constant dense<0.000000e+00> : vector<32x32xf32>
    %58 = tpu.matmul %33, %57, %cst_40 {dimension_numbers = #tpu.dot_dimension_numbers<[1], [0], [0], [1], [0, 0, 1, 1], [], []>} : vector<32x32xf32>, vector<32x32xf32>, vector<32x32xf32> -> vector<32x32xf32>
    %c0_41 = arith.constant 0 : index
    %c0_42 = arith.constant 0 : index
    %c0_43 = arith.constant 0 : index
    %59 = vector.load %arg17[%c0_41, %c0_42, %c0_43] : memref<2x1x32xf32, #tpu.memory_space<vmem>>, vector<1x1x32xf32>
    %60 = vector.shape_cast %59 : vector<1x1x32xf32> to vector<1x32xf32>
    %61 = vector.broadcast %60 : vector<1x32xf32> to vector<32x32xf32>
    %62 = arith.addf %58, %61 : vector<32x32xf32>
    %cst_44 = arith.constant 0.000000e+00 : f32
    %63 = vector.broadcast %cst_44 : f32 to vector<32x32xf32>
    %c0_45 = arith.constant 0 : index
    %c0_46 = arith.constant 0 : index
    %c0_47 = arith.constant 0 : index
    %64 = vector.load %arg8[%c0_45, %c0_46, %c0_47] : memref<4x1x32xf32, #tpu.memory_space<vmem>>, vector<1x1x32xf32>
    %65 = vector.shape_cast %64 : vector<1x1x32xf32> to vector<1x32xf32>
    %66 = vector.broadcast %65 : vector<1x32xf32> to vector<32x32xf32>
    %67 = arith.mulf %44, %66 : vector<32x32xf32>
    "tpu.trace_start"() <{level = 10 : i32, message = "qd,kd->qk"}> : () -> ()
    %cst_48 = arith.constant dense<0.000000e+00> : vector<32x32xf32>
    %68 = tpu.matmul %67, %55, %cst_48 {dimension_numbers = #tpu.dot_dimension_numbers<[1], [1], [0], [0], [0, 0, 1, 0], [], []>} : vector<32x32xf32>, vector<32x32xf32>, vector<32x32xf32> -> vector<32x32xf32>
    "tpu.trace_stop"() : () -> ()
    %cst_49 = arith.constant 0.353553385 : f32
    %69 = vector.broadcast %cst_49 : f32 to vector<32x32xf32>
    %70 = arith.mulf %68, %69 : vector<32x32xf32>
    %71 = arith.addf %70, %1 : vector<32x32xf32>
    %cst_50 = arith.constant dense<0xFF800000> : vector<32xf32>
    %72 = vector.multi_reduction <maximumf>, %71, %cst_50 [1] : vector<32x32xf32> to vector<32xf32>
    %73 = vector.shape_cast %72 : vector<32xf32> to vector<32x1xf32>
    %74 = vector.broadcast %73 : vector<32x1xf32> to vector<32x32xf32>
    %75 = arith.subf %71, %74 : vector<32x32xf32>
    %76 = math.exp %75 : vector<32x32xf32>
    %cst_51 = arith.constant dense<0.000000e+00> : vector<32xf32>
    %77 = vector.multi_reduction <add>, %76, %cst_51 [1] : vector<32x32xf32> to vector<32xf32>
    %78 = vector.shape_cast %77 : vector<32xf32> to vector<32x1xf32>
    %79 = tpu.reciprocal %78 {approx = true} : vector<32x1xf32> -> vector<32x1xf32>
    %80 = vector.broadcast %79 : vector<32x1xf32> to vector<32x32xf32>
    %81 = arith.mulf %76, %80 : vector<32x32xf32>
    %82 = vector.broadcast %65 : vector<1x32xf32> to vector<32x32xf32>
    %83 = arith.mulf %62, %82 : vector<32x32xf32>
    %cst_52 = arith.constant dense<0.000000e+00> : vector<32x32xf32>
    %84 = tpu.matmul %81, %83, %cst_52 {dimension_numbers = #tpu.dot_dimension_numbers<[1], [0], [0], [1], [0, 0, 1, 1], [], []>} : vector<32x32xf32>, vector<32x32xf32>, vector<32x32xf32> -> vector<32x32xf32>
    %85 = arith.addf %63, %84 : vector<32x32xf32>
    %c1 = arith.constant 1 : index
    %c0_53 = arith.constant 0 : index
    %c0_54 = arith.constant 0 : index
    %86 = vector.load %arg8[%c1, %c0_53, %c0_54] : memref<4x1x32xf32, #tpu.memory_space<vmem>>, vector<1x1x32xf32>
    %87 = vector.shape_cast %86 : vector<1x1x32xf32> to vector<1x32xf32>
    %88 = vector.broadcast %87 : vector<1x32xf32> to vector<32x32xf32>
    %89 = arith.mulf %44, %88 : vector<32x32xf32>
    "tpu.trace_start"() <{level = 10 : i32, message = "qd,kd->qk"}> : () -> ()
    %cst_55 = arith.constant dense<0.000000e+00> : vector<32x32xf32>
    %90 = tpu.matmul %89, %55, %cst_55 {dimension_numbers = #tpu.dot_dimension_numbers<[1], [1], [0], [0], [0, 0, 1, 0], [], []>} : vector<32x32xf32>, vector<32x32xf32>, vector<32x32xf32> -> vector<32x32xf32>
    "tpu.trace_stop"() : () -> ()
    %cst_56 = arith.constant 0.353553385 : f32
    %91 = vector.broadcast %cst_56 : f32 to vector<32x32xf32>
    %92 = arith.mulf %90, %91 : vector<32x32xf32>
    %93 = arith.addf %92, %1 : vector<32x32xf32>
    %cst_57 = arith.constant dense<0xFF800000> : vector<32xf32>
    %94 = vector.multi_reduction <maximumf>, %93, %cst_57 [1] : vector<32x32xf32> to vector<32xf32>
    %95 = vector.shape_cast %94 : vector<32xf32> to vector<32x1xf32>
    %96 = vector.broadcast %95 : vector<32x1xf32> to vector<32x32xf32>
    %97 = arith.subf %93, %96 : vector<32x32xf32>
    %98 = math.exp %97 : vector<32x32xf32>
    %cst_58 = arith.constant dense<0.000000e+00> : vector<32xf32>
    %99 = vector.multi_reduction <add>, %98, %cst_58 [1] : vector<32x32xf32> to vector<32xf32>
    %100 = vector.shape_cast %99 : vector<32xf32> to vector<32x1xf32>
    %101 = tpu.reciprocal %100 {approx = true} : vector<32x1xf32> -> vector<32x1xf32>
    %102 = vector.broadcast %101 : vector<32x1xf32> to vector<32x32xf32>
    %103 = arith.mulf %98, %102 : vector<32x32xf32>
    %104 = vector.broadcast %87 : vector<1x32xf32> to vector<32x32xf32>
    %105 = arith.mulf %62, %104 : vector<32x32xf32>
    %cst_59 = arith.constant dense<0.000000e+00> : vector<32x32xf32>
    %106 = tpu.matmul %103, %105, %cst_59 {dimension_numbers = #tpu.dot_dimension_numbers<[1], [0], [0], [1], [0, 0, 1, 1], [], []>} : vector<32x32xf32>, vector<32x32xf32>, vector<32x32xf32> -> vector<32x32xf32>
    %107 = arith.addf %85, %106 : vector<32x32xf32>
    %c2 = arith.constant 2 : index
    %c0_60 = arith.constant 0 : index
    %c0_61 = arith.constant 0 : index
    %108 = vector.load %arg8[%c2, %c0_60, %c0_61] : memref<4x1x32xf32, #tpu.memory_space<vmem>>, vector<1x1x32xf32>
    %109 = vector.shape_cast %108 : vector<1x1x32xf32> to vector<1x32xf32>
    %110 = vector.broadcast %109 : vector<1x32xf32> to vector<32x32xf32>
    %111 = arith.mulf %44, %110 : vector<32x32xf32>
    "tpu.trace_start"() <{level = 10 : i32, message = "qd,kd->qk"}> : () -> ()
    %cst_62 = arith.constant dense<0.000000e+00> : vector<32x32xf32>
    %112 = tpu.matmul %111, %55, %cst_62 {dimension_numbers = #tpu.dot_dimension_numbers<[1], [1], [0], [0], [0, 0, 1, 0], [], []>} : vector<32x32xf32>, vector<32x32xf32>, vector<32x32xf32> -> vector<32x32xf32>
    "tpu.trace_stop"() : () -> ()
    %cst_63 = arith.constant 0.353553385 : f32
    %113 = vector.broadcast %cst_63 : f32 to vector<32x32xf32>
    %114 = arith.mulf %112, %113 : vector<32x32xf32>
    %115 = arith.addf %114, %1 : vector<32x32xf32>
    %cst_64 = arith.constant dense<0xFF800000> : vector<32xf32>
    %116 = vector.multi_reduction <maximumf>, %115, %cst_64 [1] : vector<32x32xf32> to vector<32xf32>
    %117 = vector.shape_cast %116 : vector<32xf32> to vector<32x1xf32>
    %118 = vector.broadcast %117 : vector<32x1xf32> to vector<32x32xf32>
    %119 = arith.subf %115, %118 : vector<32x32xf32>
    %120 = math.exp %119 : vector<32x32xf32>
    %cst_65 = arith.constant dense<0.000000e+00> : vector<32xf32>
    %121 = vector.multi_reduction <add>, %120, %cst_65 [1] : vector<32x32xf32> to vector<32xf32>
    %122 = vector.shape_cast %121 : vector<32xf32> to vector<32x1xf32>
    %123 = tpu.reciprocal %122 {approx = true} : vector<32x1xf32> -> vector<32x1xf32>
    %124 = vector.broadcast %123 : vector<32x1xf32> to vector<32x32xf32>
    %125 = arith.mulf %120, %124 : vector<32x32xf32>
    %126 = vector.broadcast %109 : vector<1x32xf32> to vector<32x32xf32>
    %127 = arith.mulf %62, %126 : vector<32x32xf32>
    %cst_66 = arith.constant dense<0.000000e+00> : vector<32x32xf32>
    %128 = tpu.matmul %125, %127, %cst_66 {dimension_numbers = #tpu.dot_dimension_numbers<[1], [0], [0], [1], [0, 0, 1, 1], [], []>} : vector<32x32xf32>, vector<32x32xf32>, vector<32x32xf32> -> vector<32x32xf32>
    %129 = arith.addf %107, %128 : vector<32x32xf32>
    %c3 = arith.constant 3 : index
    %c0_67 = arith.constant 0 : index
    %c0_68 = arith.constant 0 : index
    %130 = vector.load %arg8[%c3, %c0_67, %c0_68] : memref<4x1x32xf32, #tpu.memory_space<vmem>>, vector<1x1x32xf32>
    %131 = vector.shape_cast %130 : vector<1x1x32xf32> to vector<1x32xf32>
    %132 = vector.broadcast %131 : vector<1x32xf32> to vector<32x32xf32>
    %133 = arith.mulf %44, %132 : vector<32x32xf32>
    "tpu.trace_start"() <{level = 10 : i32, message = "qd,kd->qk"}> : () -> ()
    %cst_69 = arith.constant dense<0.000000e+00> : vector<32x32xf32>
    %134 = tpu.matmul %133, %55, %cst_69 {dimension_numbers = #tpu.dot_dimension_numbers<[1], [1], [0], [0], [0, 0, 1, 0], [], []>} : vector<32x32xf32>, vector<32x32xf32>, vector<32x32xf32> -> vector<32x32xf32>
    "tpu.trace_stop"() : () -> ()
    %cst_70 = arith.constant 0.353553385 : f32
    %135 = vector.broadcast %cst_70 : f32 to vector<32x32xf32>
    %136 = arith.mulf %134, %135 : vector<32x32xf32>
    %137 = arith.addf %136, %1 : vector<32x32xf32>
    %cst_71 = arith.constant dense<0xFF800000> : vector<32xf32>
    %138 = vector.multi_reduction <maximumf>, %137, %cst_71 [1] : vector<32x32xf32> to vector<32xf32>
    %139 = vector.shape_cast %138 : vector<32xf32> to vector<32x1xf32>
    %140 = vector.broadcast %139 : vector<32x1xf32> to vector<32x32xf32>
    %141 = arith.subf %137, %140 : vector<32x32xf32>
    %142 = math.exp %141 : vector<32x32xf32>
    %cst_72 = arith.constant dense<0.000000e+00> : vector<32xf32>
    %143 = vector.multi_reduction <add>, %142, %cst_72 [1] : vector<32x32xf32> to vector<32xf32>
    %144 = vector.shape_cast %143 : vector<32xf32> to vector<32x1xf32>
    %145 = tpu.reciprocal %144 {approx = true} : vector<32x1xf32> -> vector<32x1xf32>
    %146 = vector.broadcast %145 : vector<32x1xf32> to vector<32x32xf32>
    %147 = arith.mulf %142, %146 : vector<32x32xf32>
    %148 = vector.broadcast %131 : vector<1x32xf32> to vector<32x32xf32>
    %149 = arith.mulf %62, %148 : vector<32x32xf32>
    %cst_73 = arith.constant dense<0.000000e+00> : vector<32x32xf32>
    %150 = tpu.matmul %147, %149, %cst_73 {dimension_numbers = #tpu.dot_dimension_numbers<[1], [0], [0], [1], [0, 0, 1, 1], [], []>} : vector<32x32xf32>, vector<32x32xf32>, vector<32x32xf32> -> vector<32x32xf32>
    %151 = arith.addf %129, %150 : vector<32x32xf32>
    %c0_74 = arith.constant 0 : index
    %c0_75 = arith.constant 0 : index
    %c0_76 = arith.constant 0 : index
    %152 = vector.load %arg18[%c0_74, %c0_75, %c0_76] : memref<2x32x32xf32, #tpu.memory_space<vmem>>, vector<1x32x32xf32>
    %153 = vector.shape_cast %152 : vector<1x32x32xf32> to vector<32x32xf32>
    %cst_77 = arith.constant dense<0.000000e+00> : vector<32x32xf32>
    %154 = tpu.matmul %151, %153, %cst_77 {dimension_numbers = #tpu.dot_dimension_numbers<[1], [0], [0], [1], [0, 0, 1, 1], [], []>} : vector<32x32xf32>, vector<32x32xf32>, vector<32x32xf32> -> vector<32x32xf32>
    %155 = arith.addf %0, %154 : vector<32x32xf32>
    %c0_78 = arith.constant 0 : index
    %c0_79 = arith.constant 0 : index
    %c0_80 = arith.constant 0 : index
    %156 = vector.load %arg19[%c0_78, %c0_79, %c0_80] : memref<2x1x32xf32, #tpu.memory_space<vmem>>, vector<1x1x32xf32>
    %157 = vector.shape_cast %156 : vector<1x1x32xf32> to vector<1x32xf32>
    %158 = vector.broadcast %157 : vector<1x32xf32> to vector<32x32xf32>
    %159 = arith.addf %155, %158 : vector<32x32xf32>
    %c0_81 = arith.constant 0 : index
    %c0_82 = arith.constant 0 : index
    %c0_83 = arith.constant 0 : index
    %160 = vector.load %arg20[%c0_81, %c0_82, %c0_83] : memref<2x1x32xf32, #tpu.memory_space<vmem>>, vector<1x1x32xf32>
    %161 = vector.shape_cast %160 : vector<1x1x32xf32> to vector<1x32xf32>
    %c0_84 = arith.constant 0 : index
    %c0_85 = arith.constant 0 : index
    %c0_86 = arith.constant 0 : index
    %162 = vector.load %arg21[%c0_84, %c0_85, %c0_86] : memref<2x1x32xf32, #tpu.memory_space<vmem>>, vector<1x1x32xf32>
    %163 = vector.shape_cast %162 : vector<1x1x32xf32> to vector<1x32xf32>
    %cst_87 = arith.constant dense<0.000000e+00> : vector<32xf32>
    %164 = vector.multi_reduction <add>, %159, %cst_87 [1] : vector<32x32xf32> to vector<32xf32>
    %165 = vector.shape_cast %164 : vector<32xf32> to vector<32x1xf32>
    %cst_88 = arith.constant 3.200000e+01 : f32
    %166 = vector.broadcast %cst_88 : f32 to vector<32x1xf32>
    %167 = arith.divf %165, %166 : vector<32x1xf32>
    %168 = vector.broadcast %167 : vector<32x1xf32> to vector<32x32xf32>
    %169 = arith.subf %159, %168 : vector<32x32xf32>
    %170 = vector.broadcast %167 : vector<32x1xf32> to vector<32x32xf32>
    %171 = arith.subf %159, %170 : vector<32x32xf32>
    %172 = arith.mulf %169, %171 : vector<32x32xf32>
    %cst_89 = arith.constant dense<0.000000e+00> : vector<32xf32>
    %173 = vector.multi_reduction <add>, %172, %cst_89 [1] : vector<32x32xf32> to vector<32xf32>
    %174 = vector.shape_cast %173 : vector<32xf32> to vector<32x1xf32>
    %cst_90 = arith.constant 3.200000e+01 : f32
    %175 = vector.broadcast %cst_90 : f32 to vector<32x1xf32>
    %176 = arith.divf %174, %175 : vector<32x1xf32>
    %177 = vector.broadcast %167 : vector<32x1xf32> to vector<32x32xf32>
    %178 = arith.subf %159, %177 : vector<32x32xf32>
    %cst_91 = arith.constant 9.99999974E-6 : f32
    %179 = vector.broadcast %cst_91 : f32 to vector<32x1xf32>
    %180 = arith.addf %176, %179 : vector<32x1xf32>
    %181 = math.rsqrt %180 : vector<32x1xf32>
    %182 = vector.broadcast %181 : vector<32x1xf32> to vector<32x32xf32>
    %183 = arith.mulf %178, %182 : vector<32x32xf32>
    %184 = vector.broadcast %161 : vector<1x32xf32> to vector<32x32xf32>
    %185 = arith.mulf %183, %184 : vector<32x32xf32>
    %186 = vector.broadcast %163 : vector<1x32xf32> to vector<32x32xf32>
    %187 = arith.addf %185, %186 : vector<32x32xf32>
    %c0_92 = arith.constant 0 : index
    %c0_93 = arith.constant 0 : index
    %c0_94 = arith.constant 0 : index
    %188 = vector.load %arg22[%c0_92, %c0_93, %c0_94] : memref<2x32x64xf32, #tpu.memory_space<vmem>>, vector<1x32x64xf32>
    %189 = vector.shape_cast %188 : vector<1x32x64xf32> to vector<32x64xf32>
    %cst_95 = arith.constant dense<0.000000e+00> : vector<32x64xf32>
    %190 = tpu.matmul %187, %189, %cst_95 {dimension_numbers = #tpu.dot_dimension_numbers<[1], [0], [0], [1], [0, 0, 1, 1], [], []>} : vector<32x32xf32>, vector<32x64xf32>, vector<32x64xf32> -> vector<32x64xf32>
    %c0_96 = arith.constant 0 : index
    %c0_97 = arith.constant 0 : index
    %c0_98 = arith.constant 0 : index
    %191 = vector.load %arg23[%c0_96, %c0_97, %c0_98] : memref<2x32x64xf32, #tpu.memory_space<vmem>>, vector<1x32x64xf32>
    %192 = vector.shape_cast %191 : vector<1x32x64xf32> to vector<32x64xf32>
    %cst_99 = arith.constant dense<0.000000e+00> : vector<32x64xf32>
    %193 = tpu.matmul %187, %192, %cst_99 {dimension_numbers = #tpu.dot_dimension_numbers<[1], [0], [0], [1], [0, 0, 1, 1], [], []>} : vector<32x32xf32>, vector<32x64xf32>, vector<32x64xf32> -> vector<32x64xf32>
    %cst_100 = arith.constant 0.000000e+00 : f32
    %194 = vector.broadcast %cst_100 : f32 to vector<32x64xf32>
    %195 = arith.subf %194, %190 : vector<32x64xf32>
    %196 = math.exp %195 : vector<32x64xf32>
    %cst_101 = arith.constant 1.000000e+00 : f32
    %197 = vector.broadcast %cst_101 : f32 to vector<32x64xf32>
    %198 = arith.addf %197, %196 : vector<32x64xf32>
    %cst_102 = arith.constant 1.000000e+00 : f32
    %199 = vector.broadcast %cst_102 : f32 to vector<32x64xf32>
    %200 = arith.divf %199, %198 : vector<32x64xf32>
    %201 = arith.mulf %190, %200 : vector<32x64xf32>
    %202 = arith.mulf %201, %193 : vector<32x64xf32>
    %c0_103 = arith.constant 0 : index
    %c0_104 = arith.constant 0 : index
    %c0_105 = arith.constant 0 : index
    %203 = vector.load %arg24[%c0_103, %c0_104, %c0_105] : memref<2x64x32xf32, #tpu.memory_space<vmem>>, vector<1x64x32xf32>
    %204 = vector.shape_cast %203 : vector<1x64x32xf32> to vector<64x32xf32>
    %cst_106 = arith.constant dense<0.000000e+00> : vector<32x32xf32>
    %205 = tpu.matmul %202, %204, %cst_106 {dimension_numbers = #tpu.dot_dimension_numbers<[1], [0], [0], [1], [0, 0, 1, 1], [], []>} : vector<32x64xf32>, vector<64x32xf32>, vector<32x32xf32> -> vector<32x32xf32>
    %206 = arith.addf %159, %205 : vector<32x32xf32>
    %c1_107 = arith.constant 1 : index
    %c0_108 = arith.constant 0 : index
    %c0_109 = arith.constant 0 : index
    %207 = vector.load %arg10[%c1_107, %c0_108, %c0_109] : memref<2x1x32xf32, #tpu.memory_space<vmem>>, vector<1x1x32xf32>
    %208 = vector.shape_cast %207 : vector<1x1x32xf32> to vector<1x32xf32>
    %c1_110 = arith.constant 1 : index
    %c0_111 = arith.constant 0 : index
    %c0_112 = arith.constant 0 : index
    %209 = vector.load %arg11[%c1_110, %c0_111, %c0_112] : memref<2x1x32xf32, #tpu.memory_space<vmem>>, vector<1x1x32xf32>
    %210 = vector.shape_cast %209 : vector<1x1x32xf32> to vector<1x32xf32>
    %cst_113 = arith.constant dense<0.000000e+00> : vector<32xf32>
    %211 = vector.multi_reduction <add>, %206, %cst_113 [1] : vector<32x32xf32> to vector<32xf32>
    %212 = vector.shape_cast %211 : vector<32xf32> to vector<32x1xf32>
    %cst_114 = arith.constant 3.200000e+01 : f32
    %213 = vector.broadcast %cst_114 : f32 to vector<32x1xf32>
    %214 = arith.divf %212, %213 : vector<32x1xf32>
    %215 = vector.broadcast %214 : vector<32x1xf32> to vector<32x32xf32>
    %216 = arith.subf %206, %215 : vector<32x32xf32>
    %217 = vector.broadcast %214 : vector<32x1xf32> to vector<32x32xf32>
    %218 = arith.subf %206, %217 : vector<32x32xf32>
    %219 = arith.mulf %216, %218 : vector<32x32xf32>
    %cst_115 = arith.constant dense<0.000000e+00> : vector<32xf32>
    %220 = vector.multi_reduction <add>, %219, %cst_115 [1] : vector<32x32xf32> to vector<32xf32>
    %221 = vector.shape_cast %220 : vector<32xf32> to vector<32x1xf32>
    %cst_116 = arith.constant 3.200000e+01 : f32
    %222 = vector.broadcast %cst_116 : f32 to vector<32x1xf32>
    %223 = arith.divf %221, %222 : vector<32x1xf32>
    %224 = vector.broadcast %214 : vector<32x1xf32> to vector<32x32xf32>
    %225 = arith.subf %206, %224 : vector<32x32xf32>
    %cst_117 = arith.constant 9.99999974E-6 : f32
    %226 = vector.broadcast %cst_117 : f32 to vector<32x1xf32>
    %227 = arith.addf %223, %226 : vector<32x1xf32>
    %228 = math.rsqrt %227 : vector<32x1xf32>
    %229 = vector.broadcast %228 : vector<32x1xf32> to vector<32x32xf32>
    %230 = arith.mulf %225, %229 : vector<32x32xf32>
    %231 = vector.broadcast %208 : vector<1x32xf32> to vector<32x32xf32>
    %232 = arith.mulf %230, %231 : vector<32x32xf32>
    %233 = vector.broadcast %210 : vector<1x32xf32> to vector<32x32xf32>
    %234 = arith.addf %232, %233 : vector<32x32xf32>
    %c1_118 = arith.constant 1 : index
    %c0_119 = arith.constant 0 : index
    %c0_120 = arith.constant 0 : index
    %235 = vector.load %arg12[%c1_118, %c0_119, %c0_120] : memref<2x32x32xf32, #tpu.memory_space<vmem>>, vector<1x32x32xf32>
    %236 = vector.shape_cast %235 : vector<1x32x32xf32> to vector<32x32xf32>
    %cst_121 = arith.constant dense<0.000000e+00> : vector<32x32xf32>
    %237 = tpu.matmul %234, %236, %cst_121 {dimension_numbers = #tpu.dot_dimension_numbers<[1], [0], [0], [1], [0, 0, 1, 1], [], []>} : vector<32x32xf32>, vector<32x32xf32>, vector<32x32xf32> -> vector<32x32xf32>
    %c1_122 = arith.constant 1 : index
    %c0_123 = arith.constant 0 : index
    %c0_124 = arith.constant 0 : index
    %238 = vector.load %arg13[%c1_122, %c0_123, %c0_124] : memref<2x1x32xf32, #tpu.memory_space<vmem>>, vector<1x1x32xf32>
    %239 = vector.shape_cast %238 : vector<1x1x32xf32> to vector<1x32xf32>
    %240 = vector.broadcast %239 : vector<1x32xf32> to vector<32x32xf32>
    %241 = arith.addf %237, %240 : vector<32x32xf32>
    %242 = arith.mulf %241, %3 : vector<32x32xf32>
    %cst_125 = arith.constant dense<0.000000e+00> : vector<32x32xf32>
    %243 = tpu.matmul %241, %5, %cst_125 {dimension_numbers = #tpu.dot_dimension_numbers<[1], [0], [0], [1], [0, 0, 1, 1], [], []>} : vector<32x32xf32>, vector<32x32xf32>, vector<32x32xf32> -> vector<32x32xf32>
    %244 = arith.mulf %243, %4 : vector<32x32xf32>
    %245 = arith.addf %242, %244 : vector<32x32xf32>
    %c1_126 = arith.constant 1 : index
    %c0_127 = arith.constant 0 : index
    %c0_128 = arith.constant 0 : index
    %246 = vector.load %arg14[%c1_126, %c0_127, %c0_128] : memref<2x32x32xf32, #tpu.memory_space<vmem>>, vector<1x32x32xf32>
    %247 = vector.shape_cast %246 : vector<1x32x32xf32> to vector<32x32xf32>
    %cst_129 = arith.constant dense<0.000000e+00> : vector<32x32xf32>
    %248 = tpu.matmul %234, %247, %cst_129 {dimension_numbers = #tpu.dot_dimension_numbers<[1], [0], [0], [1], [0, 0, 1, 1], [], []>} : vector<32x32xf32>, vector<32x32xf32>, vector<32x32xf32> -> vector<32x32xf32>
    %c1_130 = arith.constant 1 : index
    %c0_131 = arith.constant 0 : index
    %c0_132 = arith.constant 0 : index
    %249 = vector.load %arg15[%c1_130, %c0_131, %c0_132] : memref<2x1x32xf32, #tpu.memory_space<vmem>>, vector<1x1x32xf32>
    %250 = vector.shape_cast %249 : vector<1x1x32xf32> to vector<1x32xf32>
    %251 = vector.broadcast %250 : vector<1x32xf32> to vector<32x32xf32>
    %252 = arith.addf %248, %251 : vector<32x32xf32>
    %253 = arith.mulf %252, %3 : vector<32x32xf32>
    %cst_133 = arith.constant dense<0.000000e+00> : vector<32x32xf32>
    %254 = tpu.matmul %252, %5, %cst_133 {dimension_numbers = #tpu.dot_dimension_numbers<[1], [0], [0], [1], [0, 0, 1, 1], [], []>} : vector<32x32xf32>, vector<32x32xf32>, vector<32x32xf32> -> vector<32x32xf32>
    %255 = arith.mulf %254, %4 : vector<32x32xf32>
    %256 = arith.addf %253, %255 : vector<32x32xf32>
    %c1_134 = arith.constant 1 : index
    %c0_135 = arith.constant 0 : index
    %c0_136 = arith.constant 0 : index
    %257 = vector.load %arg16[%c1_134, %c0_135, %c0_136] : memref<2x32x32xf32, #tpu.memory_space<vmem>>, vector<1x32x32xf32>
    %258 = vector.shape_cast %257 : vector<1x32x32xf32> to vector<32x32xf32>
    %cst_137 = arith.constant dense<0.000000e+00> : vector<32x32xf32>
    %259 = tpu.matmul %234, %258, %cst_137 {dimension_numbers = #tpu.dot_dimension_numbers<[1], [0], [0], [1], [0, 0, 1, 1], [], []>} : vector<32x32xf32>, vector<32x32xf32>, vector<32x32xf32> -> vector<32x32xf32>
    %c1_138 = arith.constant 1 : index
    %c0_139 = arith.constant 0 : index
    %c0_140 = arith.constant 0 : index
    %260 = vector.load %arg17[%c1_138, %c0_139, %c0_140] : memref<2x1x32xf32, #tpu.memory_space<vmem>>, vector<1x1x32xf32>
    %261 = vector.shape_cast %260 : vector<1x1x32xf32> to vector<1x32xf32>
    %262 = vector.broadcast %261 : vector<1x32xf32> to vector<32x32xf32>
    %263 = arith.addf %259, %262 : vector<32x32xf32>
    %cst_141 = arith.constant 0.000000e+00 : f32
    %264 = vector.broadcast %cst_141 : f32 to vector<32x32xf32>
    %c0_142 = arith.constant 0 : index
    %c0_143 = arith.constant 0 : index
    %c0_144 = arith.constant 0 : index
    %265 = vector.load %arg8[%c0_142, %c0_143, %c0_144] : memref<4x1x32xf32, #tpu.memory_space<vmem>>, vector<1x1x32xf32>
    %266 = vector.shape_cast %265 : vector<1x1x32xf32> to vector<1x32xf32>
    %267 = vector.broadcast %266 : vector<1x32xf32> to vector<32x32xf32>
    %268 = arith.mulf %245, %267 : vector<32x32xf32>
    "tpu.trace_start"() <{level = 10 : i32, message = "qd,kd->qk"}> : () -> ()
    %cst_145 = arith.constant dense<0.000000e+00> : vector<32x32xf32>
    %269 = tpu.matmul %268, %256, %cst_145 {dimension_numbers = #tpu.dot_dimension_numbers<[1], [1], [0], [0], [0, 0, 1, 0], [], []>} : vector<32x32xf32>, vector<32x32xf32>, vector<32x32xf32> -> vector<32x32xf32>
    "tpu.trace_stop"() : () -> ()
    %cst_146 = arith.constant 0.353553385 : f32
    %270 = vector.broadcast %cst_146 : f32 to vector<32x32xf32>
    %271 = arith.mulf %269, %270 : vector<32x32xf32>
    %272 = arith.addf %271, %1 : vector<32x32xf32>
    %cst_147 = arith.constant dense<0xFF800000> : vector<32xf32>
    %273 = vector.multi_reduction <maximumf>, %272, %cst_147 [1] : vector<32x32xf32> to vector<32xf32>
    %274 = vector.shape_cast %273 : vector<32xf32> to vector<32x1xf32>
    %275 = vector.broadcast %274 : vector<32x1xf32> to vector<32x32xf32>
    %276 = arith.subf %272, %275 : vector<32x32xf32>
    %277 = math.exp %276 : vector<32x32xf32>
    %cst_148 = arith.constant dense<0.000000e+00> : vector<32xf32>
    %278 = vector.multi_reduction <add>, %277, %cst_148 [1] : vector<32x32xf32> to vector<32xf32>
    %279 = vector.shape_cast %278 : vector<32xf32> to vector<32x1xf32>
    %280 = tpu.reciprocal %279 {approx = true} : vector<32x1xf32> -> vector<32x1xf32>
    %281 = vector.broadcast %280 : vector<32x1xf32> to vector<32x32xf32>
    %282 = arith.mulf %277, %281 : vector<32x32xf32>
    %283 = vector.broadcast %266 : vector<1x32xf32> to vector<32x32xf32>
    %284 = arith.mulf %263, %283 : vector<32x32xf32>
    %cst_149 = arith.constant dense<0.000000e+00> : vector<32x32xf32>
    %285 = tpu.matmul %282, %284, %cst_149 {dimension_numbers = #tpu.dot_dimension_numbers<[1], [0], [0], [1], [0, 0, 1, 1], [], []>} : vector<32x32xf32>, vector<32x32xf32>, vector<32x32xf32> -> vector<32x32xf32>
    %286 = arith.addf %264, %285 : vector<32x32xf32>
    %c1_150 = arith.constant 1 : index
    %c0_151 = arith.constant 0 : index
    %c0_152 = arith.constant 0 : index
    %287 = vector.load %arg8[%c1_150, %c0_151, %c0_152] : memref<4x1x32xf32, #tpu.memory_space<vmem>>, vector<1x1x32xf32>
    %288 = vector.shape_cast %287 : vector<1x1x32xf32> to vector<1x32xf32>
    %289 = vector.broadcast %288 : vector<1x32xf32> to vector<32x32xf32>
    %290 = arith.mulf %245, %289 : vector<32x32xf32>
    "tpu.trace_start"() <{level = 10 : i32, message = "qd,kd->qk"}> : () -> ()
    %cst_153 = arith.constant dense<0.000000e+00> : vector<32x32xf32>
    %291 = tpu.matmul %290, %256, %cst_153 {dimension_numbers = #tpu.dot_dimension_numbers<[1], [1], [0], [0], [0, 0, 1, 0], [], []>} : vector<32x32xf32>, vector<32x32xf32>, vector<32x32xf32> -> vector<32x32xf32>
    "tpu.trace_stop"() : () -> ()
    %cst_154 = arith.constant 0.353553385 : f32
    %292 = vector.broadcast %cst_154 : f32 to vector<32x32xf32>
    %293 = arith.mulf %291, %292 : vector<32x32xf32>
    %294 = arith.addf %293, %1 : vector<32x32xf32>
    %cst_155 = arith.constant dense<0xFF800000> : vector<32xf32>
    %295 = vector.multi_reduction <maximumf>, %294, %cst_155 [1] : vector<32x32xf32> to vector<32xf32>
    %296 = vector.shape_cast %295 : vector<32xf32> to vector<32x1xf32>
    %297 = vector.broadcast %296 : vector<32x1xf32> to vector<32x32xf32>
    %298 = arith.subf %294, %297 : vector<32x32xf32>
    %299 = math.exp %298 : vector<32x32xf32>
    %cst_156 = arith.constant dense<0.000000e+00> : vector<32xf32>
    %300 = vector.multi_reduction <add>, %299, %cst_156 [1] : vector<32x32xf32> to vector<32xf32>
    %301 = vector.shape_cast %300 : vector<32xf32> to vector<32x1xf32>
    %302 = tpu.reciprocal %301 {approx = true} : vector<32x1xf32> -> vector<32x1xf32>
    %303 = vector.broadcast %302 : vector<32x1xf32> to vector<32x32xf32>
    %304 = arith.mulf %299, %303 : vector<32x32xf32>
    %305 = vector.broadcast %288 : vector<1x32xf32> to vector<32x32xf32>
    %306 = arith.mulf %263, %305 : vector<32x32xf32>
    %cst_157 = arith.constant dense<0.000000e+00> : vector<32x32xf32>
    %307 = tpu.matmul %304, %306, %cst_157 {dimension_numbers = #tpu.dot_dimension_numbers<[1], [0], [0], [1], [0, 0, 1, 1], [], []>} : vector<32x32xf32>, vector<32x32xf32>, vector<32x32xf32> -> vector<32x32xf32>
    %308 = arith.addf %286, %307 : vector<32x32xf32>
    %c2_158 = arith.constant 2 : index
    %c0_159 = arith.constant 0 : index
    %c0_160 = arith.constant 0 : index
    %309 = vector.load %arg8[%c2_158, %c0_159, %c0_160] : memref<4x1x32xf32, #tpu.memory_space<vmem>>, vector<1x1x32xf32>
    %310 = vector.shape_cast %309 : vector<1x1x32xf32> to vector<1x32xf32>
    %311 = vector.broadcast %310 : vector<1x32xf32> to vector<32x32xf32>
    %312 = arith.mulf %245, %311 : vector<32x32xf32>
    "tpu.trace_start"() <{level = 10 : i32, message = "qd,kd->qk"}> : () -> ()
    %cst_161 = arith.constant dense<0.000000e+00> : vector<32x32xf32>
    %313 = tpu.matmul %312, %256, %cst_161 {dimension_numbers = #tpu.dot_dimension_numbers<[1], [1], [0], [0], [0, 0, 1, 0], [], []>} : vector<32x32xf32>, vector<32x32xf32>, vector<32x32xf32> -> vector<32x32xf32>
    "tpu.trace_stop"() : () -> ()
    %cst_162 = arith.constant 0.353553385 : f32
    %314 = vector.broadcast %cst_162 : f32 to vector<32x32xf32>
    %315 = arith.mulf %313, %314 : vector<32x32xf32>
    %316 = arith.addf %315, %1 : vector<32x32xf32>
    %cst_163 = arith.constant dense<0xFF800000> : vector<32xf32>
    %317 = vector.multi_reduction <maximumf>, %316, %cst_163 [1] : vector<32x32xf32> to vector<32xf32>
    %318 = vector.shape_cast %317 : vector<32xf32> to vector<32x1xf32>
    %319 = vector.broadcast %318 : vector<32x1xf32> to vector<32x32xf32>
    %320 = arith.subf %316, %319 : vector<32x32xf32>
    %321 = math.exp %320 : vector<32x32xf32>
    %cst_164 = arith.constant dense<0.000000e+00> : vector<32xf32>
    %322 = vector.multi_reduction <add>, %321, %cst_164 [1] : vector<32x32xf32> to vector<32xf32>
    %323 = vector.shape_cast %322 : vector<32xf32> to vector<32x1xf32>
    %324 = tpu.reciprocal %323 {approx = true} : vector<32x1xf32> -> vector<32x1xf32>
    %325 = vector.broadcast %324 : vector<32x1xf32> to vector<32x32xf32>
    %326 = arith.mulf %321, %325 : vector<32x32xf32>
    %327 = vector.broadcast %310 : vector<1x32xf32> to vector<32x32xf32>
    %328 = arith.mulf %263, %327 : vector<32x32xf32>
    %cst_165 = arith.constant dense<0.000000e+00> : vector<32x32xf32>
    %329 = tpu.matmul %326, %328, %cst_165 {dimension_numbers = #tpu.dot_dimension_numbers<[1], [0], [0], [1], [0, 0, 1, 1], [], []>} : vector<32x32xf32>, vector<32x32xf32>, vector<32x32xf32> -> vector<32x32xf32>
    %330 = arith.addf %308, %329 : vector<32x32xf32>
    %c3_166 = arith.constant 3 : index
    %c0_167 = arith.constant 0 : index
    %c0_168 = arith.constant 0 : index
    %331 = vector.load %arg8[%c3_166, %c0_167, %c0_168] : memref<4x1x32xf32, #tpu.memory_space<vmem>>, vector<1x1x32xf32>
    %332 = vector.shape_cast %331 : vector<1x1x32xf32> to vector<1x32xf32>
    %333 = vector.broadcast %332 : vector<1x32xf32> to vector<32x32xf32>
    %334 = arith.mulf %245, %333 : vector<32x32xf32>
    "tpu.trace_start"() <{level = 10 : i32, message = "qd,kd->qk"}> : () -> ()
    %cst_169 = arith.constant dense<0.000000e+00> : vector<32x32xf32>
    %335 = tpu.matmul %334, %256, %cst_169 {dimension_numbers = #tpu.dot_dimension_numbers<[1], [1], [0], [0], [0, 0, 1, 0], [], []>} : vector<32x32xf32>, vector<32x32xf32>, vector<32x32xf32> -> vector<32x32xf32>
    "tpu.trace_stop"() : () -> ()
    %cst_170 = arith.constant 0.353553385 : f32
    %336 = vector.broadcast %cst_170 : f32 to vector<32x32xf32>
    %337 = arith.mulf %335, %336 : vector<32x32xf32>
    %338 = arith.addf %337, %1 : vector<32x32xf32>
    %cst_171 = arith.constant dense<0xFF800000> : vector<32xf32>
    %339 = vector.multi_reduction <maximumf>, %338, %cst_171 [1] : vector<32x32xf32> to vector<32xf32>
    %340 = vector.shape_cast %339 : vector<32xf32> to vector<32x1xf32>
    %341 = vector.broadcast %340 : vector<32x1xf32> to vector<32x32xf32>
    %342 = arith.subf %338, %341 : vector<32x32xf32>
    %343 = math.exp %342 : vector<32x32xf32>
    %cst_172 = arith.constant dense<0.000000e+00> : vector<32xf32>
    %344 = vector.multi_reduction <add>, %343, %cst_172 [1] : vector<32x32xf32> to vector<32xf32>
    %345 = vector.shape_cast %344 : vector<32xf32> to vector<32x1xf32>
    %346 = tpu.reciprocal %345 {approx = true} : vector<32x1xf32> -> vector<32x1xf32>
    %347 = vector.broadcast %346 : vector<32x1xf32> to vector<32x32xf32>
    %348 = arith.mulf %343, %347 : vector<32x32xf32>
    %349 = vector.broadcast %332 : vector<1x32xf32> to vector<32x32xf32>
    %350 = arith.mulf %263, %349 : vector<32x32xf32>
    %cst_173 = arith.constant dense<0.000000e+00> : vector<32x32xf32>
    %351 = tpu.matmul %348, %350, %cst_173 {dimension_numbers = #tpu.dot_dimension_numbers<[1], [0], [0], [1], [0, 0, 1, 1], [], []>} : vector<32x32xf32>, vector<32x32xf32>, vector<32x32xf32> -> vector<32x32xf32>
    %352 = arith.addf %330, %351 : vector<32x32xf32>
    %c1_174 = arith.constant 1 : index
    %c0_175 = arith.constant 0 : index
    %c0_176 = arith.constant 0 : index
    %353 = vector.load %arg18[%c1_174, %c0_175, %c0_176] : memref<2x32x32xf32, #tpu.memory_space<vmem>>, vector<1x32x32xf32>
    %354 = vector.shape_cast %353 : vector<1x32x32xf32> to vector<32x32xf32>
    %cst_177 = arith.constant dense<0.000000e+00> : vector<32x32xf32>
    %355 = tpu.matmul %352, %354, %cst_177 {dimension_numbers = #tpu.dot_dimension_numbers<[1], [0], [0], [1], [0, 0, 1, 1], [], []>} : vector<32x32xf32>, vector<32x32xf32>, vector<32x32xf32> -> vector<32x32xf32>
    %356 = arith.addf %206, %355 : vector<32x32xf32>
    %c1_178 = arith.constant 1 : index
    %c0_179 = arith.constant 0 : index
    %c0_180 = arith.constant 0 : index
    %357 = vector.load %arg19[%c1_178, %c0_179, %c0_180] : memref<2x1x32xf32, #tpu.memory_space<vmem>>, vector<1x1x32xf32>
    %358 = vector.shape_cast %357 : vector<1x1x32xf32> to vector<1x32xf32>
    %359 = vector.broadcast %358 : vector<1x32xf32> to vector<32x32xf32>
    %360 = arith.addf %356, %359 : vector<32x32xf32>
    %c1_181 = arith.constant 1 : index
    %c0_182 = arith.constant 0 : index
    %c0_183 = arith.constant 0 : index
    %361 = vector.load %arg20[%c1_181, %c0_182, %c0_183] : memref<2x1x32xf32, #tpu.memory_space<vmem>>, vector<1x1x32xf32>
    %362 = vector.shape_cast %361 : vector<1x1x32xf32> to vector<1x32xf32>
    %c1_184 = arith.constant 1 : index
    %c0_185 = arith.constant 0 : index
    %c0_186 = arith.constant 0 : index
    %363 = vector.load %arg21[%c1_184, %c0_185, %c0_186] : memref<2x1x32xf32, #tpu.memory_space<vmem>>, vector<1x1x32xf32>
    %364 = vector.shape_cast %363 : vector<1x1x32xf32> to vector<1x32xf32>
    %cst_187 = arith.constant dense<0.000000e+00> : vector<32xf32>
    %365 = vector.multi_reduction <add>, %360, %cst_187 [1] : vector<32x32xf32> to vector<32xf32>
    %366 = vector.shape_cast %365 : vector<32xf32> to vector<32x1xf32>
    %cst_188 = arith.constant 3.200000e+01 : f32
    %367 = vector.broadcast %cst_188 : f32 to vector<32x1xf32>
    %368 = arith.divf %366, %367 : vector<32x1xf32>
    %369 = vector.broadcast %368 : vector<32x1xf32> to vector<32x32xf32>
    %370 = arith.subf %360, %369 : vector<32x32xf32>
    %371 = vector.broadcast %368 : vector<32x1xf32> to vector<32x32xf32>
    %372 = arith.subf %360, %371 : vector<32x32xf32>
    %373 = arith.mulf %370, %372 : vector<32x32xf32>
    %cst_189 = arith.constant dense<0.000000e+00> : vector<32xf32>
    %374 = vector.multi_reduction <add>, %373, %cst_189 [1] : vector<32x32xf32> to vector<32xf32>
    %375 = vector.shape_cast %374 : vector<32xf32> to vector<32x1xf32>
    %cst_190 = arith.constant 3.200000e+01 : f32
    %376 = vector.broadcast %cst_190 : f32 to vector<32x1xf32>
    %377 = arith.divf %375, %376 : vector<32x1xf32>
    %378 = vector.broadcast %368 : vector<32x1xf32> to vector<32x32xf32>
    %379 = arith.subf %360, %378 : vector<32x32xf32>
    %cst_191 = arith.constant 9.99999974E-6 : f32
    %380 = vector.broadcast %cst_191 : f32 to vector<32x1xf32>
    %381 = arith.addf %377, %380 : vector<32x1xf32>
    %382 = math.rsqrt %381 : vector<32x1xf32>
    %383 = vector.broadcast %382 : vector<32x1xf32> to vector<32x32xf32>
    %384 = arith.mulf %379, %383 : vector<32x32xf32>
    %385 = vector.broadcast %362 : vector<1x32xf32> to vector<32x32xf32>
    %386 = arith.mulf %384, %385 : vector<32x32xf32>
    %387 = vector.broadcast %364 : vector<1x32xf32> to vector<32x32xf32>
    %388 = arith.addf %386, %387 : vector<32x32xf32>
    %c1_192 = arith.constant 1 : index
    %c0_193 = arith.constant 0 : index
    %c0_194 = arith.constant 0 : index
    %389 = vector.load %arg22[%c1_192, %c0_193, %c0_194] : memref<2x32x64xf32, #tpu.memory_space<vmem>>, vector<1x32x64xf32>
    %390 = vector.shape_cast %389 : vector<1x32x64xf32> to vector<32x64xf32>
    %cst_195 = arith.constant dense<0.000000e+00> : vector<32x64xf32>
    %391 = tpu.matmul %388, %390, %cst_195 {dimension_numbers = #tpu.dot_dimension_numbers<[1], [0], [0], [1], [0, 0, 1, 1], [], []>} : vector<32x32xf32>, vector<32x64xf32>, vector<32x64xf32> -> vector<32x64xf32>
    %c1_196 = arith.constant 1 : index
    %c0_197 = arith.constant 0 : index
    %c0_198 = arith.constant 0 : index
    %392 = vector.load %arg23[%c1_196, %c0_197, %c0_198] : memref<2x32x64xf32, #tpu.memory_space<vmem>>, vector<1x32x64xf32>
    %393 = vector.shape_cast %392 : vector<1x32x64xf32> to vector<32x64xf32>
    %cst_199 = arith.constant dense<0.000000e+00> : vector<32x64xf32>
    %394 = tpu.matmul %388, %393, %cst_199 {dimension_numbers = #tpu.dot_dimension_numbers<[1], [0], [0], [1], [0, 0, 1, 1], [], []>} : vector<32x32xf32>, vector<32x64xf32>, vector<32x64xf32> -> vector<32x64xf32>
    %cst_200 = arith.constant 0.000000e+00 : f32
    %395 = vector.broadcast %cst_200 : f32 to vector<32x64xf32>
    %396 = arith.subf %395, %391 : vector<32x64xf32>
    %397 = math.exp %396 : vector<32x64xf32>
    %cst_201 = arith.constant 1.000000e+00 : f32
    %398 = vector.broadcast %cst_201 : f32 to vector<32x64xf32>
    %399 = arith.addf %398, %397 : vector<32x64xf32>
    %cst_202 = arith.constant 1.000000e+00 : f32
    %400 = vector.broadcast %cst_202 : f32 to vector<32x64xf32>
    %401 = arith.divf %400, %399 : vector<32x64xf32>
    %402 = arith.mulf %391, %401 : vector<32x64xf32>
    %403 = arith.mulf %402, %394 : vector<32x64xf32>
    %c1_203 = arith.constant 1 : index
    %c0_204 = arith.constant 0 : index
    %c0_205 = arith.constant 0 : index
    %404 = vector.load %arg24[%c1_203, %c0_204, %c0_205] : memref<2x64x32xf32, #tpu.memory_space<vmem>>, vector<1x64x32xf32>
    %405 = vector.shape_cast %404 : vector<1x64x32xf32> to vector<64x32xf32>
    %cst_206 = arith.constant dense<0.000000e+00> : vector<32x32xf32>
    %406 = tpu.matmul %403, %405, %cst_206 {dimension_numbers = #tpu.dot_dimension_numbers<[1], [0], [0], [1], [0, 0, 1, 1], [], []>} : vector<32x64xf32>, vector<64x32xf32>, vector<32x32xf32> -> vector<32x32xf32>
    %407 = arith.addf %360, %406 : vector<32x32xf32>
    %c0_207 = arith.constant 0 : index
    %c0_208 = arith.constant 0 : index
    %408 = vector.load %arg25[%c0_207, %c0_208] : memref<1x32xf32, #tpu.memory_space<vmem>>, vector<1x32xf32>
    %c0_209 = arith.constant 0 : index
    %c0_210 = arith.constant 0 : index
    %409 = vector.load %arg26[%c0_209, %c0_210] : memref<1x32xf32, #tpu.memory_space<vmem>>, vector<1x32xf32>
    %cst_211 = arith.constant dense<0.000000e+00> : vector<32xf32>
    %410 = vector.multi_reduction <add>, %407, %cst_211 [1] : vector<32x32xf32> to vector<32xf32>
    %411 = vector.shape_cast %410 : vector<32xf32> to vector<32x1xf32>
    %cst_212 = arith.constant 3.200000e+01 : f32
    %412 = vector.broadcast %cst_212 : f32 to vector<32x1xf32>
    %413 = arith.divf %411, %412 : vector<32x1xf32>
    %414 = vector.broadcast %413 : vector<32x1xf32> to vector<32x32xf32>
    %415 = arith.subf %407, %414 : vector<32x32xf32>
    %416 = vector.broadcast %413 : vector<32x1xf32> to vector<32x32xf32>
    %417 = arith.subf %407, %416 : vector<32x32xf32>
    %418 = arith.mulf %415, %417 : vector<32x32xf32>
    %cst_213 = arith.constant dense<0.000000e+00> : vector<32xf32>
    %419 = vector.multi_reduction <add>, %418, %cst_213 [1] : vector<32x32xf32> to vector<32xf32>
    %420 = vector.shape_cast %419 : vector<32xf32> to vector<32x1xf32>
    %cst_214 = arith.constant 3.200000e+01 : f32
    %421 = vector.broadcast %cst_214 : f32 to vector<32x1xf32>
    %422 = arith.divf %420, %421 : vector<32x1xf32>
    %423 = vector.broadcast %413 : vector<32x1xf32> to vector<32x32xf32>
    %424 = arith.subf %407, %423 : vector<32x32xf32>
    %cst_215 = arith.constant 9.99999974E-6 : f32
    %425 = vector.broadcast %cst_215 : f32 to vector<32x1xf32>
    %426 = arith.addf %422, %425 : vector<32x1xf32>
    %427 = math.rsqrt %426 : vector<32x1xf32>
    %428 = vector.broadcast %427 : vector<32x1xf32> to vector<32x32xf32>
    %429 = arith.mulf %424, %428 : vector<32x32xf32>
    %430 = vector.broadcast %408 : vector<1x32xf32> to vector<32x32xf32>
    %431 = arith.mulf %429, %430 : vector<32x32xf32>
    %432 = vector.broadcast %409 : vector<1x32xf32> to vector<32x32xf32>
    %433 = arith.addf %431, %432 : vector<32x32xf32>
    %434 = vector.broadcast %2 : vector<32x1xf32> to vector<32x32xf32>
    %435 = arith.mulf %433, %434 : vector<32x32xf32>
    %c0_216 = arith.constant 0 : index
    %c0_217 = arith.constant 0 : index
    %436 = vector.load %arg27[%c0_216, %c0_217] : memref<32x32xf32, #tpu.memory_space<vmem>>, vector<32x32xf32>
    %cst_218 = arith.constant dense<0.000000e+00> : vector<32x32xf32>
    %437 = tpu.matmul %435, %436, %cst_218 {dimension_numbers = #tpu.dot_dimension_numbers<[1], [0], [0], [1], [0, 0, 1, 1], [], []>} : vector<32x32xf32>, vector<32x32xf32>, vector<32x32xf32> -> vector<32x32xf32>
    %c0_219 = arith.constant 0 : index
    %c0_220 = arith.constant 0 : index
    %438 = vector.load %arg28[%c0_219, %c0_220] : memref<1x32xf32, #tpu.memory_space<vmem>>, vector<1x32xf32>
    %439 = vector.broadcast %438 : vector<1x32xf32> to vector<32x32xf32>
    %440 = arith.addf %437, %439 : vector<32x32xf32>
    %441 = vector.broadcast %2 : vector<32x1xf32> to vector<32x32xf32>
    %442 = arith.mulf %440, %441 : vector<32x32xf32>
    %c0_221 = arith.constant 0 : index
    %c0_222 = arith.constant 0 : index
    %443 = vector.load %arg9[%c0_221, %c0_222] : memref<64x32xf32, #tpu.memory_space<vmem>>, vector<64x32xf32>
    %cst_223 = arith.constant dense<0.000000e+00> : vector<64x32xf32>
    %444 = tpu.matmul %443, %442, %cst_223 {dimension_numbers = #tpu.dot_dimension_numbers<[1], [0], [0], [1], [0, 0, 1, 1], [], []>} : vector<64x32xf32>, vector<32x32xf32>, vector<64x32xf32> -> vector<64x32xf32>
    %445 = vector.extract_strided_slice %444 {offsets = [0, 0], sizes = [32, 32], strides = [1, 1]} : vector<64x32xf32> to vector<32x32xf32>
    %446 = vector.extract_strided_slice %444 {offsets = [32, 0], sizes = [32, 32], strides = [1, 1]} : vector<64x32xf32> to vector<32x32xf32>
    %c0_224 = arith.constant 0 : index
    %c0_225 = arith.constant 0 : index
    %c0_226 = arith.constant 0 : index
    %c0_227 = arith.constant 0 : index
    %447 = vector.load %arg29[%c0_224, %c0_225, %c0_226, %c0_227] : memref<6x3x32x32xf32, #tpu.memory_space<vmem>>, vector<1x1x32x32xf32>
    %448 = vector.shape_cast %447 : vector<1x1x32x32xf32> to vector<32x32xf32>
    %cst_228 = arith.constant dense<0.000000e+00> : vector<32x32xf32>
    %449 = tpu.matmul %445, %448, %cst_228 {dimension_numbers = #tpu.dot_dimension_numbers<[1], [0], [0], [1], [0, 0, 1, 1], [], []>} : vector<32x32xf32>, vector<32x32xf32>, vector<32x32xf32> -> vector<32x32xf32>
    %c0_229 = arith.constant 0 : index
    %c1_230 = arith.constant 1 : index
    %c0_231 = arith.constant 0 : index
    %c0_232 = arith.constant 0 : index
    %450 = vector.load %arg29[%c0_229, %c1_230, %c0_231, %c0_232] : memref<6x3x32x32xf32, #tpu.memory_space<vmem>>, vector<1x1x32x32xf32>
    %451 = vector.shape_cast %450 : vector<1x1x32x32xf32> to vector<32x32xf32>
    %cst_233 = arith.constant dense<0.000000e+00> : vector<32x32xf32>
    %452 = tpu.matmul %442, %451, %cst_233 {dimension_numbers = #tpu.dot_dimension_numbers<[1], [0], [0], [1], [0, 0, 1, 1], [], []>} : vector<32x32xf32>, vector<32x32xf32>, vector<32x32xf32> -> vector<32x32xf32>
    %453 = arith.addf %449, %452 : vector<32x32xf32>
    %c0_234 = arith.constant 0 : index
    %c2_235 = arith.constant 2 : index
    %c0_236 = arith.constant 0 : index
    %c0_237 = arith.constant 0 : index
    %454 = vector.load %arg29[%c0_234, %c2_235, %c0_236, %c0_237] : memref<6x3x32x32xf32, #tpu.memory_space<vmem>>, vector<1x1x32x32xf32>
    %455 = vector.shape_cast %454 : vector<1x1x32x32xf32> to vector<32x32xf32>
    %cst_238 = arith.constant dense<0.000000e+00> : vector<32x32xf32>
    %456 = tpu.matmul %446, %455, %cst_238 {dimension_numbers = #tpu.dot_dimension_numbers<[1], [0], [0], [1], [0, 0, 1, 1], [], []>} : vector<32x32xf32>, vector<32x32xf32>, vector<32x32xf32> -> vector<32x32xf32>
    %457 = arith.addf %453, %456 : vector<32x32xf32>
    %c0_239 = arith.constant 0 : index
    %c0_240 = arith.constant 0 : index
    %c0_241 = arith.constant 0 : index
    %458 = vector.load %arg30[%c0_239, %c0_240, %c0_241] : memref<6x1x32xf32, #tpu.memory_space<vmem>>, vector<1x1x32xf32>
    %459 = vector.shape_cast %458 : vector<1x1x32xf32> to vector<1x32xf32>
    %460 = vector.broadcast %459 : vector<1x32xf32> to vector<32x32xf32>
    %461 = arith.addf %457, %460 : vector<32x32xf32>
    %cst_242 = arith.constant 0.000000e+00 : f32
    %462 = vector.broadcast %cst_242 : f32 to vector<32x32xf32>
    %463 = arith.maximumf %461, %462 : vector<32x32xf32>
    %464 = arith.addf %442, %463 : vector<32x32xf32>
    %465 = vector.broadcast %2 : vector<32x1xf32> to vector<32x32xf32>
    %466 = arith.mulf %464, %465 : vector<32x32xf32>
    %cst_243 = arith.constant dense<0.000000e+00> : vector<64x32xf32>
    %467 = tpu.matmul %443, %466, %cst_243 {dimension_numbers = #tpu.dot_dimension_numbers<[1], [0], [0], [1], [0, 0, 1, 1], [], []>} : vector<64x32xf32>, vector<32x32xf32>, vector<64x32xf32> -> vector<64x32xf32>
    %468 = vector.extract_strided_slice %467 {offsets = [0, 0], sizes = [32, 32], strides = [1, 1]} : vector<64x32xf32> to vector<32x32xf32>
    %469 = vector.extract_strided_slice %467 {offsets = [32, 0], sizes = [32, 32], strides = [1, 1]} : vector<64x32xf32> to vector<32x32xf32>
    %c1_244 = arith.constant 1 : index
    %c0_245 = arith.constant 0 : index
    %c0_246 = arith.constant 0 : index
    %c0_247 = arith.constant 0 : index
    %470 = vector.load %arg29[%c1_244, %c0_245, %c0_246, %c0_247] : memref<6x3x32x32xf32, #tpu.memory_space<vmem>>, vector<1x1x32x32xf32>
    %471 = vector.shape_cast %470 : vector<1x1x32x32xf32> to vector<32x32xf32>
    %cst_248 = arith.constant dense<0.000000e+00> : vector<32x32xf32>
    %472 = tpu.matmul %468, %471, %cst_248 {dimension_numbers = #tpu.dot_dimension_numbers<[1], [0], [0], [1], [0, 0, 1, 1], [], []>} : vector<32x32xf32>, vector<32x32xf32>, vector<32x32xf32> -> vector<32x32xf32>
    %c1_249 = arith.constant 1 : index
    %c1_250 = arith.constant 1 : index
    %c0_251 = arith.constant 0 : index
    %c0_252 = arith.constant 0 : index
    %473 = vector.load %arg29[%c1_249, %c1_250, %c0_251, %c0_252] : memref<6x3x32x32xf32, #tpu.memory_space<vmem>>, vector<1x1x32x32xf32>
    %474 = vector.shape_cast %473 : vector<1x1x32x32xf32> to vector<32x32xf32>
    %cst_253 = arith.constant dense<0.000000e+00> : vector<32x32xf32>
    %475 = tpu.matmul %466, %474, %cst_253 {dimension_numbers = #tpu.dot_dimension_numbers<[1], [0], [0], [1], [0, 0, 1, 1], [], []>} : vector<32x32xf32>, vector<32x32xf32>, vector<32x32xf32> -> vector<32x32xf32>
    %476 = arith.addf %472, %475 : vector<32x32xf32>
    %c1_254 = arith.constant 1 : index
    %c2_255 = arith.constant 2 : index
    %c0_256 = arith.constant 0 : index
    %c0_257 = arith.constant 0 : index
    %477 = vector.load %arg29[%c1_254, %c2_255, %c0_256, %c0_257] : memref<6x3x32x32xf32, #tpu.memory_space<vmem>>, vector<1x1x32x32xf32>
    %478 = vector.shape_cast %477 : vector<1x1x32x32xf32> to vector<32x32xf32>
    %cst_258 = arith.constant dense<0.000000e+00> : vector<32x32xf32>
    %479 = tpu.matmul %469, %478, %cst_258 {dimension_numbers = #tpu.dot_dimension_numbers<[1], [0], [0], [1], [0, 0, 1, 1], [], []>} : vector<32x32xf32>, vector<32x32xf32>, vector<32x32xf32> -> vector<32x32xf32>
    %480 = arith.addf %476, %479 : vector<32x32xf32>
    %c1_259 = arith.constant 1 : index
    %c0_260 = arith.constant 0 : index
    %c0_261 = arith.constant 0 : index
    %481 = vector.load %arg30[%c1_259, %c0_260, %c0_261] : memref<6x1x32xf32, #tpu.memory_space<vmem>>, vector<1x1x32xf32>
    %482 = vector.shape_cast %481 : vector<1x1x32xf32> to vector<1x32xf32>
    %483 = vector.broadcast %482 : vector<1x32xf32> to vector<32x32xf32>
    %484 = arith.addf %480, %483 : vector<32x32xf32>
    %cst_262 = arith.constant 0.000000e+00 : f32
    %485 = vector.broadcast %cst_262 : f32 to vector<32x32xf32>
    %486 = arith.maximumf %484, %485 : vector<32x32xf32>
    %487 = arith.addf %466, %486 : vector<32x32xf32>
    %488 = vector.broadcast %2 : vector<32x1xf32> to vector<32x32xf32>
    %489 = arith.mulf %487, %488 : vector<32x32xf32>
    %cst_263 = arith.constant dense<0.000000e+00> : vector<64x32xf32>
    %490 = tpu.matmul %443, %489, %cst_263 {dimension_numbers = #tpu.dot_dimension_numbers<[1], [0], [0], [1], [0, 0, 1, 1], [], []>} : vector<64x32xf32>, vector<32x32xf32>, vector<64x32xf32> -> vector<64x32xf32>
    %491 = vector.extract_strided_slice %490 {offsets = [0, 0], sizes = [32, 32], strides = [1, 1]} : vector<64x32xf32> to vector<32x32xf32>
    %492 = vector.extract_strided_slice %490 {offsets = [32, 0], sizes = [32, 32], strides = [1, 1]} : vector<64x32xf32> to vector<32x32xf32>
    %c2_264 = arith.constant 2 : index
    %c0_265 = arith.constant 0 : index
    %c0_266 = arith.constant 0 : index
    %c0_267 = arith.constant 0 : index
    %493 = vector.load %arg29[%c2_264, %c0_265, %c0_266, %c0_267] : memref<6x3x32x32xf32, #tpu.memory_space<vmem>>, vector<1x1x32x32xf32>
    %494 = vector.shape_cast %493 : vector<1x1x32x32xf32> to vector<32x32xf32>
    %cst_268 = arith.constant dense<0.000000e+00> : vector<32x32xf32>
    %495 = tpu.matmul %491, %494, %cst_268 {dimension_numbers = #tpu.dot_dimension_numbers<[1], [0], [0], [1], [0, 0, 1, 1], [], []>} : vector<32x32xf32>, vector<32x32xf32>, vector<32x32xf32> -> vector<32x32xf32>
    %c2_269 = arith.constant 2 : index
    %c1_270 = arith.constant 1 : index
    %c0_271 = arith.constant 0 : index
    %c0_272 = arith.constant 0 : index
    %496 = vector.load %arg29[%c2_269, %c1_270, %c0_271, %c0_272] : memref<6x3x32x32xf32, #tpu.memory_space<vmem>>, vector<1x1x32x32xf32>
    %497 = vector.shape_cast %496 : vector<1x1x32x32xf32> to vector<32x32xf32>
    %cst_273 = arith.constant dense<0.000000e+00> : vector<32x32xf32>
    %498 = tpu.matmul %489, %497, %cst_273 {dimension_numbers = #tpu.dot_dimension_numbers<[1], [0], [0], [1], [0, 0, 1, 1], [], []>} : vector<32x32xf32>, vector<32x32xf32>, vector<32x32xf32> -> vector<32x32xf32>
    %499 = arith.addf %495, %498 : vector<32x32xf32>
    %c2_274 = arith.constant 2 : index
    %c2_275 = arith.constant 2 : index
    %c0_276 = arith.constant 0 : index
    %c0_277 = arith.constant 0 : index
    %500 = vector.load %arg29[%c2_274, %c2_275, %c0_276, %c0_277] : memref<6x3x32x32xf32, #tpu.memory_space<vmem>>, vector<1x1x32x32xf32>
    %501 = vector.shape_cast %500 : vector<1x1x32x32xf32> to vector<32x32xf32>
    %cst_278 = arith.constant dense<0.000000e+00> : vector<32x32xf32>
    %502 = tpu.matmul %492, %501, %cst_278 {dimension_numbers = #tpu.dot_dimension_numbers<[1], [0], [0], [1], [0, 0, 1, 1], [], []>} : vector<32x32xf32>, vector<32x32xf32>, vector<32x32xf32> -> vector<32x32xf32>
    %503 = arith.addf %499, %502 : vector<32x32xf32>
    %c2_279 = arith.constant 2 : index
    %c0_280 = arith.constant 0 : index
    %c0_281 = arith.constant 0 : index
    %504 = vector.load %arg30[%c2_279, %c0_280, %c0_281] : memref<6x1x32xf32, #tpu.memory_space<vmem>>, vector<1x1x32xf32>
    %505 = vector.shape_cast %504 : vector<1x1x32xf32> to vector<1x32xf32>
    %506 = vector.broadcast %505 : vector<1x32xf32> to vector<32x32xf32>
    %507 = arith.addf %503, %506 : vector<32x32xf32>
    %cst_282 = arith.constant 0.000000e+00 : f32
    %508 = vector.broadcast %cst_282 : f32 to vector<32x32xf32>
    %509 = arith.maximumf %507, %508 : vector<32x32xf32>
    %510 = arith.addf %489, %509 : vector<32x32xf32>
    %511 = vector.broadcast %2 : vector<32x1xf32> to vector<32x32xf32>
    %512 = arith.mulf %510, %511 : vector<32x32xf32>
    %cst_283 = arith.constant dense<0.000000e+00> : vector<64x32xf32>
    %513 = tpu.matmul %443, %512, %cst_283 {dimension_numbers = #tpu.dot_dimension_numbers<[1], [0], [0], [1], [0, 0, 1, 1], [], []>} : vector<64x32xf32>, vector<32x32xf32>, vector<64x32xf32> -> vector<64x32xf32>
    %514 = vector.extract_strided_slice %513 {offsets = [0, 0], sizes = [32, 32], strides = [1, 1]} : vector<64x32xf32> to vector<32x32xf32>
    %515 = vector.extract_strided_slice %513 {offsets = [32, 0], sizes = [32, 32], strides = [1, 1]} : vector<64x32xf32> to vector<32x32xf32>
    %c3_284 = arith.constant 3 : index
    %c0_285 = arith.constant 0 : index
    %c0_286 = arith.constant 0 : index
    %c0_287 = arith.constant 0 : index
    %516 = vector.load %arg29[%c3_284, %c0_285, %c0_286, %c0_287] : memref<6x3x32x32xf32, #tpu.memory_space<vmem>>, vector<1x1x32x32xf32>
    %517 = vector.shape_cast %516 : vector<1x1x32x32xf32> to vector<32x32xf32>
    %cst_288 = arith.constant dense<0.000000e+00> : vector<32x32xf32>
    %518 = tpu.matmul %514, %517, %cst_288 {dimension_numbers = #tpu.dot_dimension_numbers<[1], [0], [0], [1], [0, 0, 1, 1], [], []>} : vector<32x32xf32>, vector<32x32xf32>, vector<32x32xf32> -> vector<32x32xf32>
    %c3_289 = arith.constant 3 : index
    %c1_290 = arith.constant 1 : index
    %c0_291 = arith.constant 0 : index
    %c0_292 = arith.constant 0 : index
    %519 = vector.load %arg29[%c3_289, %c1_290, %c0_291, %c0_292] : memref<6x3x32x32xf32, #tpu.memory_space<vmem>>, vector<1x1x32x32xf32>
    %520 = vector.shape_cast %519 : vector<1x1x32x32xf32> to vector<32x32xf32>
    %cst_293 = arith.constant dense<0.000000e+00> : vector<32x32xf32>
    %521 = tpu.matmul %512, %520, %cst_293 {dimension_numbers = #tpu.dot_dimension_numbers<[1], [0], [0], [1], [0, 0, 1, 1], [], []>} : vector<32x32xf32>, vector<32x32xf32>, vector<32x32xf32> -> vector<32x32xf32>
    %522 = arith.addf %518, %521 : vector<32x32xf32>
    %c3_294 = arith.constant 3 : index
    %c2_295 = arith.constant 2 : index
    %c0_296 = arith.constant 0 : index
    %c0_297 = arith.constant 0 : index
    %523 = vector.load %arg29[%c3_294, %c2_295, %c0_296, %c0_297] : memref<6x3x32x32xf32, #tpu.memory_space<vmem>>, vector<1x1x32x32xf32>
    %524 = vector.shape_cast %523 : vector<1x1x32x32xf32> to vector<32x32xf32>
    %cst_298 = arith.constant dense<0.000000e+00> : vector<32x32xf32>
    %525 = tpu.matmul %515, %524, %cst_298 {dimension_numbers = #tpu.dot_dimension_numbers<[1], [0], [0], [1], [0, 0, 1, 1], [], []>} : vector<32x32xf32>, vector<32x32xf32>, vector<32x32xf32> -> vector<32x32xf32>
    %526 = arith.addf %522, %525 : vector<32x32xf32>
    %c3_299 = arith.constant 3 : index
    %c0_300 = arith.constant 0 : index
    %c0_301 = arith.constant 0 : index
    %527 = vector.load %arg30[%c3_299, %c0_300, %c0_301] : memref<6x1x32xf32, #tpu.memory_space<vmem>>, vector<1x1x32xf32>
    %528 = vector.shape_cast %527 : vector<1x1x32xf32> to vector<1x32xf32>
    %529 = vector.broadcast %528 : vector<1x32xf32> to vector<32x32xf32>
    %530 = arith.addf %526, %529 : vector<32x32xf32>
    %cst_302 = arith.constant 0.000000e+00 : f32
    %531 = vector.broadcast %cst_302 : f32 to vector<32x32xf32>
    %532 = arith.maximumf %530, %531 : vector<32x32xf32>
    %533 = arith.addf %512, %532 : vector<32x32xf32>
    %534 = vector.broadcast %2 : vector<32x1xf32> to vector<32x32xf32>
    %535 = arith.mulf %533, %534 : vector<32x32xf32>
    %cst_303 = arith.constant dense<0.000000e+00> : vector<64x32xf32>
    %536 = tpu.matmul %443, %535, %cst_303 {dimension_numbers = #tpu.dot_dimension_numbers<[1], [0], [0], [1], [0, 0, 1, 1], [], []>} : vector<64x32xf32>, vector<32x32xf32>, vector<64x32xf32> -> vector<64x32xf32>
    %537 = vector.extract_strided_slice %536 {offsets = [0, 0], sizes = [32, 32], strides = [1, 1]} : vector<64x32xf32> to vector<32x32xf32>
    %538 = vector.extract_strided_slice %536 {offsets = [32, 0], sizes = [32, 32], strides = [1, 1]} : vector<64x32xf32> to vector<32x32xf32>
    %c4 = arith.constant 4 : index
    %c0_304 = arith.constant 0 : index
    %c0_305 = arith.constant 0 : index
    %c0_306 = arith.constant 0 : index
    %539 = vector.load %arg29[%c4, %c0_304, %c0_305, %c0_306] : memref<6x3x32x32xf32, #tpu.memory_space<vmem>>, vector<1x1x32x32xf32>
    %540 = vector.shape_cast %539 : vector<1x1x32x32xf32> to vector<32x32xf32>
    %cst_307 = arith.constant dense<0.000000e+00> : vector<32x32xf32>
    %541 = tpu.matmul %537, %540, %cst_307 {dimension_numbers = #tpu.dot_dimension_numbers<[1], [0], [0], [1], [0, 0, 1, 1], [], []>} : vector<32x32xf32>, vector<32x32xf32>, vector<32x32xf32> -> vector<32x32xf32>
    %c4_308 = arith.constant 4 : index
    %c1_309 = arith.constant 1 : index
    %c0_310 = arith.constant 0 : index
    %c0_311 = arith.constant 0 : index
    %542 = vector.load %arg29[%c4_308, %c1_309, %c0_310, %c0_311] : memref<6x3x32x32xf32, #tpu.memory_space<vmem>>, vector<1x1x32x32xf32>
    %543 = vector.shape_cast %542 : vector<1x1x32x32xf32> to vector<32x32xf32>
    %cst_312 = arith.constant dense<0.000000e+00> : vector<32x32xf32>
    %544 = tpu.matmul %535, %543, %cst_312 {dimension_numbers = #tpu.dot_dimension_numbers<[1], [0], [0], [1], [0, 0, 1, 1], [], []>} : vector<32x32xf32>, vector<32x32xf32>, vector<32x32xf32> -> vector<32x32xf32>
    %545 = arith.addf %541, %544 : vector<32x32xf32>
    %c4_313 = arith.constant 4 : index
    %c2_314 = arith.constant 2 : index
    %c0_315 = arith.constant 0 : index
    %c0_316 = arith.constant 0 : index
    %546 = vector.load %arg29[%c4_313, %c2_314, %c0_315, %c0_316] : memref<6x3x32x32xf32, #tpu.memory_space<vmem>>, vector<1x1x32x32xf32>
    %547 = vector.shape_cast %546 : vector<1x1x32x32xf32> to vector<32x32xf32>
    %cst_317 = arith.constant dense<0.000000e+00> : vector<32x32xf32>
    %548 = tpu.matmul %538, %547, %cst_317 {dimension_numbers = #tpu.dot_dimension_numbers<[1], [0], [0], [1], [0, 0, 1, 1], [], []>} : vector<32x32xf32>, vector<32x32xf32>, vector<32x32xf32> -> vector<32x32xf32>
    %549 = arith.addf %545, %548 : vector<32x32xf32>
    %c4_318 = arith.constant 4 : index
    %c0_319 = arith.constant 0 : index
    %c0_320 = arith.constant 0 : index
    %550 = vector.load %arg30[%c4_318, %c0_319, %c0_320] : memref<6x1x32xf32, #tpu.memory_space<vmem>>, vector<1x1x32xf32>
    %551 = vector.shape_cast %550 : vector<1x1x32xf32> to vector<1x32xf32>
    %552 = vector.broadcast %551 : vector<1x32xf32> to vector<32x32xf32>
    %553 = arith.addf %549, %552 : vector<32x32xf32>
    %cst_321 = arith.constant 0.000000e+00 : f32
    %554 = vector.broadcast %cst_321 : f32 to vector<32x32xf32>
    %555 = arith.maximumf %553, %554 : vector<32x32xf32>
    %556 = arith.addf %535, %555 : vector<32x32xf32>
    %557 = vector.broadcast %2 : vector<32x1xf32> to vector<32x32xf32>
    %558 = arith.mulf %556, %557 : vector<32x32xf32>
    %cst_322 = arith.constant dense<0.000000e+00> : vector<64x32xf32>
    %559 = tpu.matmul %443, %558, %cst_322 {dimension_numbers = #tpu.dot_dimension_numbers<[1], [0], [0], [1], [0, 0, 1, 1], [], []>} : vector<64x32xf32>, vector<32x32xf32>, vector<64x32xf32> -> vector<64x32xf32>
    %560 = vector.extract_strided_slice %559 {offsets = [0, 0], sizes = [32, 32], strides = [1, 1]} : vector<64x32xf32> to vector<32x32xf32>
    %561 = vector.extract_strided_slice %559 {offsets = [32, 0], sizes = [32, 32], strides = [1, 1]} : vector<64x32xf32> to vector<32x32xf32>
    %c5 = arith.constant 5 : index
    %c0_323 = arith.constant 0 : index
    %c0_324 = arith.constant 0 : index
    %c0_325 = arith.constant 0 : index
    %562 = vector.load %arg29[%c5, %c0_323, %c0_324, %c0_325] : memref<6x3x32x32xf32, #tpu.memory_space<vmem>>, vector<1x1x32x32xf32>
    %563 = vector.shape_cast %562 : vector<1x1x32x32xf32> to vector<32x32xf32>
    %cst_326 = arith.constant dense<0.000000e+00> : vector<32x32xf32>
    %564 = tpu.matmul %560, %563, %cst_326 {dimension_numbers = #tpu.dot_dimension_numbers<[1], [0], [0], [1], [0, 0, 1, 1], [], []>} : vector<32x32xf32>, vector<32x32xf32>, vector<32x32xf32> -> vector<32x32xf32>
    %c5_327 = arith.constant 5 : index
    %c1_328 = arith.constant 1 : index
    %c0_329 = arith.constant 0 : index
    %c0_330 = arith.constant 0 : index
    %565 = vector.load %arg29[%c5_327, %c1_328, %c0_329, %c0_330] : memref<6x3x32x32xf32, #tpu.memory_space<vmem>>, vector<1x1x32x32xf32>
    %566 = vector.shape_cast %565 : vector<1x1x32x32xf32> to vector<32x32xf32>
    %cst_331 = arith.constant dense<0.000000e+00> : vector<32x32xf32>
    %567 = tpu.matmul %558, %566, %cst_331 {dimension_numbers = #tpu.dot_dimension_numbers<[1], [0], [0], [1], [0, 0, 1, 1], [], []>} : vector<32x32xf32>, vector<32x32xf32>, vector<32x32xf32> -> vector<32x32xf32>
    %568 = arith.addf %564, %567 : vector<32x32xf32>
    %c5_332 = arith.constant 5 : index
    %c2_333 = arith.constant 2 : index
    %c0_334 = arith.constant 0 : index
    %c0_335 = arith.constant 0 : index
    %569 = vector.load %arg29[%c5_332, %c2_333, %c0_334, %c0_335] : memref<6x3x32x32xf32, #tpu.memory_space<vmem>>, vector<1x1x32x32xf32>
    %570 = vector.shape_cast %569 : vector<1x1x32x32xf32> to vector<32x32xf32>
    %cst_336 = arith.constant dense<0.000000e+00> : vector<32x32xf32>
    %571 = tpu.matmul %561, %570, %cst_336 {dimension_numbers = #tpu.dot_dimension_numbers<[1], [0], [0], [1], [0, 0, 1, 1], [], []>} : vector<32x32xf32>, vector<32x32xf32>, vector<32x32xf32> -> vector<32x32xf32>
    %572 = arith.addf %568, %571 : vector<32x32xf32>
    %c5_337 = arith.constant 5 : index
    %c0_338 = arith.constant 0 : index
    %c0_339 = arith.constant 0 : index
    %573 = vector.load %arg30[%c5_337, %c0_338, %c0_339] : memref<6x1x32xf32, #tpu.memory_space<vmem>>, vector<1x1x32xf32>
    %574 = vector.shape_cast %573 : vector<1x1x32xf32> to vector<1x32xf32>
    %575 = vector.broadcast %574 : vector<1x32xf32> to vector<32x32xf32>
    %576 = arith.addf %572, %575 : vector<32x32xf32>
    %cst_340 = arith.constant 0.000000e+00 : f32
    %577 = vector.broadcast %cst_340 : f32 to vector<32x32xf32>
    %578 = arith.maximumf %576, %577 : vector<32x32xf32>
    %579 = arith.addf %558, %578 : vector<32x32xf32>
    %580 = vector.broadcast %2 : vector<32x1xf32> to vector<32x32xf32>
    %581 = arith.mulf %579, %580 : vector<32x32xf32>
    %c0_341 = arith.constant 0 : index
    %c0_342 = arith.constant 0 : index
    %582 = vector.load %arg4[%c0_341, %c0_342] : memref<2x32xf32, #tpu.memory_space<vmem>>, vector<2x32xf32>
    %cst_343 = arith.constant dense<0.000000e+00> : vector<2x32xf32>
    %583 = tpu.matmul %582, %581, %cst_343 {dimension_numbers = #tpu.dot_dimension_numbers<[1], [0], [0], [1], [0, 0, 1, 1], [], []>} : vector<2x32xf32>, vector<32x32xf32>, vector<2x32xf32> -> vector<2x32xf32>
    %c0_344 = arith.constant 0 : index
    %c0_345 = arith.constant 0 : index
    %584 = vector.load %arg31[%c0_344, %c0_345] : memref<32x1xf32, #tpu.memory_space<vmem>>, vector<32x1xf32>
    %cst_346 = arith.constant dense<0.000000e+00> : vector<2x1xf32>
    %585 = tpu.matmul %583, %584, %cst_346 {dimension_numbers = #tpu.dot_dimension_numbers<[1], [0], [0], [1], [0, 0, 1, 1], [], []>} : vector<2x32xf32>, vector<32x1xf32>, vector<2x1xf32> -> vector<2x1xf32>
    %c0_347 = arith.constant 0 : index
    %c0_348 = arith.constant 0 : index
    %586 = vector.load %arg32[%c0_347, %c0_348] : memref<1x1xf32, #tpu.memory_space<vmem>>, vector<1x1xf32>
    %587 = vector.broadcast %586 : vector<1x1xf32> to vector<2x1xf32>
    %588 = arith.addf %585, %587 : vector<2x1xf32>
    %c0_349 = arith.constant 0 : index
    %c0_350 = arith.constant 0 : index
    %589 = vector.load %arg35[%c0_349, %c0_350] : memref<2x1xf32, #tpu.memory_space<vmem>>, vector<2x1xf32>
    tpu.vector_store %arg35[%c0_349, %c0_350], %588 {strides = array<i32>} : memref<2x1xf32, #tpu.memory_space<vmem>>, vector<2x1xf32>,
    %c0_351 = arith.constant 0 : index
    %c0_352 = arith.constant 0 : index
    %590 = vector.load %arg34[%c0_351, %c0_352] : memref<1x1xf32, #tpu.memory_space<vmem>>, vector<1x1xf32>
    %591 = vector.broadcast %590 : vector<1x1xf32> to vector<2x1xf32>
    %592 = arith.mulf %588, %591 : vector<2x1xf32>
    %c0_353 = arith.constant 0 : index
    %c0_354 = arith.constant 0 : index
    %593 = vector.load %arg33[%c0_353, %c0_354] : memref<1x1xf32, #tpu.memory_space<vmem>>, vector<1x1xf32>
    %594 = vector.broadcast %593 : vector<1x1xf32> to vector<2x1xf32>
    %595 = arith.addf %592, %594 : vector<2x1xf32>
    %c0_355 = arith.constant 0 : index
    %c0_356 = arith.constant 0 : index
    %596 = vector.load %arg36[%c0_355, %c0_356] : memref<2x1xf32, #tpu.memory_space<vmem>>, vector<2x1xf32>
    tpu.vector_store %arg36[%c0_355, %c0_356], %595 {strides = array<i32>} : memref<2x1xf32, #tpu.memory_space<vmem>>, vector<2x1xf32>,
    return
  }
  func.func @transform_0(%arg0: i32) -> (i32, i32) {
    %c0_i32 = arith.constant 0 : i32
    %c0_i32_0 = arith.constant 0 : i32
    %c0_i32_1 = arith.constant 0 : i32
    return %c0_i32, %c0_i32_0 : i32, i32
  }
  func.func @transform_1(%arg0: i32) -> (i32, i32) {
    %c0_i32 = arith.constant 0 : i32
    %c0_i32_0 = arith.constant 0 : i32
    %c0_i32_1 = arith.constant 0 : i32
    return %c0_i32, %c0_i32_0 : i32, i32
  }
  func.func @transform_2(%arg0: i32) -> (i32, i32) {
    %c0_i32 = arith.constant 0 : i32
    %c0_i32_0 = arith.constant 0 : i32
    %c0_i32_1 = arith.constant 0 : i32
    return %c0_i32, %c0_i32_0 : i32, i32
  }
  func.func @transform_3(%arg0: i32) -> (i32, i32) {
    %c0_i32 = arith.constant 0 : i32
    %c0_i32_0 = arith.constant 0 : i32
    %c0_i32_1 = arith.constant 0 : i32
    return %c0_i32, %c0_i32_0 : i32, i32
  }
  func.func @transform_4(%arg0: i32) -> (i32, i32) {
    %c0_i32 = arith.constant 0 : i32
    %c0_i32_0 = arith.constant 0 : i32
    %c0_i32_1 = arith.constant 0 : i32
    return %c0_i32, %c0_i32_0 : i32, i32
  }
  func.func @transform_5(%arg0: i32) -> (i32, i32) {
    %c0_i32 = arith.constant 0 : i32
    %c0_i32_0 = arith.constant 0 : i32
    %c0_i32_1 = arith.constant 0 : i32
    return %c0_i32, %c0_i32_0 : i32, i32
  }
  func.func @transform_6(%arg0: i32) -> (i32, i32) {
    %c0_i32 = arith.constant 0 : i32
    %c0_i32_0 = arith.constant 0 : i32
    %c0_i32_1 = arith.constant 0 : i32
    return %c0_i32, %c0_i32_0 : i32, i32
  }
  func.func @transform_7(%arg0: i32) -> (i32, i32, i32) {
    %c0_i32 = arith.constant 0 : i32
    %c0_i32_0 = arith.constant 0 : i32
    %c0_i32_1 = arith.constant 0 : i32
    %c0_i32_2 = arith.constant 0 : i32
    return %c0_i32, %c0_i32_0, %c0_i32_1 : i32, i32, i32
  }
  func.func @transform_8(%arg0: i32) -> (i32, i32) {
    %c0_i32 = arith.constant 0 : i32
    %c0_i32_0 = arith.constant 0 : i32
    %c0_i32_1 = arith.constant 0 : i32
    return %c0_i32, %c0_i32_0 : i32, i32
  }
  func.func @transform_9(%arg0: i32) -> (i32, i32, i32) {
    %c0_i32 = arith.constant 0 : i32
    %c0_i32_0 = arith.constant 0 : i32
    %c0_i32_1 = arith.constant 0 : i32
    %c0_i32_2 = arith.constant 0 : i32
    return %c0_i32, %c0_i32_0, %c0_i32_1 : i32, i32, i32
  }
  func.func @transform_10(%arg0: i32) -> (i32, i32, i32) {
    %c0_i32 = arith.constant 0 : i32
    %c0_i32_0 = arith.constant 0 : i32
    %c0_i32_1 = arith.constant 0 : i32
    %c0_i32_2 = arith.constant 0 : i32
    return %c0_i32, %c0_i32_0, %c0_i32_1 : i32, i32, i32
  }
  func.func @transform_11(%arg0: i32) -> (i32, i32, i32) {
    %c0_i32 = arith.constant 0 : i32
    %c0_i32_0 = arith.constant 0 : i32
    %c0_i32_1 = arith.constant 0 : i32
    %c0_i32_2 = arith.constant 0 : i32
    return %c0_i32, %c0_i32_0, %c0_i32_1 : i32, i32, i32
  }
  func.func @transform_12(%arg0: i32) -> (i32, i32, i32) {
    %c0_i32 = arith.constant 0 : i32
    %c0_i32_0 = arith.constant 0 : i32
    %c0_i32_1 = arith.constant 0 : i32
    %c0_i32_2 = arith.constant 0 : i32
    return %c0_i32, %c0_i32_0, %c0_i32_1 : i32, i32, i32
  }
  func.func @transform_13(%arg0: i32) -> (i32, i32, i32) {
    %c0_i32 = arith.constant 0 : i32
    %c0_i32_0 = arith.constant 0 : i32
    %c0_i32_1 = arith.constant 0 : i32
    %c0_i32_2 = arith.constant 0 : i32
    return %c0_i32, %c0_i32_0, %c0_i32_1 : i32, i32, i32
  }
  func.func @transform_14(%arg0: i32) -> (i32, i32, i32) {
    %c0_i32 = arith.constant 0 : i32
    %c0_i32_0 = arith.constant 0 : i32
    %c0_i32_1 = arith.constant 0 : i32
    %c0_i32_2 = arith.constant 0 : i32
    return %c0_i32, %c0_i32_0, %c0_i32_1 : i32, i32, i32
  }
  func.func @transform_15(%arg0: i32) -> (i32, i32, i32) {
    %c0_i32 = arith.constant 0 : i32
    %c0_i32_0 = arith.constant 0 : i32
    %c0_i32_1 = arith.constant 0 : i32
    %c0_i32_2 = arith.constant 0 : i32
    return %c0_i32, %c0_i32_0, %c0_i32_1 : i32, i32, i32
  }
  func.func @transform_16(%arg0: i32) -> (i32, i32, i32) {
    %c0_i32 = arith.constant 0 : i32
    %c0_i32_0 = arith.constant 0 : i32
    %c0_i32_1 = arith.constant 0 : i32
    %c0_i32_2 = arith.constant 0 : i32
    return %c0_i32, %c0_i32_0, %c0_i32_1 : i32, i32, i32
  }
  func.func @transform_17(%arg0: i32) -> (i32, i32, i32) {
    %c0_i32 = arith.constant 0 : i32
    %c0_i32_0 = arith.constant 0 : i32
    %c0_i32_1 = arith.constant 0 : i32
    %c0_i32_2 = arith.constant 0 : i32
    return %c0_i32, %c0_i32_0, %c0_i32_1 : i32, i32, i32
  }
  func.func @transform_18(%arg0: i32) -> (i32, i32, i32) {
    %c0_i32 = arith.constant 0 : i32
    %c0_i32_0 = arith.constant 0 : i32
    %c0_i32_1 = arith.constant 0 : i32
    %c0_i32_2 = arith.constant 0 : i32
    return %c0_i32, %c0_i32_0, %c0_i32_1 : i32, i32, i32
  }
  func.func @transform_19(%arg0: i32) -> (i32, i32, i32) {
    %c0_i32 = arith.constant 0 : i32
    %c0_i32_0 = arith.constant 0 : i32
    %c0_i32_1 = arith.constant 0 : i32
    %c0_i32_2 = arith.constant 0 : i32
    return %c0_i32, %c0_i32_0, %c0_i32_1 : i32, i32, i32
  }
  func.func @transform_20(%arg0: i32) -> (i32, i32, i32) {
    %c0_i32 = arith.constant 0 : i32
    %c0_i32_0 = arith.constant 0 : i32
    %c0_i32_1 = arith.constant 0 : i32
    %c0_i32_2 = arith.constant 0 : i32
    return %c0_i32, %c0_i32_0, %c0_i32_1 : i32, i32, i32
  }
  func.func @transform_21(%arg0: i32) -> (i32, i32, i32) {
    %c0_i32 = arith.constant 0 : i32
    %c0_i32_0 = arith.constant 0 : i32
    %c0_i32_1 = arith.constant 0 : i32
    %c0_i32_2 = arith.constant 0 : i32
    return %c0_i32, %c0_i32_0, %c0_i32_1 : i32, i32, i32
  }
  func.func @transform_22(%arg0: i32) -> (i32, i32, i32) {
    %c0_i32 = arith.constant 0 : i32
    %c0_i32_0 = arith.constant 0 : i32
    %c0_i32_1 = arith.constant 0 : i32
    %c0_i32_2 = arith.constant 0 : i32
    return %c0_i32, %c0_i32_0, %c0_i32_1 : i32, i32, i32
  }
  func.func @transform_23(%arg0: i32) -> (i32, i32, i32) {
    %c0_i32 = arith.constant 0 : i32
    %c0_i32_0 = arith.constant 0 : i32
    %c0_i32_1 = arith.constant 0 : i32
    %c0_i32_2 = arith.constant 0 : i32
    return %c0_i32, %c0_i32_0, %c0_i32_1 : i32, i32, i32
  }
  func.func @transform_24(%arg0: i32) -> (i32, i32) {
    %c0_i32 = arith.constant 0 : i32
    %c0_i32_0 = arith.constant 0 : i32
    %c0_i32_1 = arith.constant 0 : i32
    return %c0_i32, %c0_i32_0 : i32, i32
  }
  func.func @transform_25(%arg0: i32) -> (i32, i32) {
    %c0_i32 = arith.constant 0 : i32
    %c0_i32_0 = arith.constant 0 : i32
    %c0_i32_1 = arith.constant 0 : i32
    return %c0_i32, %c0_i32_0 : i32, i32
  }
  func.func @transform_26(%arg0: i32) -> (i32, i32) {
    %c0_i32 = arith.constant 0 : i32
    %c0_i32_0 = arith.constant 0 : i32
    %c0_i32_1 = arith.constant 0 : i32
    return %c0_i32, %c0_i32_0 : i32, i32
  }
  func.func @transform_27(%arg0: i32) -> (i32, i32) {
    %c0_i32 = arith.constant 0 : i32
    %c0_i32_0 = arith.constant 0 : i32
    %c0_i32_1 = arith.constant 0 : i32
    return %c0_i32, %c0_i32_0 : i32, i32
  }
  func.func @transform_28(%arg0: i32) -> (i32, i32, i32, i32) {
    %c0_i32 = arith.constant 0 : i32
    %c0_i32_0 = arith.constant 0 : i32
    %c0_i32_1 = arith.constant 0 : i32
    %c0_i32_2 = arith.constant 0 : i32
    %c0_i32_3 = arith.constant 0 : i32
    return %c0_i32, %c0_i32_0, %c0_i32_1, %c0_i32_2 : i32, i32, i32, i32
  }
  func.func @transform_29(%arg0: i32) -> (i32, i32, i32) {
    %c0_i32 = arith.constant 0 : i32
    %c0_i32_0 = arith.constant 0 : i32
    %c0_i32_1 = arith.constant 0 : i32
    %c0_i32_2 = arith.constant 0 : i32
    return %c0_i32, %c0_i32_0, %c0_i32_1 : i32, i32, i32
  }
  func.func @transform_30(%arg0: i32) -> (i32, i32) {
    %c0_i32 = arith.constant 0 : i32
    %c0_i32_0 = arith.constant 0 : i32
    %c0_i32_1 = arith.constant 0 : i32
    return %c0_i32, %c0_i32_0 : i32, i32
  }
  func.func @transform_31(%arg0: i32) -> (i32, i32) {
    %c0_i32 = arith.constant 0 : i32
    %c0_i32_0 = arith.constant 0 : i32
    %c0_i32_1 = arith.constant 0 : i32
    return %c0_i32, %c0_i32_0 : i32, i32
  }
  func.func @transform_32(%arg0: i32) -> (i32, i32) {
    %c0_i32 = arith.constant 0 : i32
    %c0_i32_0 = arith.constant 0 : i32
    %c0_i32_1 = arith.constant 0 : i32
    return %c0_i32, %c0_i32_0 : i32, i32
  }
  func.func @transform_33(%arg0: i32) -> (i32, i32) {
    %c0_i32 = arith.constant 0 : i32
    %c0_i32_0 = arith.constant 0 : i32
    %c0_i32_1 = arith.constant 0 : i32
    return %c0_i32, %c0_i32_0 : i32, i32
  }
  func.func @transform_34(%arg0: i32) -> (i32, i32) {
    %c0_i32 = arith.constant 0 : i32
    %c0_i32_0 = arith.constant 0 : i32
    %c0_i32_1 = arith.constant 0 : i32
    return %c0_i32, %c0_i32_0 : i32, i32
  }
  func.func @transform_35(%arg0: i32) -> (i32, i32) {
    %c0_i32 = arith.constant 0 : i32
    %c0_i32_0 = arith.constant 0 : i32
    %c0_i32_1 = arith.constant 0 : i32
    return %c0_i32, %c0_i32_0 : i32, i32
  }
}

</mosaic_0001>

<llo_original>
// kernel: mul.40
$region0: #{mul.40}
  %s0 = inlined_call_operand.vmem [shape: f32[2,16], index: 0, kind: input, shape index: {}]
  %s1 = inlined_call_operand.vmem [shape: f32[32], index: 1, kind: output, shape index: {}]
  $region1: #{mul.40} parent=0
    #allocation0 [shape = 'u8[4096]{0}', space=vmem, size = 0x1000, scoped, tag = 'scoped mem for output reshape']
    #allocation1 [shape = 'u8[4096]{0}', space=vmem, size = 0x1000, scoped, tag = 'scoped mem for input reshape']
    %s3 = ssub.s32 4, 1
    %v4 = vld [vmem:[%s0] sm:%s3]
    %5 = vst [vmem:[#allocation1] sm:%s3] %v4
    %v6 = vld [vmem:[#allocation1] sm:$0x1]
    %vm7 = vcmask 130048
    %8 = vst.msk [vmem:[#allocation0] sm:$0x1] %vm7, %v6
    %s9 = scalar_lea.vmem [#allocation1], 1
    %v10 = vld [vmem:[%s9] sm:$0x1]
    %11 = vrot.lane.b32.xlu0 %v10, 16
    %v12 = vpop.permute.xlu0 %11
    %vm13 = vcmask 261248
    %14 = vst.msk [vmem:[#allocation0] sm:$0x1] %vm13, %v12
    %s16 = ssub.s32 2, 1
    %v17 = vld [vmem:[#allocation0] sm:%s16]
    %s19 = ssub.s32 2, 1
    %20 = vst [vmem:[%s1] sm:%s19] %v17

// kernel: forward.1
$region0: #{forward.1}
  #allocation0 [shape = 'u32[]', space=smem, size = 0x4, offset = 0x4, fixed_abs, tag = 'smem constant byte address 0x4 - core index']
  #allocation1 [shape = 'u32[72,128]{1,0:T(1,128)}', space=vmem, size = 0x9000, scoped, tag = 'internal scratch']
  #allocation2 [shape = 'f32[1,1]{1,0:T(1,128)S(1)}', space=vmem, size = 0x200, scoped, tag = 'scoped memory for forward.1']
  #allocation3 [shape = 'f32[1,1]{1,0:T(1,128)S(1)}', space=vmem, size = 0x200, scoped, tag = 'scoped memory for forward.1']
  #allocation4 [shape = 'f32[1,1]{1,0:T(1,128)S(1)}', space=vmem, size = 0x200, scoped, tag = 'scoped memory for forward.1']
  %s0 = inlined_call_operand.smem [shape: u32[36], index: -1, kind: input, shape index: {}]
  %s1 = sld [smem:[%s0]]
  %s2 = scalar_lea.smem %s0, 1
  %s3 = sld [smem:[%s2]]
  %s4 = scalar_lea.smem %s0, 2
  %s5 = sld [smem:[%s4]]
  %s6 = scalar_lea.smem %s0, 3
  %s7 = sld [smem:[%s6]]
  %s8 = scalar_lea.smem %s0, 4
  %s9 = sld [smem:[%s8]]
  %s10 = scalar_lea.smem %s0, 5
  %s11 = sld [smem:[%s10]]
  %s12 = scalar_lea.smem %s0, 6
  %s13 = sld [smem:[%s12]]
  %s14 = scalar_lea.smem %s0, 7
  %s15 = sld [smem:[%s14]]
  %s16 = scalar_lea.smem %s0, 8
  %s17 = sld [smem:[%s16]]
  %s18 = scalar_lea.smem %s0, 9
  %s19 = sld [smem:[%s18]]
  %s20 = scalar_lea.smem %s0, 10
  %s21 = sld [smem:[%s20]]
  %s22 = scalar_lea.smem %s0, 11
  %s23 = sld [smem:[%s22]]
  %s24 = scalar_lea.smem %s0, 12
  %s25 = sld [smem:[%s24]]
  %s26 = scalar_lea.smem %s0, 13
  %s27 = sld [smem:[%s26]]
  %s28 = scalar_lea.smem %s0, 14
  %s29 = sld [smem:[%s28]]
  %s30 = scalar_lea.smem %s0, 15
  %s31 = sld [smem:[%s30]]
  %s32 = scalar_lea.smem %s0, 16
  %s33 = sld [smem:[%s32]]
  %s34 = scalar_lea.smem %s0, 17
  %s35 = sld [smem:[%s34]]
  %s36 = scalar_lea.smem %s0, 18
  %s37 = sld [smem:[%s36]]
  %s38 = scalar_lea.smem %s0, 19
  %s39 = sld [smem:[%s38]]
  %s40 = scalar_lea.smem %s0, 20
  %s41 = sld [smem:[%s40]]
  %s42 = scalar_lea.smem %s0, 21
  %s43 = sld [smem:[%s42]]
  %s44 = scalar_lea.smem %s0, 22
  %s45 = sld [smem:[%s44]]
  %s46 = scalar_lea.smem %s0, 23
  %s47 = sld [smem:[%s46]]
  %s48 = scalar_lea.smem %s0, 24
  %s49 = sld [smem:[%s48]]
  %s50 = scalar_lea.smem %s0, 25
  %s51 = sld [smem:[%s50]]
  %s52 = scalar_lea.smem %s0, 26
  %s53 = sld [smem:[%s52]]
  %s54 = scalar_lea.smem %s0, 27
  %s55 = sld [smem:[%s54]]
  %s56 = scalar_lea.smem %s0, 28
  %s57 = sld [smem:[%s56]]
  %s58 = scalar_lea.smem %s0, 29
  %s59 = sld [smem:[%s58]]
  %s60 = scalar_lea.smem %s0, 30
  %s61 = sld [smem:[%s60]]
  %s62 = scalar_lea.smem %s0, 31
  %s63 = sld [smem:[%s62]]
  %s64 = scalar_lea.smem %s0, 32
  %s65 = sld [smem:[%s64]]
  %s66 = scalar_lea.smem %s0, 33
  %s67 = sld [smem:[%s66]]
  %s68 = scalar_lea.smem %s0, 34
  %s69 = sld [smem:[%s68]]
  %s70 = scalar_lea.smem %s0, 35
  %s71 = sld [smem:[%s70]]
  %72 = xla_tuple %s69, %s71
  %s73 = sld [smem:[#allocation0]]
  $region158: #{forward.1} parent=0
    _
  %s75 = ssub.s32 1, %s73
  %s76 = scalar_select 0, %s75, %s73
  %v77 = vstv %s63
  %78 = vst [vmem:[#allocation2] sm:$0x1] %v77
  %v79 = vstv %s65
  %80 = vst [vmem:[#allocation3] sm:$0x1] %v79
  %v81 = vstv %s67
  %82 = vst [vmem:[#allocation4] sm:$0x1] %v81
  $region1: #{forward.1} parent=0
    #allocation5 [shape = 'u8[294912]{0}', space=vmem, size = 0x48000, scoped, tag = 'input window, operand 28, single buffered']
    #allocation6 [shape = 's32[1]{0}', space=sflag, size = 0x4, scoped, tag = 'scoped memory for forward.1']
    %83 = vsyncpa [#allocation6], 0
    // Predicated region
    $region2: #{forward.1} parent=1 // pred_check
      _
    $region3: #{forward.1} parent=1 // pred_check_branch
      %85 = sbr.rel (0) target = $region5
    $region4: #{forward.1} parent=1 // pred_region
      _
    $region5: #{forward.1} parent=1 // pred_fallthru
      _
    // Predicated region
    $region6: #{forward.1} parent=1 // pred_check
      _
    $region7: #{forward.1} parent=1 // pred_check_branch
      %87 = sbr.rel (0) target = $region9
    $region8: #{forward.1} parent=1 // pred_region
      _
    $region9: #{forward.1} parent=1 // pred_fallthru
      _
    // Predicated region
    $region10: #{forward.1} parent=1 // pred_check
      _
    $region11: #{forward.1} parent=1 // pred_check_branch
      %89 = sbr.rel (0) target = $region13
    $region12: #{forward.1} parent=1 // pred_region
      _
    $region13: #{forward.1} parent=1 // pred_fallthru
      _
    // Predicated region
    $region14: #{forward.1} parent=1 // pred_check
      _
    $region15: #{forward.1} parent=1 // pred_check_branch
      %91 = sbr.rel (0) target = $region17
    $region16: #{forward.1} parent=1 // pred_region
      _
    $region17: #{forward.1} parent=1 // pred_fallthru
      _
    // Predicated region
    $region18: #{forward.1} parent=1 // pred_check
      _
    $region19: #{forward.1} parent=1 // pred_check_branch
      %93 = sbr.rel (0) target = $region21
    $region20: #{forward.1} parent=1 // pred_region
      _
    $region21: #{forward.1} parent=1 // pred_fallthru
      _
    // Predicated region
    $region22: #{forward.1} parent=1 // pred_check
      _
    $region23: #{forward.1} parent=1 // pred_check_branch
      %95 = sbr.rel (0) target = $region25
    $region24: #{forward.1} parent=1 // pred_region
      _
    $region25: #{forward.1} parent=1 // pred_fallthru
      _
    // Predicated region
    $region26: #{forward.1} parent=1 // pred_check
      _
    $region27: #{forward.1} parent=1 // pred_check_branch
      %97 = sbr.rel (0) target = $region29
    $region28: #{forward.1} parent=1 // pred_region
      _
    $region29: #{forward.1} parent=1 // pred_fallthru
      _
    // Predicated region
    $region30: #{forward.1} parent=1 // pred_check
      _
    $region31: #{forward.1} parent=1 // pred_check_branch
      %99 = sbr.rel (0) target = $region33
    $region32: #{forward.1} parent=1 // pred_region
      _
    $region33: #{forward.1} parent=1 // pred_fallthru
      _
    // Predicated region
    $region34: #{forward.1} parent=1 // pred_check
      _
    $region35: #{forward.1} parent=1 // pred_check_branch
      %101 = sbr.rel (0) target = $region37
    $region36: #{forward.1} parent=1 // pred_region
      _
    $region37: #{forward.1} parent=1 // pred_fallthru
      _
    // Predicated region
    $region38: #{forward.1} parent=1 // pred_check
      _
    $region39: #{forward.1} parent=1 // pred_check_branch
      %103 = sbr.rel (0) target = $region41
    $region40: #{forward.1} parent=1 // pred_region
      _
    $region41: #{forward.1} parent=1 // pred_fallthru
      _
    // Predicated region
    $region42: #{forward.1} parent=1 // pred_check
      _
    $region43: #{forward.1} parent=1 // pred_check_branch
      %105 = sbr.rel (0) target = $region45
    $region44: #{forward.1} parent=1 // pred_region
      _
    $region45: #{forward.1} parent=1 // pred_fallthru
      _
    // Predicated region
    $region46: #{forward.1} parent=1 // pred_check
      _
    $region47: #{forward.1} parent=1 // pred_check_branch
      %107 = sbr.rel (0) target = $region49
    $region48: #{forward.1} parent=1 // pred_region
      _
    $region49: #{forward.1} parent=1 // pred_fallthru
      _
    // Predicated region
    $region50: #{forward.1} parent=1 // pred_check
      _
    $region51: #{forward.1} parent=1 // pred_check_branch
      %109 = sbr.rel (0) target = $region53
    $region52: #{forward.1} parent=1 // pred_region
      _
    $region53: #{forward.1} parent=1 // pred_fallthru
      _
    // Predicated region
    $region54: #{forward.1} parent=1 // pred_check
      _
    $region55: #{forward.1} parent=1 // pred_check_branch
      %111 = sbr.rel (0) target = $region57
    $region56: #{forward.1} parent=1 // pred_region
      _
    $region57: #{forward.1} parent=1 // pred_fallthru
      _
    // Predicated region
    $region58: #{forward.1} parent=1 // pred_check
      _
    $region59: #{forward.1} parent=1 // pred_check_branch
      %113 = sbr.rel (0) target = $region61
    $region60: #{forward.1} parent=1 // pred_region
      _
    $region61: #{forward.1} parent=1 // pred_fallthru
      _
    // Predicated region
    $region62: #{forward.1} parent=1 // pred_check
      _
    $region63: #{forward.1} parent=1 // pred_check_branch
      %115 = sbr.rel (0) target = $region65
    $region64: #{forward.1} parent=1 // pred_region
      _
    $region65: #{forward.1} parent=1 // pred_fallthru
      _
    // Predicated region
    $region66: #{forward.1} parent=1 // pred_check
      _
    $region67: #{forward.1} parent=1 // pred_check_branch
      %117 = sbr.rel (0) target = $region69
    $region68: #{forward.1} parent=1 // pred_region
      _
    $region69: #{forward.1} parent=1 // pred_fallthru
      _
    // Predicated region
    $region70: #{forward.1} parent=1 // pred_check
      _
    $region71: #{forward.1} parent=1 // pred_check_branch
      %119 = sbr.rel (0) target = $region73
    $region72: #{forward.1} parent=1 // pred_region
      _
    $region73: #{forward.1} parent=1 // pred_fallthru
      _
    // Predicated region
    $region74: #{forward.1} parent=1 // pred_check
      _
    $region75: #{forward.1} parent=1 // pred_check_branch
      %121 = sbr.rel (0) target = $region77
    $region76: #{forward.1} parent=1 // pred_region
      _
    $region77: #{forward.1} parent=1 // pred_fallthru
      _
    // Predicated region
    $region78: #{forward.1} parent=1 // pred_check
      _
    $region79: #{forward.1} parent=1 // pred_check_branch
      %123 = sbr.rel (0) target = $region81
    $region80: #{forward.1} parent=1 // pred_region
      _
    $region81: #{forward.1} parent=1 // pred_fallthru
      _
    // Predicated region
    $region82: #{forward.1} parent=1 // pred_check
      _
    $region83: #{forward.1} parent=1 // pred_check_branch
      %125 = sbr.rel (0) target = $region85
    $region84: #{forward.1} parent=1 // pred_region
      _
    $region85: #{forward.1} parent=1 // pred_fallthru
      _
    // Predicated region
    $region86: #{forward.1} parent=1 // pred_check
      _
    $region87: #{forward.1} parent=1 // pred_check_branch
      %127 = sbr.rel (0) target = $region89
    $region88: #{forward.1} parent=1 // pred_region
      _
    $region89: #{forward.1} parent=1 // pred_fallthru
      _
    // Predicated region
    $region90: #{forward.1} parent=1 // pred_check
      _
    $region91: #{forward.1} parent=1 // pred_check_branch
      %129 = sbr.rel (0) target = $region93
    $region92: #{forward.1} parent=1 // pred_region
      _
    $region93: #{forward.1} parent=1 // pred_fallthru
      _
    // Predicated region
    $region94: #{forward.1} parent=1 // pred_check
      _
    $region95: #{forward.1} parent=1 // pred_check_branch
      %131 = sbr.rel (0) target = $region97
    $region96: #{forward.1} parent=1 // pred_region
      _
    $region97: #{forward.1} parent=1 // pred_fallthru
      _
    // Predicated region
    $region98: #{forward.1} parent=1 // pred_check
      _
    $region99: #{forward.1} parent=1 // pred_check_branch
      %133 = sbr.rel (0) target = $region101
    $region100: #{forward.1} parent=1 // pred_region
      _
    $region101: #{forward.1} parent=1 // pred_fallthru
      _
    // Predicated region
    $region102: #{forward.1} parent=1 // pred_check
      _
    $region103: #{forward.1} parent=1 // pred_check_branch
      %135 = sbr.rel (0) target = $region105
    $region104: #{forward.1} parent=1 // pred_region
      _
    $region105: #{forward.1} parent=1 // pred_fallthru
      _
    // Predicated region
    $region106: #{forward.1} parent=1 // pred_check
      _
    $region107: #{forward.1} parent=1 // pred_check_branch
      %137 = sbr.rel (0) target = $region109
    $region108: #{forward.1} parent=1 // pred_region
      _
    $region109: #{forward.1} parent=1 // pred_fallthru
      _
    // Predicated region
    $region110: #{forward.1} parent=1 // pred_check
      _
    $region111: #{forward.1} parent=1 // pred_check_branch
      %139 = sbr.rel (0) target = $region113
    $region112: #{forward.1} parent=1 // pred_region
      _
    $region113: #{forward.1} parent=1 // pred_fallthru
      _
    // Predicated region
    $region114: #{forward.1} parent=1 // pred_check
      _
    $region115: #{forward.1} parent=1 // pred_check_branch
      %141 = sbr.rel (0) target = $region117
    $region116: #{forward.1} parent=1 // pred_region
      %143 = vsyncadd [#allocation6], 0
      %s144 = sshll.u32 %s57, 4
      %s145 = int_to_ptr.hbm [resolvable:$true] %s144
      %s146 = sshll.u32 [#allocation5], 4
      %s147 = int_to_ptr.vmem [resolvable:$true] %s146
      %152 = dma.hbm_to_vmem [thread:$0]  %s145, 9216, %s147, [#allocation6], 128, 128, 8
    $region117: #{forward.1} parent=1 // pred_fallthru
      _
    // Predicated region
    $region118: #{forward.1} parent=1 // pred_check
      _
    $region119: #{forward.1} parent=1 // pred_check_branch
      %154 = sbr.rel (0) target = $region121
    $region120: #{forward.1} parent=1 // pred_region
      _
    $region121: #{forward.1} parent=1 // pred_fallthru
      _
    // Predicated region
    $region122: #{forward.1} parent=1 // pred_check
      _
    $region123: #{forward.1} parent=1 // pred_check_branch
      %156 = sbr.rel (0) target = $region125
    $region124: #{forward.1} parent=1 // pred_region
      _
    $region125: #{forward.1} parent=1 // pred_fallthru
      _
    // Predicated region
    $region126: #{forward.1} parent=1 // pred_check
      _
    $region127: #{forward.1} parent=1 // pred_check_branch
      %158 = sbr.rel (0) target = $region129
    $region128: #{forward.1} parent=1 // pred_region
      _
    $region129: #{forward.1} parent=1 // pred_fallthru
      _
    // Predicated region
    $region130: #{forward.1} parent=1 // pred_check
      _
    $region131: #{forward.1} parent=1 // pred_check_branch
      %160 = sbr.rel (0) target = $region133
    $region132: #{forward.1} parent=1 // pred_region
      _
    $region133: #{forward.1} parent=1 // pred_fallthru
      _
    // Predicated region
    $region134: #{forward.1} parent=1 // pred_check
      _
    $region135: #{forward.1} parent=1 // pred_check_branch
      %162 = sbr.rel (0) target = $region137
    $region136: #{forward.1} parent=1 // pred_region
      _
    $region137: #{forward.1} parent=1 // pred_fallthru
      _
    // Predicated region
    $region138: #{forward.1} parent=1 // pred_check
      _
    $region139: #{forward.1} parent=1 // pred_check_branch
      %164 = sbr.rel (0) target = $region141
    $region140: #{forward.1} parent=1 // pred_region
      %166 = dma.done [#allocation6], 9216
    $region141: #{forward.1} parent=1 // pred_fallthru
      _
    %v167 = vld [vmem:[%s1] sm:$0xff]
    %v168 = vld [vmem:[%s1 + $0x8] sm:$0xff]
    %v169 = vld [vmem:[%s1 + $0x10] sm:$0xff]
    %v170 = vld [vmem:[%s1 + $0x18] sm:$0xff]
    %v171 = vld [vmem:[%s3] sm:$0xff]
    %v172 = vld [vmem:[%s3 + $0x8] sm:$0xff]
    %v173 = vld [vmem:[%s3 + $0x10] sm:$0xff]
    %v174 = vld [vmem:[%s3 + $0x18] sm:$0xff]
    %v175 = vld [vmem:[%s5] sm:$0xff]
    %v176 = vld [vmem:[%s5 + $0x8] sm:$0xff]
    %v177 = vld [vmem:[%s5 + $0x10] sm:$0xff]
    %v178 = vld [vmem:[%s5 + $0x18] sm:$0xff]
    %v179 = vld [vmem:[%s9] sm:$0xff]
    %v180 = vld [vmem:[%s9 + $0x8] sm:$0xff]
    %v181 = vld [vmem:[%s9 + $0x10] sm:$0xff]
    %v182 = vld [vmem:[%s9 + $0x18] sm:$0xff]
    %v183 = vld [vmem:[%s11] sm:$0xff]
    %v184 = vld [vmem:[%s11 + $0x8] sm:$0xff]
    %v185 = vld [vmem:[%s11 + $0x10] sm:$0xff]
    %v186 = vld [vmem:[%s11 + $0x18] sm:$0xff]
    %v187 = vld [vmem:[%s13] sm:$0xff]
    %v188 = vld [vmem:[%s13 + $0x8] sm:$0xff]
    %v189 = vld [vmem:[%s13 + $0x10] sm:$0xff]
    %v190 = vld [vmem:[%s13 + $0x18] sm:$0xff]
    %v191 = vld [vmem:[%s19] sm:$0x1]
    %v192 = vld [vmem:[%s21] sm:$0x1]
    %vm193 = vcmask 261120
    %v194 = vsel %vm193, %v167, 0.0
    %195 = vadd.xlane.f32.xlu0 %v194
    %v196 = vpop.xlane.xlu0 %195
    %v197 = vsel %vm193, %v168, 0.0
    %198 = vadd.xlane.f32.xlu0 %v197
    %v199 = vpop.xlane.xlu0 %198
    %v200 = vsel %vm193, %v169, 0.0
    %201 = vadd.xlane.f32.xlu0 %v200
    %v202 = vpop.xlane.xlu0 %201
    %v203 = vsel %vm193, %v170, 0.0
    %204 = vadd.xlane.f32.xlu0 %v203
    %v205 = vpop.xlane.xlu0 %204
    %v206 = vrcp.pop 32.0
    %v207 = vmul.f32 32.0, %v206
    %v208 = vsub.f32 1.0, %v207
    %v209 = vmul.f32 %v206, %v208
    %v210 = vadd.f32 %v206, %v209
    %vm211 = vweird.f32 %v206
    %v212 = vsel %vm211, %v206, %v210
    %v213 = vmul.f32 %v196, %v212
    %v214 = vmul.f32 %v199, %v212
    %v215 = vmul.f32 %v202, %v212
    %v216 = vmul.f32 %v205, %v212
    %v217 = vsub.f32 %v167, %v213
    %v218 = vsub.f32 %v168, %v214
    %v219 = vsub.f32 %v169, %v215
    %v220 = vsub.f32 %v170, %v216
    %v221 = vmul.f32 %v217, %v217
    %v222 = vmul.f32 %v218, %v218
    %v223 = vmul.f32 %v219, %v219
    %v224 = vmul.f32 %v220, %v220
    %v225 = vsel %vm193, %v221, 0.0
    %226 = vadd.xlane.f32.xlu0 %v225
    %v227 = vpop.xlane.xlu0 %226
    %v228 = vsel %vm193, %v222, 0.0
    %229 = vadd.xlane.f32.xlu0 %v228
    %v230 = vpop.xlane.xlu0 %229
    %v231 = vsel %vm193, %v223, 0.0
    %232 = vadd.xlane.f32.xlu0 %v231
    %v233 = vpop.xlane.xlu0 %232
    %v234 = vsel %vm193, %v224, 0.0
    %235 = vadd.xlane.f32.xlu0 %v234
    %v236 = vpop.xlane.xlu0 %235
    %v237 = vmul.f32 %v227, %v212
    %v238 = vmul.f32 %v230, %v212
    %v239 = vmul.f32 %v233, %v212
    %v240 = vmul.f32 %v236, %v212
    %v241 = vadd.f32 %v237, 1e-05
    %v242 = vadd.f32 %v238, 1e-05
    %v243 = vadd.f32 %v239, 1e-05
    %v244 = vadd.f32 %v240, 1e-05
    %v245 = vrsqrt.pop %v241
    %v246 = vmul.f32 %v245, %v241
    %v247 = vmul.f32 %v246, %v245
    %v248 = vmul.f32 0.5, %v247
    %v249 = vsub.f32 1.5, %v248
    %v250 = vmul.f32 %v245, %v249
    %vm251 = vweird.f32 %v241
    %vm252 = vweird.f32 %v245
    %vm253 = vmor %vm251, %vm252
    %v254 = vsel %vm253, %v245, %v250
    %v255 = vrsqrt.pop %v242
    %v256 = vmul.f32 %v255, %v242
    %v257 = vmul.f32 %v256, %v255
    %v258 = vmul.f32 0.5, %v257
    %v259 = vsub.f32 1.5, %v258
    %v260 = vmul.f32 %v255, %v259
    %vm261 = vweird.f32 %v242
    %vm262 = vweird.f32 %v255
    %vm263 = vmor %vm261, %vm262
    %v264 = vsel %vm263, %v255, %v260
    %v265 = vrsqrt.pop %v243
    %v266 = vmul.f32 %v265, %v243
    %v267 = vmul.f32 %v266, %v265
    %v268 = vmul.f32 0.5, %v267
    %v269 = vsub.f32 1.5, %v268
    %v270 = vmul.f32 %v265, %v269
    %vm271 = vweird.f32 %v243
    %vm272 = vweird.f32 %v265
    %vm273 = vmor %vm271, %vm272
    %v274 = vsel %vm273, %v265, %v270
    %v275 = vrsqrt.pop %v244
    %v276 = vmul.f32 %v275, %v244
    %v277 = vmul.f32 %v276, %v275
    %v278 = vmul.f32 0.5, %v277
    %v279 = vsub.f32 1.5, %v278
    %v280 = vmul.f32 %v275, %v279
    %vm281 = vweird.f32 %v244
    %vm282 = vweird.f32 %v275
    %vm283 = vmor %vm281, %vm282
    %v284 = vsel %vm283, %v275, %v280
    %v285 = vmul.f32 %v217, %v254
    %v286 = vmul.f32 %v218, %v264
    %v287 = vmul.f32 %v219, %v274
    %v288 = vmul.f32 %v220, %v284
    %v290 = vperm.slane %v191, 0
    %v292 = vmul.f32 %v285, %v290
    %v293 = vmul.f32 %v286, %v290
    %v294 = vmul.f32 %v287, %v290
    %v295 = vmul.f32 %v288, %v290
    %v297 = vperm.slane %v192, 0
    %v299 = vadd.f32 %v292, %v297
    %v300 = vadd.f32 %v293, %v297
    %v301 = vadd.f32 %v294, %v297
    %v302 = vadd.f32 %v295, %v297
    %v303 = vld [vmem:[%s23] sm:$0xff]
    %v304 = vld [vmem:[%s23 + $0x8] sm:$0xff]
    %v305 = vld [vmem:[%s23 + $0x10] sm:$0xff]
    %v306 = vld [vmem:[%s23 + $0x18] sm:$0xff]
    %v307 = vld [vmem:[%s25] sm:$0x1]
    %v309 = vperm.slane %v307, 0
    %v312 = vsel %vm193, %v299, 0
    %v315 = vsel %vm193, %v300, 0
    %v318 = vsel %vm193, %v301, 0
    %v321 = vsel %vm193, %v302, 0
    %323 = vmatpush.msra.mxu0 0.0
    %324 = vmatpush.msra.mxu0 0.0
    %325 = vmatpush.msra.mxu0 0.0
    %326 = vmatpush.msra.mxu0 0.0
    %327 = vmatpush.msra.mxu0 0.0
    %328 = vmatpush.msra.mxu0 0.0
    %329 = vmatpush.msra.mxu0 0.0
    %330 = vmatpush.msra.mxu0 0.0
    %331 = vmatpush.msra.mxu0 0.0
    %332 = vmatpush.msra.mxu0 0.0
    %333 = vmatpush.msra.mxu0 0.0
    %334 = vmatpush.msra.mxu0 0.0
    %335 = vmatpush.msra.mxu0 %v306
    %336 = vmatpush.msra.mxu0 %v305
    %337 = vmatpush.msra.mxu0 %v304
    %338 = vmatpush.msra.mxu0 %v303
    %339 = vmatmul.f32.gmra.mxu0 %v312
    %v340 = vpop.f32.mrf.mxu0
    %v341 = vadd.f32 %v309, %v340
    %342 = vmatmul.f32.gmra.mxu0 %v315
    %v343 = vpop.f32.mrf.mxu0
    %v344 = vadd.f32 %v309, %v343
    %345 = vmatmul.f32.gmra.mxu0 %v318
    %v346 = vpop.f32.mrf.mxu0
    %v347 = vadd.f32 %v309, %v346
    %348 = vmatmul.f32.gmra.mxu0 %v321
    %v349 = vpop.f32.mrf.mxu0
    %v350 = vadd.f32 %v309, %v349
    %351 = vdwg.mxu0
    %v352 = vmul.f32 %v341, %v179
    %v353 = vmul.f32 %v344, %v180
    %v354 = vmul.f32 %v347, %v181
    %v355 = vmul.f32 %v350, %v182
    %v357 = vsel %vm193, %v341, 0
    %v360 = vsel %vm193, %v344, 0
    %v363 = vsel %vm193, %v347, 0
    %v366 = vsel %vm193, %v350, 0
    %368 = vmatpush.msra.mxu0 0.0
    %369 = vmatpush.msra.mxu0 0.0
    %370 = vmatpush.msra.mxu0 0.0
    %371 = vmatpush.msra.mxu0 0.0
    %372 = vmatpush.msra.mxu0 0.0
    %373 = vmatpush.msra.mxu0 0.0
    %374 = vmatpush.msra.mxu0 0.0
    %375 = vmatpush.msra.mxu0 0.0
    %376 = vmatpush.msra.mxu0 0.0
    %377 = vmatpush.msra.mxu0 0.0
    %378 = vmatpush.msra.mxu0 0.0
    %379 = vmatpush.msra.mxu0 0.0
    %380 = vmatpush.msra.mxu0 %v190
    %381 = vmatpush.msra.mxu0 %v189
    %382 = vmatpush.msra.mxu0 %v188
    %383 = vmatpush.msra.mxu0 %v187
    %384 = vmatmul.f32.gmra.mxu0 %v357
    %v385 = vpop.f32.mrf.mxu0
    %v386 = vadd.f32 0.0, %v385
    %387 = vmatmul.f32.gmra.mxu0 %v360
    %v388 = vpop.f32.mrf.mxu0
    %v389 = vadd.f32 0.0, %v388
    %390 = vmatmul.f32.gmra.mxu0 %v363
    %v391 = vpop.f32.mrf.mxu0
    %v392 = vadd.f32 0.0, %v391
    %393 = vmatmul.f32.gmra.mxu0 %v366
    %v394 = vpop.f32.mrf.mxu0
    %v395 = vadd.f32 0.0, %v394
    %396 = vdwg.mxu0
    %v397 = vmul.f32 %v386, %v183
    %v398 = vmul.f32 %v389, %v184
    %v399 = vmul.f32 %v392, %v185
    %v400 = vmul.f32 %v395, %v186
    %v401 = vadd.f32 %v352, %v397
    %v402 = vadd.f32 %v353, %v398
    %v403 = vadd.f32 %v354, %v399
    %v404 = vadd.f32 %v355, %v400
    %v405 = vld [vmem:[%s27] sm:$0xff]
    %v406 = vld [vmem:[%s27 + $0x8] sm:$0xff]
    %v407 = vld [vmem:[%s27 + $0x10] sm:$0xff]
    %v408 = vld [vmem:[%s27 + $0x18] sm:$0xff]
    %v409 = vld [vmem:[%s29] sm:$0x1]
    %v411 = vperm.slane %v409, 0
    %413 = vmatpush.msra.mxu0 0.0
    %414 = vmatpush.msra.mxu0 0.0
    %415 = vmatpush.msra.mxu0 0.0
    %416 = vmatpush.msra.mxu0 0.0
    %417 = vmatpush.msra.mxu0 0.0
    %418 = vmatpush.msra.mxu0 0.0
    %419 = vmatpush.msra.mxu0 0.0
    %420 = vmatpush.msra.mxu0 0.0
    %421 = vmatpush.msra.mxu0 0.0
    %422 = vmatpush.msra.mxu0 0.0
    %423 = vmatpush.msra.mxu0 0.0
    %424 = vmatpush.msra.mxu0 0.0
    %425 = vmatpush.msra.mxu0 %v408
    %426 = vmatpush.msra.mxu0 %v407
    %427 = vmatpush.msra.mxu0 %v406
    %428 = vmatpush.msra.mxu0 %v405
    %429 = vmatmul.f32.gmra.mxu0 %v312
    %v430 = vpop.f32.mrf.mxu0
    %v431 = vadd.f32 %v411, %v430
    %432 = vmatmul.f32.gmra.mxu0 %v315
    %v433 = vpop.f32.mrf.mxu0
    %v434 = vadd.f32 %v411, %v433
    %435 = vmatmul.f32.gmra.mxu0 %v318
    %v436 = vpop.f32.mrf.mxu0
    %v437 = vadd.f32 %v411, %v436
    %438 = vmatmul.f32.gmra.mxu0 %v321
    %v439 = vpop.f32.mrf.mxu0
    %v440 = vadd.f32 %v411, %v439
    %441 = vdwg.mxu0
    %v442 = vmul.f32 %v431, %v179
    %v443 = vmul.f32 %v434, %v180
    %v444 = vmul.f32 %v437, %v181
    %v445 = vmul.f32 %v440, %v182
    %v447 = vsel %vm193, %v431, 0
    %v450 = vsel %vm193, %v434, 0
    %v453 = vsel %vm193, %v437, 0
    %v456 = vsel %vm193, %v440, 0
    %458 = vmatpush.msra.mxu0 0.0
    %459 = vmatpush.msra.mxu0 0.0
    %460 = vmatpush.msra.mxu0 0.0
    %461 = vmatpush.msra.mxu0 0.0
    %462 = vmatpush.msra.mxu0 0.0
    %463 = vmatpush.msra.mxu0 0.0
    %464 = vmatpush.msra.mxu0 0.0
    %465 = vmatpush.msra.mxu0 0.0
    %466 = vmatpush.msra.mxu0 0.0
    %467 = vmatpush.msra.mxu0 0.0
    %468 = vmatpush.msra.mxu0 0.0
    %469 = vmatpush.msra.mxu0 0.0
    %470 = vmatpush.msra.mxu0 %v190
    %471 = vmatpush.msra.mxu0 %v189
    %472 = vmatpush.msra.mxu0 %v188
    %473 = vmatpush.msra.mxu0 %v187
    %474 = vmatmul.f32.gmra.mxu0 %v447
    %v475 = vpop.f32.mrf.mxu0
    %v476 = vadd.f32 0.0, %v475
    %477 = vmatmul.f32.gmra.mxu0 %v450
    %v478 = vpop.f32.mrf.mxu0
    %v479 = vadd.f32 0.0, %v478
    %480 = vmatmul.f32.gmra.mxu0 %v453
    %v481 = vpop.f32.mrf.mxu0
    %v482 = vadd.f32 0.0, %v481
    %483 = vmatmul.f32.gmra.mxu0 %v456
    %v484 = vpop.f32.mrf.mxu0
    %v485 = vadd.f32 0.0, %v484
    %486 = vdwg.mxu0
    %v487 = vmul.f32 %v476, %v183
    %v488 = vmul.f32 %v479, %v184
    %v489 = vmul.f32 %v482, %v185
    %v490 = vmul.f32 %v485, %v186
    %v491 = vadd.f32 %v442, %v487
    %v492 = vadd.f32 %v443, %v488
    %v493 = vadd.f32 %v444, %v489
    %v494 = vadd.f32 %v445, %v490
    %v495 = vld [vmem:[%s31] sm:$0xff]
    %v496 = vld [vmem:[%s31 + $0x8] sm:$0xff]
    %v497 = vld [vmem:[%s31 + $0x10] sm:$0xff]
    %v498 = vld [vmem:[%s31 + $0x18] sm:$0xff]
    %v499 = vld [vmem:[%s33] sm:$0x1]
    %v501 = vperm.slane %v499, 0
    %503 = vmatpush.msra.mxu0 0.0
    %504 = vmatpush.msra.mxu0 0.0
    %505 = vmatpush.msra.mxu0 0.0
    %506 = vmatpush.msra.mxu0 0.0
    %507 = vmatpush.msra.mxu0 0.0
    %508 = vmatpush.msra.mxu0 0.0
    %509 = vmatpush.msra.mxu0 0.0
    %510 = vmatpush.msra.mxu0 0.0
    %511 = vmatpush.msra.mxu0 0.0
    %512 = vmatpush.msra.mxu0 0.0
    %513 = vmatpush.msra.mxu0 0.0
    %514 = vmatpush.msra.mxu0 0.0
    %515 = vmatpush.msra.mxu0 %v498
    %516 = vmatpush.msra.mxu0 %v497
    %517 = vmatpush.msra.mxu0 %v496
    %518 = vmatpush.msra.mxu0 %v495
    %519 = vmatmul.f32.gmra.mxu0 %v312
    %v520 = vpop.f32.mrf.mxu0
    %v521 = vadd.f32 %v501, %v520
    %522 = vmatmul.f32.gmra.mxu0 %v315
    %v523 = vpop.f32.mrf.mxu0
    %v524 = vadd.f32 %v501, %v523
    %525 = vmatmul.f32.gmra.mxu0 %v318
    %v526 = vpop.f32.mrf.mxu0
    %v527 = vadd.f32 %v501, %v526
    %528 = vmatmul.f32.gmra.mxu0 %v321
    %v529 = vpop.f32.mrf.mxu0
    %v530 = vadd.f32 %v501, %v529
    %531 = vdwg.mxu0
    %v532 = vld [vmem:[%s15] sm:$0x1]
    %v534 = vperm.slane %v532, 0
    %v536 = vmul.f32 %v401, %v534
    %v537 = vmul.f32 %v402, %v534
    %v538 = vmul.f32 %v403, %v534
    %v539 = vmul.f32 %v404, %v534
    %v541 = vsel %vm193, %v536, 0
    %v544 = vsel %vm193, %v537, 0
    %v547 = vsel %vm193, %v538, 0
    %v550 = vsel %vm193, %v539, 0
    %v553 = vsel %vm193, %v491, 0
    %v556 = vsel %vm193, %v492, 0
    %v559 = vsel %vm193, %v493, 0
    %v562 = vsel %vm193, %v494, 0
    %564 = vmatpush.xpose.msra.mxu0 0.0
    %565 = vmatpush.xpose.msra.mxu0 0.0
    %566 = vmatpush.xpose.msra.mxu0 0.0
    %567 = vmatpush.xpose.msra.mxu0 0.0
    %568 = vmatpush.xpose.msra.mxu0 0.0
    %569 = vmatpush.xpose.msra.mxu0 0.0
    %570 = vmatpush.xpose.msra.mxu0 0.0
    %571 = vmatpush.xpose.msra.mxu0 0.0
    %572 = vmatpush.xpose.msra.mxu0 0.0
    %573 = vmatpush.xpose.msra.mxu0 0.0
    %574 = vmatpush.xpose.msra.mxu0 0.0
    %575 = vmatpush.xpose.msra.mxu0 0.0
    %576 = vmatpush.xpose.msra.mxu0 %v562
    %577 = vmatpush.xpose.msra.mxu0 %v559
    %578 = vmatpush.xpose.msra.mxu0 %v556
    %579 = vmatpush.xpose.msra.mxu0 %v553
    %580 = vmatmul.f32.gmra.mxu0 %v541
    %v581 = vpop.f32.mrf.mxu0
    %v582 = vadd.f32 0.0, %v581
    %583 = vmatmul.f32.gmra.mxu0 %v544
    %v584 = vpop.f32.mrf.mxu0
    %v585 = vadd.f32 0.0, %v584
    %586 = vmatmul.f32.gmra.mxu0 %v547
    %v587 = vpop.f32.mrf.mxu0
    %v588 = vadd.f32 0.0, %v587
    %589 = vmatmul.f32.gmra.mxu0 %v550
    %v590 = vpop.f32.mrf.mxu0
    %v591 = vadd.f32 0.0, %v590
    %592 = vdwg.mxu0
    %v593 = vmul.f32 %v582, 0.35355338
    %v594 = vmul.f32 %v585, 0.35355338
    %v595 = vmul.f32 %v588, 0.35355338
    %v596 = vmul.f32 %v591, 0.35355338
    %v597 = vadd.f32 %v593, %v171
    %v598 = vadd.f32 %v594, %v172
    %v599 = vadd.f32 %v595, %v173
    %v600 = vadd.f32 %v596, %v174
    %v601 = vsel %vm193, %v597, -inf
    %602 = vmax.xlane.f32.xlu0 %v601
    %v603 = vpop.xlane.xlu0 %602
    %v604 = vsel %vm193, %v598, -inf
    %605 = vmax.xlane.f32.xlu0 %v604
    %v606 = vpop.xlane.xlu0 %605
    %v607 = vsel %vm193, %v599, -inf
    %608 = vmax.xlane.f32.xlu0 %v607
    %v609 = vpop.xlane.xlu0 %608
    %v610 = vsel %vm193, %v600, -inf
    %611 = vmax.xlane.f32.xlu0 %v610
    %v612 = vpop.xlane.xlu0 %611
    %v613 = vsub.f32 %v597, %v603
    %v614 = vsub.f32 %v598, %v606
    %v615 = vsub.f32 %v599, %v609
    %v616 = vsub.f32 %v600, %v612
    %v617 = vmul.f32 %v613, 1.442695
    %v618 = vpow.pop %v617
    %v619 = vmul.f32 %v614, 1.442695
    %v620 = vpow.pop %v619
    %v621 = vmul.f32 %v615, 1.442695
    %v622 = vpow.pop %v621
    %v623 = vmul.f32 %v616, 1.442695
    %v624 = vpow.pop %v623
    %v625 = vsel %vm193, %v618, 0.0
    %626 = vadd.xlane.f32.xlu0 %v625
    %v627 = vpop.xlane.xlu0 %626
    %v628 = vsel %vm193, %v620, 0.0
    %629 = vadd.xlane.f32.xlu0 %v628
    %v630 = vpop.xlane.xlu0 %629
    %v631 = vsel %vm193, %v622, 0.0
    %632 = vadd.xlane.f32.xlu0 %v631
    %v633 = vpop.xlane.xlu0 %632
    %v634 = vsel %vm193, %v624, 0.0
    %635 = vadd.xlane.f32.xlu0 %v634
    %v636 = vpop.xlane.xlu0 %635
    %v637 = vrcp.pop %v627
    %v638 = vrcp.pop %v630
    %v639 = vrcp.pop %v633
    %v640 = vrcp.pop %v636
    %v641 = vmul.f32 %v618, %v637
    %v642 = vmul.f32 %v620, %v638
    %v643 = vmul.f32 %v622, %v639
    %v644 = vmul.f32 %v624, %v640
    %v645 = vmul.f32 %v521, %v534
    %v646 = vmul.f32 %v524, %v534
    %v647 = vmul.f32 %v527, %v534
    %v648 = vmul.f32 %v530, %v534
    %s649 = scalar_lea.vmem %s15, 1
    %v650 = vld [vmem:[%s649] sm:$0x1]
    %v652 = vperm.slane %v650, 0
    %v654 = vmul.f32 %v401, %v652
    %v655 = vmul.f32 %v402, %v652
    %v656 = vmul.f32 %v403, %v652
    %v657 = vmul.f32 %v404, %v652
    %v659 = vsel %vm193, %v654, 0
    %v662 = vsel %vm193, %v655, 0
    %v665 = vsel %vm193, %v656, 0
    %v668 = vsel %vm193, %v657, 0
    %670 = vmatpush.xpose.msra.mxu0 0.0
    %671 = vmatpush.xpose.msra.mxu0 0.0
    %672 = vmatpush.xpose.msra.mxu0 0.0
    %673 = vmatpush.xpose.msra.mxu0 0.0
    %674 = vmatpush.xpose.msra.mxu0 0.0
    %675 = vmatpush.xpose.msra.mxu0 0.0
    %676 = vmatpush.xpose.msra.mxu0 0.0
    %677 = vmatpush.xpose.msra.mxu0 0.0
    %678 = vmatpush.xpose.msra.mxu0 0.0
    %679 = vmatpush.xpose.msra.mxu0 0.0
    %680 = vmatpush.xpose.msra.mxu0 0.0
    %681 = vmatpush.xpose.msra.mxu0 0.0
    %682 = vmatpush.xpose.msra.mxu0 %v562
    %683 = vmatpush.xpose.msra.mxu0 %v559
    %684 = vmatpush.xpose.msra.mxu0 %v556
    %685 = vmatpush.xpose.msra.mxu0 %v553
    %686 = vmatmul.f32.gmra.mxu0 %v659
    %v687 = vpop.f32.mrf.mxu0
    %v688 = vadd.f32 0.0, %v687
    %689 = vmatmul.f32.gmra.mxu0 %v662
    %v690 = vpop.f32.mrf.mxu0
    %v691 = vadd.f32 0.0, %v690
    %692 = vmatmul.f32.gmra.mxu0 %v665
    %v693 = vpop.f32.mrf.mxu0
    %v694 = vadd.f32 0.0, %v693
    %695 = vmatmul.f32.gmra.mxu0 %v668
    %v696 = vpop.f32.mrf.mxu0
    %v697 = vadd.f32 0.0, %v696
    %698 = vdwg.mxu0
    %v699 = vmul.f32 %v688, 0.35355338
    %v700 = vmul.f32 %v691, 0.35355338
    %v701 = vmul.f32 %v694, 0.35355338
    %v702 = vmul.f32 %v697, 0.35355338
    %v703 = vadd.f32 %v699, %v171
    %v704 = vadd.f32 %v700, %v172
    %v705 = vadd.f32 %v701, %v173
    %v706 = vadd.f32 %v702, %v174
    %v707 = vsel %vm193, %v703, -inf
    %708 = vmax.xlane.f32.xlu0 %v707
    %v709 = vpop.xlane.xlu0 %708
    %v710 = vsel %vm193, %v704, -inf
    %711 = vmax.xlane.f32.xlu0 %v710
    %v712 = vpop.xlane.xlu0 %711
    %v713 = vsel %vm193, %v705, -inf
    %714 = vmax.xlane.f32.xlu0 %v713
    %v715 = vpop.xlane.xlu0 %714
    %v716 = vsel %vm193, %v706, -inf
    %717 = vmax.xlane.f32.xlu0 %v716
    %v718 = vpop.xlane.xlu0 %717
    %v719 = vsub.f32 %v703, %v709
    %v720 = vsub.f32 %v704, %v712
    %v721 = vsub.f32 %v705, %v715
    %v722 = vsub.f32 %v706, %v718
    %v723 = vmul.f32 %v719, 1.442695
    %v724 = vpow.pop %v723
    %v725 = vmul.f32 %v720, 1.442695
    %v726 = vpow.pop %v725
    %v727 = vmul.f32 %v721, 1.442695
    %v728 = vpow.pop %v727
    %v729 = vmul.f32 %v722, 1.442695
    %v730 = vpow.pop %v729
    %v731 = vsel %vm193, %v724, 0.0
    %732 = vadd.xlane.f32.xlu0 %v731
    %v733 = vpop.xlane.xlu0 %732
    %v734 = vsel %vm193, %v726, 0.0
    %735 = vadd.xlane.f32.xlu0 %v734
    %v736 = vpop.xlane.xlu0 %735
    %v737 = vsel %vm193, %v728, 0.0
    %738 = vadd.xlane.f32.xlu0 %v737
    %v739 = vpop.xlane.xlu0 %738
    %v740 = vsel %vm193, %v730, 0.0
    %741 = vadd.xlane.f32.xlu0 %v740
    %v742 = vpop.xlane.xlu0 %741
    %v743 = vrcp.pop %v733
    %v744 = vrcp.pop %v736
    %v745 = vrcp.pop %v739
    %v746 = vrcp.pop %v742
    %v747 = vmul.f32 %v724, %v743
    %v748 = vmul.f32 %v726, %v744
    %v749 = vmul.f32 %v728, %v745
    %v750 = vmul.f32 %v730, %v746
    %v751 = vmul.f32 %v521, %v652
    %v752 = vmul.f32 %v524, %v652
    %v753 = vmul.f32 %v527, %v652
    %v754 = vmul.f32 %v530, %v652
    %v756 = vsel %vm193, %v747, 0
    %v759 = vsel %vm193, %v748, 0
    %v762 = vsel %vm193, %v749, 0
    %v765 = vsel %vm193, %v750, 0
    %767 = vmatpush.msra.mxu0 0.0
    %768 = vmatpush.msra.mxu0 0.0
    %769 = vmatpush.msra.mxu0 0.0
    %770 = vmatpush.msra.mxu0 0.0
    %771 = vmatpush.msra.mxu0 0.0
    %772 = vmatpush.msra.mxu0 0.0
    %773 = vmatpush.msra.mxu0 0.0
    %774 = vmatpush.msra.mxu0 0.0
    %775 = vmatpush.msra.mxu0 0.0
    %776 = vmatpush.msra.mxu0 0.0
    %777 = vmatpush.msra.mxu0 0.0
    %778 = vmatpush.msra.mxu0 0.0
    %779 = vmatpush.msra.mxu0 %v754
    %780 = vmatpush.msra.mxu0 %v753
    %781 = vmatpush.msra.mxu0 %v752
    %782 = vmatpush.msra.mxu0 %v751
    %783 = vmatmul.f32.gmra.mxu0 %v756
    %v784 = vpop.f32.mrf.mxu0
    %v785 = vadd.f32 0.0, %v784
    %786 = vmatmul.f32.gmra.mxu0 %v759
    %v787 = vpop.f32.mrf.mxu0
    %v788 = vadd.f32 0.0, %v787
    %789 = vmatmul.f32.gmra.mxu0 %v762
    %v790 = vpop.f32.mrf.mxu0
    %v791 = vadd.f32 0.0, %v790
    %792 = vmatmul.f32.gmra.mxu0 %v765
    %v793 = vpop.f32.mrf.mxu0
    %v794 = vadd.f32 0.0, %v793
    %795 = vdwg.mxu0
    %v797 = vsel %vm193, %v641, 0
    %v800 = vsel %vm193, %v642, 0
    %v803 = vsel %vm193, %v643, 0
    %v806 = vsel %vm193, %v644, 0
    %808 = vmatpush.msra.mxu0 0.0
    %809 = vmatpush.msra.mxu0 0.0
    %810 = vmatpush.msra.mxu0 0.0
    %811 = vmatpush.msra.mxu0 0.0
    %812 = vmatpush.msra.mxu0 0.0
    %813 = vmatpush.msra.mxu0 0.0
    %814 = vmatpush.msra.mxu0 0.0
    %815 = vmatpush.msra.mxu0 0.0
    %816 = vmatpush.msra.mxu0 0.0
    %817 = vmatpush.msra.mxu0 0.0
    %818 = vmatpush.msra.mxu0 0.0
    %819 = vmatpush.msra.mxu0 0.0
    %820 = vmatpush.msra.mxu0 %v648
    %821 = vmatpush.msra.mxu0 %v647
    %822 = vmatpush.msra.mxu0 %v646
    %823 = vmatpush.msra.mxu0 %v645
    %824 = vmatmul.f32.gmra.mxu0 %v797
    %v825 = vpop.f32.mrf.mxu0
    %v826 = vadd.f32 %v785, %v825
    %827 = vmatmul.f32.gmra.mxu0 %v800
    %v828 = vpop.f32.mrf.mxu0
    %v829 = vadd.f32 %v788, %v828
    %830 = vmatmul.f32.gmra.mxu0 %v803
    %v831 = vpop.f32.mrf.mxu0
    %v832 = vadd.f32 %v791, %v831
    %833 = vmatmul.f32.gmra.mxu0 %v806
    %v834 = vpop.f32.mrf.mxu0
    %v835 = vadd.f32 %v794, %v834
    %836 = vdwg.mxu0
    %s837 = scalar_lea.vmem %s15, 2
    %v838 = vld [vmem:[%s837] sm:$0x1]
    %v840 = vperm.slane %v838, 0
    %v842 = vmul.f32 %v401, %v840
    %v843 = vmul.f32 %v402, %v840
    %v844 = vmul.f32 %v403, %v840
    %v845 = vmul.f32 %v404, %v840
    %v847 = vsel %vm193, %v842, 0
    %v850 = vsel %vm193, %v843, 0
    %v853 = vsel %vm193, %v844, 0
    %v856 = vsel %vm193, %v845, 0
    %858 = vmatpush.xpose.msra.mxu0 0.0
    %859 = vmatpush.xpose.msra.mxu0 0.0
    %860 = vmatpush.xpose.msra.mxu0 0.0
    %861 = vmatpush.xpose.msra.mxu0 0.0
    %862 = vmatpush.xpose.msra.mxu0 0.0
    %863 = vmatpush.xpose.msra.mxu0 0.0
    %864 = vmatpush.xpose.msra.mxu0 0.0
    %865 = vmatpush.xpose.msra.mxu0 0.0
    %866 = vmatpush.xpose.msra.mxu0 0.0
    %867 = vmatpush.xpose.msra.mxu0 0.0
    %868 = vmatpush.xpose.msra.mxu0 0.0
    %869 = vmatpush.xpose.msra.mxu0 0.0
    %870 = vmatpush.xpose.msra.mxu0 %v562
    %871 = vmatpush.xpose.msra.mxu0 %v559
    %872 = vmatpush.xpose.msra.mxu0 %v556
    %873 = vmatpush.xpose.msra.mxu0 %v553
    %874 = vmatmul.f32.gmra.mxu0 %v847
    %v875 = vpop.f32.mrf.mxu0
    %v876 = vadd.f32 0.0, %v875
    %877 = vmatmul.f32.gmra.mxu0 %v850
    %v878 = vpop.f32.mrf.mxu0
    %v879 = vadd.f32 0.0, %v878
    %880 = vmatmul.f32.gmra.mxu0 %v853
    %v881 = vpop.f32.mrf.mxu0
    %v882 = vadd.f32 0.0, %v881
    %883 = vmatmul.f32.gmra.mxu0 %v856
    %v884 = vpop.f32.mrf.mxu0
    %v885 = vadd.f32 0.0, %v884
    %886 = vdwg.mxu0
    %v887 = vmul.f32 %v876, 0.35355338
    %v888 = vmul.f32 %v879, 0.35355338
    %v889 = vmul.f32 %v882, 0.35355338
    %v890 = vmul.f32 %v885, 0.35355338
    %v891 = vadd.f32 %v887, %v171
    %v892 = vadd.f32 %v888, %v172
    %v893 = vadd.f32 %v889, %v173
    %v894 = vadd.f32 %v890, %v174
    %v895 = vsel %vm193, %v891, -inf
    %896 = vmax.xlane.f32.xlu0 %v895
    %v897 = vpop.xlane.xlu0 %896
    %v898 = vsel %vm193, %v892, -inf
    %899 = vmax.xlane.f32.xlu0 %v898
    %v900 = vpop.xlane.xlu0 %899
    %v901 = vsel %vm193, %v893, -inf
    %902 = vmax.xlane.f32.xlu0 %v901
    %v903 = vpop.xlane.xlu0 %902
    %v904 = vsel %vm193, %v894, -inf
    %905 = vmax.xlane.f32.xlu0 %v904
    %v906 = vpop.xlane.xlu0 %905
    %v907 = vsub.f32 %v891, %v897
    %v908 = vsub.f32 %v892, %v900
    %v909 = vsub.f32 %v893, %v903
    %v910 = vsub.f32 %v894, %v906
    %v911 = vmul.f32 %v907, 1.442695
    %v912 = vpow.pop %v911
    %v913 = vmul.f32 %v908, 1.442695
    %v914 = vpow.pop %v913
    %v915 = vmul.f32 %v909, 1.442695
    %v916 = vpow.pop %v915
    %v917 = vmul.f32 %v910, 1.442695
    %v918 = vpow.pop %v917
    %v919 = vsel %vm193, %v912, 0.0
    %920 = vadd.xlane.f32.xlu0 %v919
    %v921 = vpop.xlane.xlu0 %920
    %v922 = vsel %vm193, %v914, 0.0
    %923 = vadd.xlane.f32.xlu0 %v922
    %v924 = vpop.xlane.xlu0 %923
    %v925 = vsel %vm193, %v916, 0.0
    %926 = vadd.xlane.f32.xlu0 %v925
    %v927 = vpop.xlane.xlu0 %926
    %v928 = vsel %vm193, %v918, 0.0
    %929 = vadd.xlane.f32.xlu0 %v928
    %v930 = vpop.xlane.xlu0 %929
    %v931 = vrcp.pop %v921
    %v932 = vrcp.pop %v924
    %v933 = vrcp.pop %v927
    %v934 = vrcp.pop %v930
    %v935 = vmul.f32 %v912, %v931
    %v936 = vmul.f32 %v914, %v932
    %v937 = vmul.f32 %v916, %v933
    %v938 = vmul.f32 %v918, %v934
    %v939 = vmul.f32 %v521, %v840
    %v940 = vmul.f32 %v524, %v840
    %v941 = vmul.f32 %v527, %v840
    %v942 = vmul.f32 %v530, %v840
    %v944 = vsel %vm193, %v935, 0
    %v947 = vsel %vm193, %v936, 0
    %v950 = vsel %vm193, %v937, 0
    %v953 = vsel %vm193, %v938, 0
    %955 = vmatpush.msra.mxu0 0.0
    %956 = vmatpush.msra.mxu0 0.0
    %957 = vmatpush.msra.mxu0 0.0
    %958 = vmatpush.msra.mxu0 0.0
    %959 = vmatpush.msra.mxu0 0.0
    %960 = vmatpush.msra.mxu0 0.0
    %961 = vmatpush.msra.mxu0 0.0
    %962 = vmatpush.msra.mxu0 0.0
    %963 = vmatpush.msra.mxu0 0.0
    %964 = vmatpush.msra.mxu0 0.0
    %965 = vmatpush.msra.mxu0 0.0
    %966 = vmatpush.msra.mxu0 0.0
    %967 = vmatpush.msra.mxu0 %v942
    %968 = vmatpush.msra.mxu0 %v941
    %969 = vmatpush.msra.mxu0 %v940
    %970 = vmatpush.msra.mxu0 %v939
    %971 = vmatmul.f32.gmra.mxu0 %v944
    %v972 = vpop.f32.mrf.mxu0
    %v973 = vadd.f32 0.0, %v972
    %974 = vmatmul.f32.gmra.mxu0 %v947
    %v975 = vpop.f32.mrf.mxu0
    %v976 = vadd.f32 0.0, %v975
    %977 = vmatmul.f32.gmra.mxu0 %v950
    %v978 = vpop.f32.mrf.mxu0
    %v979 = vadd.f32 0.0, %v978
    %980 = vmatmul.f32.gmra.mxu0 %v953
    %v981 = vpop.f32.mrf.mxu0
    %v982 = vadd.f32 0.0, %v981
    %983 = vdwg.mxu0
    %v984 = vadd.f32 %v826, %v973
    %v985 = vadd.f32 %v829, %v976
    %v986 = vadd.f32 %v832, %v979
    %v987 = vadd.f32 %v835, %v982
    %s988 = scalar_lea.vmem %s15, 3
    %v989 = vld [vmem:[%s988] sm:$0x1]
    %v991 = vperm.slane %v989, 0
    %v993 = vmul.f32 %v401, %v991
    %v994 = vmul.f32 %v402, %v991
    %v995 = vmul.f32 %v403, %v991
    %v996 = vmul.f32 %v404, %v991
    %v998 = vsel %vm193, %v993, 0
    %v1001 = vsel %vm193, %v994, 0
    %v1004 = vsel %vm193, %v995, 0
    %v1007 = vsel %vm193, %v996, 0
    %1009 = vmatpush.xpose.msra.mxu0 0.0
    %1010 = vmatpush.xpose.msra.mxu0 0.0
    %1011 = vmatpush.xpose.msra.mxu0 0.0
    %1012 = vmatpush.xpose.msra.mxu0 0.0
    %1013 = vmatpush.xpose.msra.mxu0 0.0
    %1014 = vmatpush.xpose.msra.mxu0 0.0
    %1015 = vmatpush.xpose.msra.mxu0 0.0
    %1016 = vmatpush.xpose.msra.mxu0 0.0
    %1017 = vmatpush.xpose.msra.mxu0 0.0
    %1018 = vmatpush.xpose.msra.mxu0 0.0
    %1019 = vmatpush.xpose.msra.mxu0 0.0
    %1020 = vmatpush.xpose.msra.mxu0 0.0
    %1021 = vmatpush.xpose.msra.mxu0 %v562
    %1022 = vmatpush.xpose.msra.mxu0 %v559
    %1023 = vmatpush.xpose.msra.mxu0 %v556
    %1024 = vmatpush.xpose.msra.mxu0 %v553
    %1025 = vmatmul.f32.gmra.mxu0 %v998
    %v1026 = vpop.f32.mrf.mxu0
    %v1027 = vadd.f32 0.0, %v1026
    %1028 = vmatmul.f32.gmra.mxu0 %v1001
    %v1029 = vpop.f32.mrf.mxu0
    %v1030 = vadd.f32 0.0, %v1029
    %1031 = vmatmul.f32.gmra.mxu0 %v1004
    %v1032 = vpop.f32.mrf.mxu0
    %v1033 = vadd.f32 0.0, %v1032
    %1034 = vmatmul.f32.gmra.mxu0 %v1007
    %v1035 = vpop.f32.mrf.mxu0
    %v1036 = vadd.f32 0.0, %v1035
    %1037 = vdwg.mxu0
    %v1038 = vmul.f32 %v1027, 0.35355338
    %v1039 = vmul.f32 %v1030, 0.35355338
    %v1040 = vmul.f32 %v1033, 0.35355338
    %v1041 = vmul.f32 %v1036, 0.35355338
    %v1042 = vadd.f32 %v1038, %v171
    %v1043 = vadd.f32 %v1039, %v172
    %v1044 = vadd.f32 %v1040, %v173
    %v1045 = vadd.f32 %v1041, %v174
    %v1046 = vsel %vm193, %v1042, -inf
    %1047 = vmax.xlane.f32.xlu0 %v1046
    %v1048 = vpop.xlane.xlu0 %1047
    %v1049 = vsel %vm193, %v1043, -inf
    %1050 = vmax.xlane.f32.xlu0 %v1049
    %v1051 = vpop.xlane.xlu0 %1050
    %v1052 = vsel %vm193, %v1044, -inf
    %1053 = vmax.xlane.f32.xlu0 %v1052
    %v1054 = vpop.xlane.xlu0 %1053
    %v1055 = vsel %vm193, %v1045, -inf
    %1056 = vmax.xlane.f32.xlu0 %v1055
    %v1057 = vpop.xlane.xlu0 %1056
    %v1058 = vsub.f32 %v1042, %v1048
    %v1059 = vsub.f32 %v1043, %v1051
    %v1060 = vsub.f32 %v1044, %v1054
    %v1061 = vsub.f32 %v1045, %v1057
    %v1062 = vmul.f32 %v1058, 1.442695
    %v1063 = vpow.pop %v1062
    %v1064 = vmul.f32 %v1059, 1.442695
    %v1065 = vpow.pop %v1064
    %v1066 = vmul.f32 %v1060, 1.442695
    %v1067 = vpow.pop %v1066
    %v1068 = vmul.f32 %v1061, 1.442695
    %v1069 = vpow.pop %v1068
    %v1070 = vsel %vm193, %v1063, 0.0
    %1071 = vadd.xlane.f32.xlu0 %v1070
    %v1072 = vpop.xlane.xlu0 %1071
    %v1073 = vsel %vm193, %v1065, 0.0
    %1074 = vadd.xlane.f32.xlu0 %v1073
    %v1075 = vpop.xlane.xlu0 %1074
    %v1076 = vsel %vm193, %v1067, 0.0
    %1077 = vadd.xlane.f32.xlu0 %v1076
    %v1078 = vpop.xlane.xlu0 %1077
    %v1079 = vsel %vm193, %v1069, 0.0
    %1080 = vadd.xlane.f32.xlu0 %v1079
    %v1081 = vpop.xlane.xlu0 %1080
    %v1082 = vrcp.pop %v1072
    %v1083 = vrcp.pop %v1075
    %v1084 = vrcp.pop %v1078
    %v1085 = vrcp.pop %v1081
    %v1086 = vmul.f32 %v1063, %v1082
    %v1087 = vmul.f32 %v1065, %v1083
    %v1088 = vmul.f32 %v1067, %v1084
    %v1089 = vmul.f32 %v1069, %v1085
    %v1090 = vmul.f32 %v521, %v991
    %v1091 = vmul.f32 %v524, %v991
    %v1092 = vmul.f32 %v527, %v991
    %v1093 = vmul.f32 %v530, %v991
    %v1095 = vsel %vm193, %v1086, 0
    %v1098 = vsel %vm193, %v1087, 0
    %v1101 = vsel %vm193, %v1088, 0
    %v1104 = vsel %vm193, %v1089, 0
    %1106 = vmatpush.msra.mxu0 0.0
    %1107 = vmatpush.msra.mxu0 0.0
    %1108 = vmatpush.msra.mxu0 0.0
    %1109 = vmatpush.msra.mxu0 0.0
    %1110 = vmatpush.msra.mxu0 0.0
    %1111 = vmatpush.msra.mxu0 0.0
    %1112 = vmatpush.msra.mxu0 0.0
    %1113 = vmatpush.msra.mxu0 0.0
    %1114 = vmatpush.msra.mxu0 0.0
    %1115 = vmatpush.msra.mxu0 0.0
    %1116 = vmatpush.msra.mxu0 0.0
    %1117 = vmatpush.msra.mxu0 0.0
    %1118 = vmatpush.msra.mxu0 %v1093
    %1119 = vmatpush.msra.mxu0 %v1092
    %1120 = vmatpush.msra.mxu0 %v1091
    %1121 = vmatpush.msra.mxu0 %v1090
    %1122 = vmatmul.f32.gmra.mxu0 %v1095
    %v1123 = vpop.f32.mrf.mxu0
    %v1124 = vadd.f32 0.0, %v1123
    %1125 = vmatmul.f32.gmra.mxu0 %v1098
    %v1126 = vpop.f32.mrf.mxu0
    %v1127 = vadd.f32 0.0, %v1126
    %1128 = vmatmul.f32.gmra.mxu0 %v1101
    %v1129 = vpop.f32.mrf.mxu0
    %v1130 = vadd.f32 0.0, %v1129
    %1131 = vmatmul.f32.gmra.mxu0 %v1104
    %v1132 = vpop.f32.mrf.mxu0
    %v1133 = vadd.f32 0.0, %v1132
    %1134 = vdwg.mxu0
    %v1135 = vadd.f32 %v984, %v1124
    %v1136 = vadd.f32 %v985, %v1127
    %v1137 = vadd.f32 %v986, %v1130
    %v1138 = vadd.f32 %v987, %v1133
    %v1139 = vld [vmem:[%s35] sm:$0xff]
    %v1140 = vld [vmem:[%s35 + $0x8] sm:$0xff]
    %v1141 = vld [vmem:[%s35 + $0x10] sm:$0xff]
    %v1142 = vld [vmem:[%s35 + $0x18] sm:$0xff]
    %v1144 = vsel %vm193, %v1135, 0
    %v1147 = vsel %vm193, %v1136, 0
    %v1150 = vsel %vm193, %v1137, 0
    %v1153 = vsel %vm193, %v1138, 0
    %1155 = vmatpush.msra.mxu0 0.0
    %1156 = vmatpush.msra.mxu0 0.0
    %1157 = vmatpush.msra.mxu0 0.0
    %1158 = vmatpush.msra.mxu0 0.0
    %1159 = vmatpush.msra.mxu0 0.0
    %1160 = vmatpush.msra.mxu0 0.0
    %1161 = vmatpush.msra.mxu0 0.0
    %1162 = vmatpush.msra.mxu0 0.0
    %1163 = vmatpush.msra.mxu0 0.0
    %1164 = vmatpush.msra.mxu0 0.0
    %1165 = vmatpush.msra.mxu0 0.0
    %1166 = vmatpush.msra.mxu0 0.0
    %1167 = vmatpush.msra.mxu0 %v1142
    %1168 = vmatpush.msra.mxu0 %v1141
    %1169 = vmatpush.msra.mxu0 %v1140
    %1170 = vmatpush.msra.mxu0 %v1139
    %1171 = vmatmul.f32.gmra.mxu0 %v1144
    %v1172 = vpop.f32.mrf.mxu0
    %v1173 = vadd.f32 0.0, %v1172
    %1174 = vmatmul.f32.gmra.mxu0 %v1147
    %v1175 = vpop.f32.mrf.mxu0
    %v1176 = vadd.f32 0.0, %v1175
    %1177 = vmatmul.f32.gmra.mxu0 %v1150
    %v1178 = vpop.f32.mrf.mxu0
    %v1179 = vadd.f32 0.0, %v1178
    %1180 = vmatmul.f32.gmra.mxu0 %v1153
    %v1181 = vpop.f32.mrf.mxu0
    %v1182 = vadd.f32 0.0, %v1181
    %1183 = vdwg.mxu0
    %v1184 = vadd.f32 %v167, %v1173
    %v1185 = vadd.f32 %v168, %v1176
    %v1186 = vadd.f32 %v169, %v1179
    %v1187 = vadd.f32 %v170, %v1182
    %v1188 = vld [vmem:[%s37] sm:$0x1]
    %v1190 = vperm.slane %v1188, 0
    %v1192 = vadd.f32 %v1184, %v1190
    %v1193 = vadd.f32 %v1185, %v1190
    %v1194 = vadd.f32 %v1186, %v1190
    %v1195 = vadd.f32 %v1187, %v1190
    %v1196 = vld [vmem:[%s39] sm:$0x1]
    %v1197 = vld [vmem:[%s41] sm:$0x1]
    %v1198 = vsel %vm193, %v1192, 0.0
    %1199 = vadd.xlane.f32.xlu0 %v1198
    %v1200 = vpop.xlane.xlu0 %1199
    %v1201 = vsel %vm193, %v1193, 0.0
    %1202 = vadd.xlane.f32.xlu0 %v1201
    %v1203 = vpop.xlane.xlu0 %1202
    %v1204 = vsel %vm193, %v1194, 0.0
    %1205 = vadd.xlane.f32.xlu0 %v1204
    %v1206 = vpop.xlane.xlu0 %1205
    %v1207 = vsel %vm193, %v1195, 0.0
    %1208 = vadd.xlane.f32.xlu0 %v1207
    %v1209 = vpop.xlane.xlu0 %1208
    %v1210 = vmul.f32 %v1200, %v212
    %v1211 = vmul.f32 %v1203, %v212
    %v1212 = vmul.f32 %v1206, %v212
    %v1213 = vmul.f32 %v1209, %v212
    %v1214 = vsub.f32 %v1192, %v1210
    %v1215 = vsub.f32 %v1193, %v1211
    %v1216 = vsub.f32 %v1194, %v1212
    %v1217 = vsub.f32 %v1195, %v1213
    %v1218 = vmul.f32 %v1214, %v1214
    %v1219 = vmul.f32 %v1215, %v1215
    %v1220 = vmul.f32 %v1216, %v1216
    %v1221 = vmul.f32 %v1217, %v1217
    %v1222 = vsel %vm193, %v1218, 0.0
    %1223 = vadd.xlane.f32.xlu0 %v1222
    %v1224 = vpop.xlane.xlu0 %1223
    %v1225 = vsel %vm193, %v1219, 0.0
    %1226 = vadd.xlane.f32.xlu0 %v1225
    %v1227 = vpop.xlane.xlu0 %1226
    %v1228 = vsel %vm193, %v1220, 0.0
    %1229 = vadd.xlane.f32.xlu0 %v1228
    %v1230 = vpop.xlane.xlu0 %1229
    %v1231 = vsel %vm193, %v1221, 0.0
    %1232 = vadd.xlane.f32.xlu0 %v1231
    %v1233 = vpop.xlane.xlu0 %1232
    %v1234 = vmul.f32 %v1224, %v212
    %v1235 = vmul.f32 %v1227, %v212
    %v1236 = vmul.f32 %v1230, %v212
    %v1237 = vmul.f32 %v1233, %v212
    %v1238 = vadd.f32 %v1234, 1e-05
    %v1239 = vadd.f32 %v1235, 1e-05
    %v1240 = vadd.f32 %v1236, 1e-05
    %v1241 = vadd.f32 %v1237, 1e-05
    %v1242 = vrsqrt.pop %v1238
    %v1243 = vmul.f32 %v1242, %v1238
    %v1244 = vmul.f32 %v1243, %v1242
    %v1245 = vmul.f32 0.5, %v1244
    %v1246 = vsub.f32 1.5, %v1245
    %v1247 = vmul.f32 %v1242, %v1246
    %vm1248 = vweird.f32 %v1238
    %vm1249 = vweird.f32 %v1242
    %vm1250 = vmor %vm1248, %vm1249
    %v1251 = vsel %vm1250, %v1242, %v1247
    %v1252 = vrsqrt.pop %v1239
    %v1253 = vmul.f32 %v1252, %v1239
    %v1254 = vmul.f32 %v1253, %v1252
    %v1255 = vmul.f32 0.5, %v1254
    %v1256 = vsub.f32 1.5, %v1255
    %v1257 = vmul.f32 %v1252, %v1256
    %vm1258 = vweird.f32 %v1239
    %vm1259 = vweird.f32 %v1252
    %vm1260 = vmor %vm1258, %vm1259
    %v1261 = vsel %vm1260, %v1252, %v1257
    %v1262 = vrsqrt.pop %v1240
    %v1263 = vmul.f32 %v1262, %v1240
    %v1264 = vmul.f32 %v1263, %v1262
    %v1265 = vmul.f32 0.5, %v1264
    %v1266 = vsub.f32 1.5, %v1265
    %v1267 = vmul.f32 %v1262, %v1266
    %vm1268 = vweird.f32 %v1240
    %vm1269 = vweird.f32 %v1262
    %vm1270 = vmor %vm1268, %vm1269
    %v1271 = vsel %vm1270, %v1262, %v1267
    %v1272 = vrsqrt.pop %v1241
    %v1273 = vmul.f32 %v1272, %v1241
    %v1274 = vmul.f32 %v1273, %v1272
    %v1275 = vmul.f32 0.5, %v1274
    %v1276 = vsub.f32 1.5, %v1275
    %v1277 = vmul.f32 %v1272, %v1276
    %vm1278 = vweird.f32 %v1241
    %vm1279 = vweird.f32 %v1272
    %vm1280 = vmor %vm1278, %vm1279
    %v1281 = vsel %vm1280, %v1272, %v1277
    %v1282 = vmul.f32 %v1214, %v1251
    %v1283 = vmul.f32 %v1215, %v1261
    %v1284 = vmul.f32 %v1216, %v1271
    %v1285 = vmul.f32 %v1217, %v1281
    %v1287 = vperm.slane %v1196, 0
    %v1289 = vmul.f32 %v1282, %v1287
    %v1290 = vmul.f32 %v1283, %v1287
    %v1291 = vmul.f32 %v1284, %v1287
    %v1292 = vmul.f32 %v1285, %v1287
    %v1294 = vperm.slane %v1197, 0
    %v1296 = vadd.f32 %v1289, %v1294
    %v1297 = vadd.f32 %v1290, %v1294
    %v1298 = vadd.f32 %v1291, %v1294
    %v1299 = vadd.f32 %v1292, %v1294
    %v1300 = vld [vmem:[%s43] sm:$0xff]
    %v1301 = vld [vmem:[%s43 + $0x8] sm:$0xff]
    %v1302 = vld [vmem:[%s43 + $0x10] sm:$0xff]
    %v1303 = vld [vmem:[%s43 + $0x18] sm:$0xff]
    %v1305 = vsel %vm193, %v1296, 0
    %v1308 = vsel %vm193, %v1297, 0
    %v1311 = vsel %vm193, %v1298, 0
    %v1314 = vsel %vm193, %v1299, 0
    %1316 = vmatpush.msra.mxu0 0.0
    %1317 = vmatpush.msra.mxu0 0.0
    %1318 = vmatpush.msra.mxu0 0.0
    %1319 = vmatpush.msra.mxu0 0.0
    %1320 = vmatpush.msra.mxu0 0.0
    %1321 = vmatpush.msra.mxu0 0.0
    %1322 = vmatpush.msra.mxu0 0.0
    %1323 = vmatpush.msra.mxu0 0.0
    %1324 = vmatpush.msra.mxu0 0.0
    %1325 = vmatpush.msra.mxu0 0.0
    %1326 = vmatpush.msra.mxu0 0.0
    %1327 = vmatpush.msra.mxu0 0.0
    %1328 = vmatpush.msra.mxu0 %v1303
    %1329 = vmatpush.msra.mxu0 %v1302
    %1330 = vmatpush.msra.mxu0 %v1301
    %1331 = vmatpush.msra.mxu0 %v1300
    %1332 = vmatmul.f32.gmra.mxu0 %v1305
    %v1333 = vpop.f32.mrf.mxu0
    %v1334 = vadd.f32 0.0, %v1333
    %1335 = vmatmul.f32.gmra.mxu0 %v1308
    %v1336 = vpop.f32.mrf.mxu0
    %v1337 = vadd.f32 0.0, %v1336
    %1338 = vmatmul.f32.gmra.mxu0 %v1311
    %v1339 = vpop.f32.mrf.mxu0
    %v1340 = vadd.f32 0.0, %v1339
    %1341 = vmatmul.f32.gmra.mxu0 %v1314
    %v1342 = vpop.f32.mrf.mxu0
    %v1343 = vadd.f32 0.0, %v1342
    %1344 = vdwg.mxu0
    %v1345 = vld [vmem:[%s45] sm:$0xff]
    %v1346 = vld [vmem:[%s45 + $0x8] sm:$0xff]
    %v1347 = vld [vmem:[%s45 + $0x10] sm:$0xff]
    %v1348 = vld [vmem:[%s45 + $0x18] sm:$0xff]
    %1349 = vmatpush.msra.mxu0 0.0
    %1350 = vmatpush.msra.mxu0 0.0
    %1351 = vmatpush.msra.mxu0 0.0
    %1352 = vmatpush.msra.mxu0 0.0
    %1353 = vmatpush.msra.mxu0 0.0
    %1354 = vmatpush.msra.mxu0 0.0
    %1355 = vmatpush.msra.mxu0 0.0
    %1356 = vmatpush.msra.mxu0 0.0
    %1357 = vmatpush.msra.mxu0 0.0
    %1358 = vmatpush.msra.mxu0 0.0
    %1359 = vmatpush.msra.mxu0 0.0
    %1360 = vmatpush.msra.mxu0 0.0
    %1361 = vmatpush.msra.mxu0 %v1348
    %1362 = vmatpush.msra.mxu0 %v1347
    %1363 = vmatpush.msra.mxu0 %v1346
    %1364 = vmatpush.msra.mxu0 %v1345
    %1365 = vmatmul.f32.gmra.mxu0 %v1305
    %v1366 = vpop.f32.mrf.mxu0
    %v1367 = vadd.f32 0.0, %v1366
    %1368 = vmatmul.f32.gmra.mxu0 %v1308
    %v1369 = vpop.f32.mrf.mxu0
    %v1370 = vadd.f32 0.0, %v1369
    %1371 = vmatmul.f32.gmra.mxu0 %v1311
    %v1372 = vpop.f32.mrf.mxu0
    %v1373 = vadd.f32 0.0, %v1372
    %1374 = vmatmul.f32.gmra.mxu0 %v1314
    %v1375 = vpop.f32.mrf.mxu0
    %v1376 = vadd.f32 0.0, %v1375
    %1377 = vdwg.mxu0
    %v1378 = vsub.f32 0.0, %v1334
    %v1379 = vsub.f32 0.0, %v1337
    %v1380 = vsub.f32 0.0, %v1340
    %v1381 = vsub.f32 0.0, %v1343
    %v1382 = vmul.f32 %v1378, 1.442695
    %v1383 = vpow.pop %v1382
    %v1384 = vmul.f32 %v1379, 1.442695
    %v1385 = vpow.pop %v1384
    %v1386 = vmul.f32 %v1380, 1.442695
    %v1387 = vpow.pop %v1386
    %v1388 = vmul.f32 %v1381, 1.442695
    %v1389 = vpow.pop %v1388
    %v1390 = vadd.f32 %v1383, 1.0
    %v1391 = vadd.f32 %v1385, 1.0
    %v1392 = vadd.f32 %v1387, 1.0
    %v1393 = vadd.f32 %v1389, 1.0
    %v1394 = vrcp.pop %v1390
    %v1395 = vmul.f32 %v1390, %v1394
    %v1396 = vsub.f32 1.0, %v1395
    %v1397 = vmul.f32 %v1394, %v1396
    %v1398 = vadd.f32 %v1394, %v1397
    %vm1399 = vweird.f32 %v1390
    %vm1400 = vweird.f32 %v1394
    %vm1401 = vmor %vm1399, %vm1400
    %v1402 = vsel %vm1401, %v1394, %v1398
    %v1403 = vand.u32 2147483647, %v1390
    %vm1404 = vcmp.eq.f32.partialorder %v1403, 8.507059e+37
    %v1405 = vand.u32 %v1390, 2147483648
    %v1406 = vor.u32 1.1754944e-38, %v1405
    %v1407 = vsel %vm1404, %v1406, %v1402
    %v1408 = vmul.f32 1.0, %v1407
    %v1409 = vrcp.pop %v1391
    %v1410 = vmul.f32 %v1391, %v1409
    %v1411 = vsub.f32 1.0, %v1410
    %v1412 = vmul.f32 %v1409, %v1411
    %v1413 = vadd.f32 %v1409, %v1412
    %vm1414 = vweird.f32 %v1391
    %vm1415 = vweird.f32 %v1409
    %vm1416 = vmor %vm1414, %vm1415
    %v1417 = vsel %vm1416, %v1409, %v1413
    %v1418 = vand.u32 2147483647, %v1391
    %vm1419 = vcmp.eq.f32.partialorder %v1418, 8.507059e+37
    %v1420 = vand.u32 %v1391, 2147483648
    %v1421 = vor.u32 1.1754944e-38, %v1420
    %v1422 = vsel %vm1419, %v1421, %v1417
    %v1423 = vmul.f32 1.0, %v1422
    %v1424 = vrcp.pop %v1392
    %v1425 = vmul.f32 %v1392, %v1424
    %v1426 = vsub.f32 1.0, %v1425
    %v1427 = vmul.f32 %v1424, %v1426
    %v1428 = vadd.f32 %v1424, %v1427
    %vm1429 = vweird.f32 %v1392
    %vm1430 = vweird.f32 %v1424
    %vm1431 = vmor %vm1429, %vm1430
    %v1432 = vsel %vm1431, %v1424, %v1428
    %v1433 = vand.u32 2147483647, %v1392
    %vm1434 = vcmp.eq.f32.partialorder %v1433, 8.507059e+37
    %v1435 = vand.u32 %v1392, 2147483648
    %v1436 = vor.u32 1.1754944e-38, %v1435
    %v1437 = vsel %vm1434, %v1436, %v1432
    %v1438 = vmul.f32 1.0, %v1437
    %v1439 = vrcp.pop %v1393
    %v1440 = vmul.f32 %v1393, %v1439
    %v1441 = vsub.f32 1.0, %v1440
    %v1442 = vmul.f32 %v1439, %v1441
    %v1443 = vadd.f32 %v1439, %v1442
    %vm1444 = vweird.f32 %v1393
    %vm1445 = vweird.f32 %v1439
    %vm1446 = vmor %vm1444, %vm1445
    %v1447 = vsel %vm1446, %v1439, %v1443
    %v1448 = vand.u32 2147483647, %v1393
    %vm1449 = vcmp.eq.f32.partialorder %v1448, 8.507059e+37
    %v1450 = vand.u32 %v1393, 2147483648
    %v1451 = vor.u32 1.1754944e-38, %v1450
    %v1452 = vsel %vm1449, %v1451, %v1447
    %v1453 = vmul.f32 1.0, %v1452
    %v1454 = vmul.f32 %v1334, %v1408
    %v1455 = vmul.f32 %v1337, %v1423
    %v1456 = vmul.f32 %v1340, %v1438
    %v1457 = vmul.f32 %v1343, %v1453
    %v1458 = vmul.f32 %v1454, %v1367
    %v1459 = vmul.f32 %v1455, %v1370
    %v1460 = vmul.f32 %v1456, %v1373
    %v1461 = vmul.f32 %v1457, %v1376
    %v1462 = vld [vmem:[%s47] sm:$0xff]
    %v1463 = vld [vmem:[%s47 + $0x8] sm:$0xff]
    %v1464 = vld [vmem:[%s47 + $0x10] sm:$0xff]
    %v1465 = vld [vmem:[%s47 + $0x18] sm:$0xff]
    %v1466 = vld [vmem:[%s47 + $0x20] sm:$0xff]
    %v1467 = vld [vmem:[%s47 + $0x28] sm:$0xff]
    %v1468 = vld [vmem:[%s47 + $0x30] sm:$0xff]
    %v1469 = vld [vmem:[%s47 + $0x38] sm:$0xff]
    %vm1470 = vcmask 523264
    %v1472 = vsel %vm1470, %v1458, 0
    %v1475 = vsel %vm1470, %v1459, 0
    %v1478 = vsel %vm1470, %v1460, 0
    %v1481 = vsel %vm1470, %v1461, 0
    %1483 = vmatpush.msra.mxu0 0.0
    %1484 = vmatpush.msra.mxu0 0.0
    %1485 = vmatpush.msra.mxu0 0.0
    %1486 = vmatpush.msra.mxu0 0.0
    %1487 = vmatpush.msra.mxu0 0.0
    %1488 = vmatpush.msra.mxu0 0.0
    %1489 = vmatpush.msra.mxu0 0.0
    %1490 = vmatpush.msra.mxu0 0.0
    %1491 = vmatpush.msra.mxu0 %v1469
    %1492 = vmatpush.msra.mxu0 %v1468
    %1493 = vmatpush.msra.mxu0 %v1467
    %1494 = vmatpush.msra.mxu0 %v1466
    %1495 = vmatpush.msra.mxu0 %v1465
    %1496 = vmatpush.msra.mxu0 %v1464
    %1497 = vmatpush.msra.mxu0 %v1463
    %1498 = vmatpush.msra.mxu0 %v1462
    %1499 = vmatmul.f32.gmra.mxu0 %v1472
    %v1500 = vpop.f32.mrf.mxu0
    %v1501 = vadd.f32 0.0, %v1500
    %1502 = vmatmul.f32.gmra.mxu0 %v1475
    %v1503 = vpop.f32.mrf.mxu0
    %v1504 = vadd.f32 0.0, %v1503
    %1505 = vmatmul.f32.gmra.mxu0 %v1478
    %v1506 = vpop.f32.mrf.mxu0
    %v1507 = vadd.f32 0.0, %v1506
    %1508 = vmatmul.f32.gmra.mxu0 %v1481
    %v1509 = vpop.f32.mrf.mxu0
    %v1510 = vadd.f32 0.0, %v1509
    %1511 = vdwg.mxu0
    %v1512 = vadd.f32 %v1192, %v1501
    %v1513 = vadd.f32 %v1193, %v1504
    %v1514 = vadd.f32 %v1194, %v1507
    %v1515 = vadd.f32 %v1195, %v1510
    %s1516 = scalar_lea.vmem %s19, 1
    %v1517 = vld [vmem:[%s1516] sm:$0x1]
    %s1518 = scalar_lea.vmem %s21, 1
    %v1519 = vld [vmem:[%s1518] sm:$0x1]
    %v1520 = vsel %vm193, %v1512, 0.0
    %1521 = vadd.xlane.f32.xlu0 %v1520
    %v1522 = vpop.xlane.xlu0 %1521
    %v1523 = vsel %vm193, %v1513, 0.0
    %1524 = vadd.xlane.f32.xlu0 %v1523
    %v1525 = vpop.xlane.xlu0 %1524
    %v1526 = vsel %vm193, %v1514, 0.0
    %1527 = vadd.xlane.f32.xlu0 %v1526
    %v1528 = vpop.xlane.xlu0 %1527
    %v1529 = vsel %vm193, %v1515, 0.0
    %1530 = vadd.xlane.f32.xlu0 %v1529
    %v1531 = vpop.xlane.xlu0 %1530
    %v1532 = vmul.f32 %v1522, %v212
    %v1533 = vmul.f32 %v1525, %v212
    %v1534 = vmul.f32 %v1528, %v212
    %v1535 = vmul.f32 %v1531, %v212
    %v1536 = vsub.f32 %v1512, %v1532
    %v1537 = vsub.f32 %v1513, %v1533
    %v1538 = vsub.f32 %v1514, %v1534
    %v1539 = vsub.f32 %v1515, %v1535
    %v1540 = vmul.f32 %v1536, %v1536
    %v1541 = vmul.f32 %v1537, %v1537
    %v1542 = vmul.f32 %v1538, %v1538
    %v1543 = vmul.f32 %v1539, %v1539
    %v1544 = vsel %vm193, %v1540, 0.0
    %1545 = vadd.xlane.f32.xlu0 %v1544
    %v1546 = vpop.xlane.xlu0 %1545
    %v1547 = vsel %vm193, %v1541, 0.0
    %1548 = vadd.xlane.f32.xlu0 %v1547
    %v1549 = vpop.xlane.xlu0 %1548
    %v1550 = vsel %vm193, %v1542, 0.0
    %1551 = vadd.xlane.f32.xlu0 %v1550
    %v1552 = vpop.xlane.xlu0 %1551
    %v1553 = vsel %vm193, %v1543, 0.0
    %1554 = vadd.xlane.f32.xlu0 %v1553
    %v1555 = vpop.xlane.xlu0 %1554
    %v1556 = vmul.f32 %v1546, %v212
    %v1557 = vmul.f32 %v1549, %v212
    %v1558 = vmul.f32 %v1552, %v212
    %v1559 = vmul.f32 %v1555, %v212
    %v1560 = vadd.f32 %v1556, 1e-05
    %v1561 = vadd.f32 %v1557, 1e-05
    %v1562 = vadd.f32 %v1558, 1e-05
    %v1563 = vadd.f32 %v1559, 1e-05
    %v1564 = vrsqrt.pop %v1560
    %v1565 = vmul.f32 %v1564, %v1560
    %v1566 = vmul.f32 %v1565, %v1564
    %v1567 = vmul.f32 0.5, %v1566
    %v1568 = vsub.f32 1.5, %v1567
    %v1569 = vmul.f32 %v1564, %v1568
    %vm1570 = vweird.f32 %v1560
    %vm1571 = vweird.f32 %v1564
    %vm1572 = vmor %vm1570, %vm1571
    %v1573 = vsel %vm1572, %v1564, %v1569
    %v1574 = vrsqrt.pop %v1561
    %v1575 = vmul.f32 %v1574, %v1561
    %v1576 = vmul.f32 %v1575, %v1574
    %v1577 = vmul.f32 0.5, %v1576
    %v1578 = vsub.f32 1.5, %v1577
    %v1579 = vmul.f32 %v1574, %v1578
    %vm1580 = vweird.f32 %v1561
    %vm1581 = vweird.f32 %v1574
    %vm1582 = vmor %vm1580, %vm1581
    %v1583 = vsel %vm1582, %v1574, %v1579
    %v1584 = vrsqrt.pop %v1562
    %v1585 = vmul.f32 %v1584, %v1562
    %v1586 = vmul.f32 %v1585, %v1584
    %v1587 = vmul.f32 0.5, %v1586
    %v1588 = vsub.f32 1.5, %v1587
    %v1589 = vmul.f32 %v1584, %v1588
    %vm1590 = vweird.f32 %v1562
    %vm1591 = vweird.f32 %v1584
    %vm1592 = vmor %vm1590, %vm1591
    %v1593 = vsel %vm1592, %v1584, %v1589
    %v1594 = vrsqrt.pop %v1563
    %v1595 = vmul.f32 %v1594, %v1563
    %v1596 = vmul.f32 %v1595, %v1594
    %v1597 = vmul.f32 0.5, %v1596
    %v1598 = vsub.f32 1.5, %v1597
    %v1599 = vmul.f32 %v1594, %v1598
    %vm1600 = vweird.f32 %v1563
    %vm1601 = vweird.f32 %v1594
    %vm1602 = vmor %vm1600, %vm1601
    %v1603 = vsel %vm1602, %v1594, %v1599
    %v1604 = vmul.f32 %v1536, %v1573
    %v1605 = vmul.f32 %v1537, %v1583
    %v1606 = vmul.f32 %v1538, %v1593
    %v1607 = vmul.f32 %v1539, %v1603
    %v1609 = vperm.slane %v1517, 0
    %v1611 = vmul.f32 %v1604, %v1609
    %v1612 = vmul.f32 %v1605, %v1609
    %v1613 = vmul.f32 %v1606, %v1609
    %v1614 = vmul.f32 %v1607, %v1609
    %v1616 = vperm.slane %v1519, 0
    %v1618 = vadd.f32 %v1611, %v1616
    %v1619 = vadd.f32 %v1612, %v1616
    %v1620 = vadd.f32 %v1613, %v1616
    %v1621 = vadd.f32 %v1614, %v1616
    %s1622 = scalar_lea.vmem %s23, 32
    %v1623 = vld [vmem:[%s1622] sm:$0xff]
    %v1624 = vld [vmem:[%s1622 + $0x8] sm:$0xff]
    %v1625 = vld [vmem:[%s1622 + $0x10] sm:$0xff]
    %v1626 = vld [vmem:[%s1622 + $0x18] sm:$0xff]
    %s1627 = scalar_lea.vmem %s25, 1
    %v1628 = vld [vmem:[%s1627] sm:$0x1]
    %v1630 = vperm.slane %v1628, 0
    %v1633 = vsel %vm193, %v1618, 0
    %v1636 = vsel %vm193, %v1619, 0
    %v1639 = vsel %vm193, %v1620, 0
    %v1642 = vsel %vm193, %v1621, 0
    %1644 = vmatpush.msra.mxu0 0.0
    %1645 = vmatpush.msra.mxu0 0.0
    %1646 = vmatpush.msra.mxu0 0.0
    %1647 = vmatpush.msra.mxu0 0.0
    %1648 = vmatpush.msra.mxu0 0.0
    %1649 = vmatpush.msra.mxu0 0.0
    %1650 = vmatpush.msra.mxu0 0.0
    %1651 = vmatpush.msra.mxu0 0.0
    %1652 = vmatpush.msra.mxu0 0.0
    %1653 = vmatpush.msra.mxu0 0.0
    %1654 = vmatpush.msra.mxu0 0.0
    %1655 = vmatpush.msra.mxu0 0.0
    %1656 = vmatpush.msra.mxu0 %v1626
    %1657 = vmatpush.msra.mxu0 %v1625
    %1658 = vmatpush.msra.mxu0 %v1624
    %1659 = vmatpush.msra.mxu0 %v1623
    %1660 = vmatmul.f32.gmra.mxu0 %v1633
    %v1661 = vpop.f32.mrf.mxu0
    %v1662 = vadd.f32 %v1630, %v1661
    %1663 = vmatmul.f32.gmra.mxu0 %v1636
    %v1664 = vpop.f32.mrf.mxu0
    %v1665 = vadd.f32 %v1630, %v1664
    %1666 = vmatmul.f32.gmra.mxu0 %v1639
    %v1667 = vpop.f32.mrf.mxu0
    %v1668 = vadd.f32 %v1630, %v1667
    %1669 = vmatmul.f32.gmra.mxu0 %v1642
    %v1670 = vpop.f32.mrf.mxu0
    %v1671 = vadd.f32 %v1630, %v1670
    %1672 = vdwg.mxu0
    %v1673 = vmul.f32 %v1662, %v179
    %v1674 = vmul.f32 %v1665, %v180
    %v1675 = vmul.f32 %v1668, %v181
    %v1676 = vmul.f32 %v1671, %v182
    %v1678 = vsel %vm193, %v1662, 0
    %v1681 = vsel %vm193, %v1665, 0
    %v1684 = vsel %vm193, %v1668, 0
    %v1687 = vsel %vm193, %v1671, 0
    %1689 = vmatpush.msra.mxu0 0.0
    %1690 = vmatpush.msra.mxu0 0.0
    %1691 = vmatpush.msra.mxu0 0.0
    %1692 = vmatpush.msra.mxu0 0.0
    %1693 = vmatpush.msra.mxu0 0.0
    %1694 = vmatpush.msra.mxu0 0.0
    %1695 = vmatpush.msra.mxu0 0.0
    %1696 = vmatpush.msra.mxu0 0.0
    %1697 = vmatpush.msra.mxu0 0.0
    %1698 = vmatpush.msra.mxu0 0.0
    %1699 = vmatpush.msra.mxu0 0.0
    %1700 = vmatpush.msra.mxu0 0.0
    %1701 = vmatpush.msra.mxu0 %v190
    %1702 = vmatpush.msra.mxu0 %v189
    %1703 = vmatpush.msra.mxu0 %v188
    %1704 = vmatpush.msra.mxu0 %v187
    %1705 = vmatmul.f32.gmra.mxu0 %v1678
    %v1706 = vpop.f32.mrf.mxu0
    %v1707 = vadd.f32 0.0, %v1706
    %1708 = vmatmul.f32.gmra.mxu0 %v1681
    %v1709 = vpop.f32.mrf.mxu0
    %v1710 = vadd.f32 0.0, %v1709
    %1711 = vmatmul.f32.gmra.mxu0 %v1684
    %v1712 = vpop.f32.mrf.mxu0
    %v1713 = vadd.f32 0.0, %v1712
    %1714 = vmatmul.f32.gmra.mxu0 %v1687
    %v1715 = vpop.f32.mrf.mxu0
    %v1716 = vadd.f32 0.0, %v1715
    %1717 = vdwg.mxu0
    %v1718 = vmul.f32 %v1707, %v183
    %v1719 = vmul.f32 %v1710, %v184
    %v1720 = vmul.f32 %v1713, %v185
    %v1721 = vmul.f32 %v1716, %v186
    %v1722 = vadd.f32 %v1673, %v1718
    %v1723 = vadd.f32 %v1674, %v1719
    %v1724 = vadd.f32 %v1675, %v1720
    %v1725 = vadd.f32 %v1676, %v1721
    %s1726 = scalar_lea.vmem %s27, 32
    %v1727 = vld [vmem:[%s1726] sm:$0xff]
    %v1728 = vld [vmem:[%s1726 + $0x8] sm:$0xff]
    %v1729 = vld [vmem:[%s1726 + $0x10] sm:$0xff]
    %v1730 = vld [vmem:[%s1726 + $0x18] sm:$0xff]
    %s1731 = scalar_lea.vmem %s29, 1
    %v1732 = vld [vmem:[%s1731] sm:$0x1]
    %v1734 = vperm.slane %v1732, 0
    %1736 = vmatpush.msra.mxu0 0.0
    %1737 = vmatpush.msra.mxu0 0.0
    %1738 = vmatpush.msra.mxu0 0.0
    %1739 = vmatpush.msra.mxu0 0.0
    %1740 = vmatpush.msra.mxu0 0.0
    %1741 = vmatpush.msra.mxu0 0.0
    %1742 = vmatpush.msra.mxu0 0.0
    %1743 = vmatpush.msra.mxu0 0.0
    %1744 = vmatpush.msra.mxu0 0.0
    %1745 = vmatpush.msra.mxu0 0.0
    %1746 = vmatpush.msra.mxu0 0.0
    %1747 = vmatpush.msra.mxu0 0.0
    %1748 = vmatpush.msra.mxu0 %v1730
    %1749 = vmatpush.msra.mxu0 %v1729
    %1750 = vmatpush.msra.mxu0 %v1728
    %1751 = vmatpush.msra.mxu0 %v1727
    %1752 = vmatmul.f32.gmra.mxu0 %v1633
    %v1753 = vpop.f32.mrf.mxu0
    %v1754 = vadd.f32 %v1734, %v1753
    %1755 = vmatmul.f32.gmra.mxu0 %v1636
    %v1756 = vpop.f32.mrf.mxu0
    %v1757 = vadd.f32 %v1734, %v1756
    %1758 = vmatmul.f32.gmra.mxu0 %v1639
    %v1759 = vpop.f32.mrf.mxu0
    %v1760 = vadd.f32 %v1734, %v1759
    %1761 = vmatmul.f32.gmra.mxu0 %v1642
    %v1762 = vpop.f32.mrf.mxu0
    %v1763 = vadd.f32 %v1734, %v1762
    %1764 = vdwg.mxu0
    %v1765 = vmul.f32 %v1754, %v179
    %v1766 = vmul.f32 %v1757, %v180
    %v1767 = vmul.f32 %v1760, %v181
    %v1768 = vmul.f32 %v1763, %v182
    %v1770 = vsel %vm193, %v1754, 0
    %v1773 = vsel %vm193, %v1757, 0
    %v1776 = vsel %vm193, %v1760, 0
    %v1779 = vsel %vm193, %v1763, 0
    %1781 = vmatpush.msra.mxu0 0.0
    %1782 = vmatpush.msra.mxu0 0.0
    %1783 = vmatpush.msra.mxu0 0.0
    %1784 = vmatpush.msra.mxu0 0.0
    %1785 = vmatpush.msra.mxu0 0.0
    %1786 = vmatpush.msra.mxu0 0.0
    %1787 = vmatpush.msra.mxu0 0.0
    %1788 = vmatpush.msra.mxu0 0.0
    %1789 = vmatpush.msra.mxu0 0.0
    %1790 = vmatpush.msra.mxu0 0.0
    %1791 = vmatpush.msra.mxu0 0.0
    %1792 = vmatpush.msra.mxu0 0.0
    %1793 = vmatpush.msra.mxu0 %v190
    %1794 = vmatpush.msra.mxu0 %v189
    %1795 = vmatpush.msra.mxu0 %v188
    %1796 = vmatpush.msra.mxu0 %v187
    %1797 = vmatmul.f32.gmra.mxu0 %v1770
    %v1798 = vpop.f32.mrf.mxu0
    %v1799 = vadd.f32 0.0, %v1798
    %1800 = vmatmul.f32.gmra.mxu0 %v1773
    %v1801 = vpop.f32.mrf.mxu0
    %v1802 = vadd.f32 0.0, %v1801
    %1803 = vmatmul.f32.gmra.mxu0 %v1776
    %v1804 = vpop.f32.mrf.mxu0
    %v1805 = vadd.f32 0.0, %v1804
    %1806 = vmatmul.f32.gmra.mxu0 %v1779
    %v1807 = vpop.f32.mrf.mxu0
    %v1808 = vadd.f32 0.0, %v1807
    %1809 = vdwg.mxu0
    %v1810 = vmul.f32 %v1799, %v183
    %v1811 = vmul.f32 %v1802, %v184
    %v1812 = vmul.f32 %v1805, %v185
    %v1813 = vmul.f32 %v1808, %v186
    %v1814 = vadd.f32 %v1765, %v1810
    %v1815 = vadd.f32 %v1766, %v1811
    %v1816 = vadd.f32 %v1767, %v1812
    %v1817 = vadd.f32 %v1768, %v1813
    %s1818 = scalar_lea.vmem %s31, 32
    %v1819 = vld [vmem:[%s1818] sm:$0xff]
    %v1820 = vld [vmem:[%s1818 + $0x8] sm:$0xff]
    %v1821 = vld [vmem:[%s1818 + $0x10] sm:$0xff]
    %v1822 = vld [vmem:[%s1818 + $0x18] sm:$0xff]
    %s1823 = scalar_lea.vmem %s33, 1
    %v1824 = vld [vmem:[%s1823] sm:$0x1]
    %v1826 = vperm.slane %v1824, 0
    %1828 = vmatpush.msra.mxu0 0.0
    %1829 = vmatpush.msra.mxu0 0.0
    %1830 = vmatpush.msra.mxu0 0.0
    %1831 = vmatpush.msra.mxu0 0.0
    %1832 = vmatpush.msra.mxu0 0.0
    %1833 = vmatpush.msra.mxu0 0.0
    %1834 = vmatpush.msra.mxu0 0.0
    %1835 = vmatpush.msra.mxu0 0.0
    %1836 = vmatpush.msra.mxu0 0.0
    %1837 = vmatpush.msra.mxu0 0.0
    %1838 = vmatpush.msra.mxu0 0.0
    %1839 = vmatpush.msra.mxu0 0.0
    %1840 = vmatpush.msra.mxu0 %v1822
    %1841 = vmatpush.msra.mxu0 %v1821
    %1842 = vmatpush.msra.mxu0 %v1820
    %1843 = vmatpush.msra.mxu0 %v1819
    %1844 = vmatmul.f32.gmra.mxu0 %v1633
    %v1845 = vpop.f32.mrf.mxu0
    %v1846 = vadd.f32 %v1826, %v1845
    %1847 = vmatmul.f32.gmra.mxu0 %v1636
    %v1848 = vpop.f32.mrf.mxu0
    %v1849 = vadd.f32 %v1826, %v1848
    %1850 = vmatmul.f32.gmra.mxu0 %v1639
    %v1851 = vpop.f32.mrf.mxu0
    %v1852 = vadd.f32 %v1826, %v1851
    %1853 = vmatmul.f32.gmra.mxu0 %v1642
    %v1854 = vpop.f32.mrf.mxu0
    %v1855 = vadd.f32 %v1826, %v1854
    %1856 = vdwg.mxu0
    %v1857 = vld [vmem:[%s15] sm:$0x1]
    %v1859 = vperm.slane %v1857, 0
    %v1861 = vmul.f32 %v1722, %v1859
    %v1862 = vmul.f32 %v1723, %v1859
    %v1863 = vmul.f32 %v1724, %v1859
    %v1864 = vmul.f32 %v1725, %v1859
    %v1866 = vsel %vm193, %v1861, 0
    %v1869 = vsel %vm193, %v1862, 0
    %v1872 = vsel %vm193, %v1863, 0
    %v1875 = vsel %vm193, %v1864, 0
    %v1878 = vsel %vm193, %v1814, 0
    %v1881 = vsel %vm193, %v1815, 0
    %v1884 = vsel %vm193, %v1816, 0
    %v1887 = vsel %vm193, %v1817, 0
    %1889 = vmatpush.xpose.msra.mxu0 0.0
    %1890 = vmatpush.xpose.msra.mxu0 0.0
    %1891 = vmatpush.xpose.msra.mxu0 0.0
    %1892 = vmatpush.xpose.msra.mxu0 0.0
    %1893 = vmatpush.xpose.msra.mxu0 0.0
    %1894 = vmatpush.xpose.msra.mxu0 0.0
    %1895 = vmatpush.xpose.msra.mxu0 0.0
    %1896 = vmatpush.xpose.msra.mxu0 0.0
    %1897 = vmatpush.xpose.msra.mxu0 0.0
    %1898 = vmatpush.xpose.msra.mxu0 0.0
    %1899 = vmatpush.xpose.msra.mxu0 0.0
    %1900 = vmatpush.xpose.msra.mxu0 0.0
    %1901 = vmatpush.xpose.msra.mxu0 %v1887
    %1902 = vmatpush.xpose.msra.mxu0 %v1884
    %1903 = vmatpush.xpose.msra.mxu0 %v1881
    %1904 = vmatpush.xpose.msra.mxu0 %v1878
    %1905 = vmatmul.f32.gmra.mxu0 %v1866
    %v1906 = vpop.f32.mrf.mxu0
    %v1907 = vadd.f32 0.0, %v1906
    %1908 = vmatmul.f32.gmra.mxu0 %v1869
    %v1909 = vpop.f32.mrf.mxu0
    %v1910 = vadd.f32 0.0, %v1909
    %1911 = vmatmul.f32.gmra.mxu0 %v1872
    %v1912 = vpop.f32.mrf.mxu0
    %v1913 = vadd.f32 0.0, %v1912
    %1914 = vmatmul.f32.gmra.mxu0 %v1875
    %v1915 = vpop.f32.mrf.mxu0
    %v1916 = vadd.f32 0.0, %v1915
    %1917 = vdwg.mxu0
    %v1918 = vmul.f32 %v1907, 0.35355338
    %v1919 = vmul.f32 %v1910, 0.35355338
    %v1920 = vmul.f32 %v1913, 0.35355338
    %v1921 = vmul.f32 %v1916, 0.35355338
    %v1922 = vadd.f32 %v1918, %v171
    %v1923 = vadd.f32 %v1919, %v172
    %v1924 = vadd.f32 %v1920, %v173
    %v1925 = vadd.f32 %v1921, %v174
    %v1926 = vsel %vm193, %v1922, -inf
    %1927 = vmax.xlane.f32.xlu0 %v1926
    %v1928 = vpop.xlane.xlu0 %1927
    %v1929 = vsel %vm193, %v1923, -inf
    %1930 = vmax.xlane.f32.xlu0 %v1929
    %v1931 = vpop.xlane.xlu0 %1930
    %v1932 = vsel %vm193, %v1924, -inf
    %1933 = vmax.xlane.f32.xlu0 %v1932
    %v1934 = vpop.xlane.xlu0 %1933
    %v1935 = vsel %vm193, %v1925, -inf
    %1936 = vmax.xlane.f32.xlu0 %v1935
    %v1937 = vpop.xlane.xlu0 %1936
    %v1938 = vsub.f32 %v1922, %v1928
    %v1939 = vsub.f32 %v1923, %v1931
    %v1940 = vsub.f32 %v1924, %v1934
    %v1941 = vsub.f32 %v1925, %v1937
    %v1942 = vmul.f32 %v1938, 1.442695
    %v1943 = vpow.pop %v1942
    %v1944 = vmul.f32 %v1939, 1.442695
    %v1945 = vpow.pop %v1944
    %v1946 = vmul.f32 %v1940, 1.442695
    %v1947 = vpow.pop %v1946
    %v1948 = vmul.f32 %v1941, 1.442695
    %v1949 = vpow.pop %v1948
    %v1950 = vsel %vm193, %v1943, 0.0
    %1951 = vadd.xlane.f32.xlu0 %v1950
    %v1952 = vpop.xlane.xlu0 %1951
    %v1953 = vsel %vm193, %v1945, 0.0
    %1954 = vadd.xlane.f32.xlu0 %v1953
    %v1955 = vpop.xlane.xlu0 %1954
    %v1956 = vsel %vm193, %v1947, 0.0
    %1957 = vadd.xlane.f32.xlu0 %v1956
    %v1958 = vpop.xlane.xlu0 %1957
    %v1959 = vsel %vm193, %v1949, 0.0
    %1960 = vadd.xlane.f32.xlu0 %v1959
    %v1961 = vpop.xlane.xlu0 %1960
    %v1962 = vrcp.pop %v1952
    %v1963 = vrcp.pop %v1955
    %v1964 = vrcp.pop %v1958
    %v1965 = vrcp.pop %v1961
    %v1966 = vmul.f32 %v1943, %v1962
    %v1967 = vmul.f32 %v1945, %v1963
    %v1968 = vmul.f32 %v1947, %v1964
    %v1969 = vmul.f32 %v1949, %v1965
    %v1970 = vmul.f32 %v1846, %v1859
    %v1971 = vmul.f32 %v1849, %v1859
    %v1972 = vmul.f32 %v1852, %v1859
    %v1973 = vmul.f32 %v1855, %v1859
    %v1974 = vld [vmem:[%s649] sm:$0x1]
    %v1976 = vperm.slane %v1974, 0
    %v1978 = vmul.f32 %v1722, %v1976
    %v1979 = vmul.f32 %v1723, %v1976
    %v1980 = vmul.f32 %v1724, %v1976
    %v1981 = vmul.f32 %v1725, %v1976
    %v1983 = vsel %vm193, %v1978, 0
    %v1986 = vsel %vm193, %v1979, 0
    %v1989 = vsel %vm193, %v1980, 0
    %v1992 = vsel %vm193, %v1981, 0
    %1994 = vmatpush.xpose.msra.mxu0 0.0
    %1995 = vmatpush.xpose.msra.mxu0 0.0
    %1996 = vmatpush.xpose.msra.mxu0 0.0
    %1997 = vmatpush.xpose.msra.mxu0 0.0
    %1998 = vmatpush.xpose.msra.mxu0 0.0
    %1999 = vmatpush.xpose.msra.mxu0 0.0
    %2000 = vmatpush.xpose.msra.mxu0 0.0
    %2001 = vmatpush.xpose.msra.mxu0 0.0
    %2002 = vmatpush.xpose.msra.mxu0 0.0
    %2003 = vmatpush.xpose.msra.mxu0 0.0
    %2004 = vmatpush.xpose.msra.mxu0 0.0
    %2005 = vmatpush.xpose.msra.mxu0 0.0
    %2006 = vmatpush.xpose.msra.mxu0 %v1887
    %2007 = vmatpush.xpose.msra.mxu0 %v1884
    %2008 = vmatpush.xpose.msra.mxu0 %v1881
    %2009 = vmatpush.xpose.msra.mxu0 %v1878
    %2010 = vmatmul.f32.gmra.mxu0 %v1983
    %v2011 = vpop.f32.mrf.mxu0
    %v2012 = vadd.f32 0.0, %v2011
    %2013 = vmatmul.f32.gmra.mxu0 %v1986
    %v2014 = vpop.f32.mrf.mxu0
    %v2015 = vadd.f32 0.0, %v2014
    %2016 = vmatmul.f32.gmra.mxu0 %v1989
    %v2017 = vpop.f32.mrf.mxu0
    %v2018 = vadd.f32 0.0, %v2017
    %2019 = vmatmul.f32.gmra.mxu0 %v1992
    %v2020 = vpop.f32.mrf.mxu0
    %v2021 = vadd.f32 0.0, %v2020
    %2022 = vdwg.mxu0
    %v2023 = vmul.f32 %v2012, 0.35355338
    %v2024 = vmul.f32 %v2015, 0.35355338
    %v2025 = vmul.f32 %v2018, 0.35355338
    %v2026 = vmul.f32 %v2021, 0.35355338
    %v2027 = vadd.f32 %v2023, %v171
    %v2028 = vadd.f32 %v2024, %v172
    %v2029 = vadd.f32 %v2025, %v173
    %v2030 = vadd.f32 %v2026, %v174
    %v2031 = vsel %vm193, %v2027, -inf
    %2032 = vmax.xlane.f32.xlu0 %v2031
    %v2033 = vpop.xlane.xlu0 %2032
    %v2034 = vsel %vm193, %v2028, -inf
    %2035 = vmax.xlane.f32.xlu0 %v2034
    %v2036 = vpop.xlane.xlu0 %2035
    %v2037 = vsel %vm193, %v2029, -inf
    %2038 = vmax.xlane.f32.xlu0 %v2037
    %v2039 = vpop.xlane.xlu0 %2038
    %v2040 = vsel %vm193, %v2030, -inf
    %2041 = vmax.xlane.f32.xlu0 %v2040
    %v2042 = vpop.xlane.xlu0 %2041
    %v2043 = vsub.f32 %v2027, %v2033
    %v2044 = vsub.f32 %v2028, %v2036
    %v2045 = vsub.f32 %v2029, %v2039
    %v2046 = vsub.f32 %v2030, %v2042
    %v2047 = vmul.f32 %v2043, 1.442695
    %v2048 = vpow.pop %v2047
    %v2049 = vmul.f32 %v2044, 1.442695
    %v2050 = vpow.pop %v2049
    %v2051 = vmul.f32 %v2045, 1.442695
    %v2052 = vpow.pop %v2051
    %v2053 = vmul.f32 %v2046, 1.442695
    %v2054 = vpow.pop %v2053
    %v2055 = vsel %vm193, %v2048, 0.0
    %2056 = vadd.xlane.f32.xlu0 %v2055
    %v2057 = vpop.xlane.xlu0 %2056
    %v2058 = vsel %vm193, %v2050, 0.0
    %2059 = vadd.xlane.f32.xlu0 %v2058
    %v2060 = vpop.xlane.xlu0 %2059
    %v2061 = vsel %vm193, %v2052, 0.0
    %2062 = vadd.xlane.f32.xlu0 %v2061
    %v2063 = vpop.xlane.xlu0 %2062
    %v2064 = vsel %vm193, %v2054, 0.0
    %2065 = vadd.xlane.f32.xlu0 %v2064
    %v2066 = vpop.xlane.xlu0 %2065
    %v2067 = vrcp.pop %v2057
    %v2068 = vrcp.pop %v2060
    %v2069 = vrcp.pop %v2063
    %v2070 = vrcp.pop %v2066
    %v2071 = vmul.f32 %v2048, %v2067
    %v2072 = vmul.f32 %v2050, %v2068
    %v2073 = vmul.f32 %v2052, %v2069
    %v2074 = vmul.f32 %v2054, %v2070
    %v2075 = vmul.f32 %v1846, %v1976
    %v2076 = vmul.f32 %v1849, %v1976
    %v2077 = vmul.f32 %v1852, %v1976
    %v2078 = vmul.f32 %v1855, %v1976
    %v2080 = vsel %vm193, %v2071, 0
    %v2083 = vsel %vm193, %v2072, 0
    %v2086 = vsel %vm193, %v2073, 0
    %v2089 = vsel %vm193, %v2074, 0
    %2091 = vmatpush.msra.mxu0 0.0
    %2092 = vmatpush.msra.mxu0 0.0
    %2093 = vmatpush.msra.mxu0 0.0
    %2094 = vmatpush.msra.mxu0 0.0
    %2095 = vmatpush.msra.mxu0 0.0
    %2096 = vmatpush.msra.mxu0 0.0
    %2097 = vmatpush.msra.mxu0 0.0
    %2098 = vmatpush.msra.mxu0 0.0
    %2099 = vmatpush.msra.mxu0 0.0
    %2100 = vmatpush.msra.mxu0 0.0
    %2101 = vmatpush.msra.mxu0 0.0
    %2102 = vmatpush.msra.mxu0 0.0
    %2103 = vmatpush.msra.mxu0 %v2078
    %2104 = vmatpush.msra.mxu0 %v2077
    %2105 = vmatpush.msra.mxu0 %v2076
    %2106 = vmatpush.msra.mxu0 %v2075
    %2107 = vmatmul.f32.gmra.mxu0 %v2080
    %v2108 = vpop.f32.mrf.mxu0
    %v2109 = vadd.f32 0.0, %v2108
    %2110 = vmatmul.f32.gmra.mxu0 %v2083
    %v2111 = vpop.f32.mrf.mxu0
    %v2112 = vadd.f32 0.0, %v2111
    %2113 = vmatmul.f32.gmra.mxu0 %v2086
    %v2114 = vpop.f32.mrf.mxu0
    %v2115 = vadd.f32 0.0, %v2114
    %2116 = vmatmul.f32.gmra.mxu0 %v2089
    %v2117 = vpop.f32.mrf.mxu0
    %v2118 = vadd.f32 0.0, %v2117
    %2119 = vdwg.mxu0
    %v2121 = vsel %vm193, %v1966, 0
    %v2124 = vsel %vm193, %v1967, 0
    %v2127 = vsel %vm193, %v1968, 0
    %v2130 = vsel %vm193, %v1969, 0
    %2132 = vmatpush.msra.mxu0 0.0
    %2133 = vmatpush.msra.mxu0 0.0
    %2134 = vmatpush.msra.mxu0 0.0
    %2135 = vmatpush.msra.mxu0 0.0
    %2136 = vmatpush.msra.mxu0 0.0
    %2137 = vmatpush.msra.mxu0 0.0
    %2138 = vmatpush.msra.mxu0 0.0
    %2139 = vmatpush.msra.mxu0 0.0
    %2140 = vmatpush.msra.mxu0 0.0
    %2141 = vmatpush.msra.mxu0 0.0
    %2142 = vmatpush.msra.mxu0 0.0
    %2143 = vmatpush.msra.mxu0 0.0
    %2144 = vmatpush.msra.mxu0 %v1973
    %2145 = vmatpush.msra.mxu0 %v1972
    %2146 = vmatpush.msra.mxu0 %v1971
    %2147 = vmatpush.msra.mxu0 %v1970
    %2148 = vmatmul.f32.gmra.mxu0 %v2121
    %v2149 = vpop.f32.mrf.mxu0
    %v2150 = vadd.f32 %v2109, %v2149
    %2151 = vmatmul.f32.gmra.mxu0 %v2124
    %v2152 = vpop.f32.mrf.mxu0
    %v2153 = vadd.f32 %v2112, %v2152
    %2154 = vmatmul.f32.gmra.mxu0 %v2127
    %v2155 = vpop.f32.mrf.mxu0
    %v2156 = vadd.f32 %v2115, %v2155
    %2157 = vmatmul.f32.gmra.mxu0 %v2130
    %v2158 = vpop.f32.mrf.mxu0
    %v2159 = vadd.f32 %v2118, %v2158
    %2160 = vdwg.mxu0
    %v2161 = vld [vmem:[%s837] sm:$0x1]
    %v2163 = vperm.slane %v2161, 0
    %v2165 = vmul.f32 %v1722, %v2163
    %v2166 = vmul.f32 %v1723, %v2163
    %v2167 = vmul.f32 %v1724, %v2163
    %v2168 = vmul.f32 %v1725, %v2163
    %v2170 = vsel %vm193, %v2165, 0
    %v2173 = vsel %vm193, %v2166, 0
    %v2176 = vsel %vm193, %v2167, 0
    %v2179 = vsel %vm193, %v2168, 0
    %2181 = vmatpush.xpose.msra.mxu0 0.0
    %2182 = vmatpush.xpose.msra.mxu0 0.0
    %2183 = vmatpush.xpose.msra.mxu0 0.0
    %2184 = vmatpush.xpose.msra.mxu0 0.0
    %2185 = vmatpush.xpose.msra.mxu0 0.0
    %2186 = vmatpush.xpose.msra.mxu0 0.0
    %2187 = vmatpush.xpose.msra.mxu0 0.0
    %2188 = vmatpush.xpose.msra.mxu0 0.0
    %2189 = vmatpush.xpose.msra.mxu0 0.0
    %2190 = vmatpush.xpose.msra.mxu0 0.0
    %2191 = vmatpush.xpose.msra.mxu0 0.0
    %2192 = vmatpush.xpose.msra.mxu0 0.0
    %2193 = vmatpush.xpose.msra.mxu0 %v1887
    %2194 = vmatpush.xpose.msra.mxu0 %v1884
    %2195 = vmatpush.xpose.msra.mxu0 %v1881
    %2196 = vmatpush.xpose.msra.mxu0 %v1878
    %2197 = vmatmul.f32.gmra.mxu0 %v2170
    %v2198 = vpop.f32.mrf.mxu0
    %v2199 = vadd.f32 0.0, %v2198
    %2200 = vmatmul.f32.gmra.mxu0 %v2173
    %v2201 = vpop.f32.mrf.mxu0
    %v2202 = vadd.f32 0.0, %v2201
    %2203 = vmatmul.f32.gmra.mxu0 %v2176
    %v2204 = vpop.f32.mrf.mxu0
    %v2205 = vadd.f32 0.0, %v2204
    %2206 = vmatmul.f32.gmra.mxu0 %v2179
    %v2207 = vpop.f32.mrf.mxu0
    %v2208 = vadd.f32 0.0, %v2207
    %2209 = vdwg.mxu0
    %v2210 = vmul.f32 %v2199, 0.35355338
    %v2211 = vmul.f32 %v2202, 0.35355338
    %v2212 = vmul.f32 %v2205, 0.35355338
    %v2213 = vmul.f32 %v2208, 0.35355338
    %v2214 = vadd.f32 %v2210, %v171
    %v2215 = vadd.f32 %v2211, %v172
    %v2216 = vadd.f32 %v2212, %v173
    %v2217 = vadd.f32 %v2213, %v174
    %v2218 = vsel %vm193, %v2214, -inf
    %2219 = vmax.xlane.f32.xlu0 %v2218
    %v2220 = vpop.xlane.xlu0 %2219
    %v2221 = vsel %vm193, %v2215, -inf
    %2222 = vmax.xlane.f32.xlu0 %v2221
    %v2223 = vpop.xlane.xlu0 %2222
    %v2224 = vsel %vm193, %v2216, -inf
    %2225 = vmax.xlane.f32.xlu0 %v2224
    %v2226 = vpop.xlane.xlu0 %2225
    %v2227 = vsel %vm193, %v2217, -inf
    %2228 = vmax.xlane.f32.xlu0 %v2227
    %v2229 = vpop.xlane.xlu0 %2228
    %v2230 = vsub.f32 %v2214, %v2220
    %v2231 = vsub.f32 %v2215, %v2223
    %v2232 = vsub.f32 %v2216, %v2226
    %v2233 = vsub.f32 %v2217, %v2229
    %v2234 = vmul.f32 %v2230, 1.442695
    %v2235 = vpow.pop %v2234
    %v2236 = vmul.f32 %v2231, 1.442695
    %v2237 = vpow.pop %v2236
    %v2238 = vmul.f32 %v2232, 1.442695
    %v2239 = vpow.pop %v2238
    %v2240 = vmul.f32 %v2233, 1.442695
    %v2241 = vpow.pop %v2240
    %v2242 = vsel %vm193, %v2235, 0.0
    %2243 = vadd.xlane.f32.xlu0 %v2242
    %v2244 = vpop.xlane.xlu0 %2243
    %v2245 = vsel %vm193, %v2237, 0.0
    %2246 = vadd.xlane.f32.xlu0 %v2245
    %v2247 = vpop.xlane.xlu0 %2246
    %v2248 = vsel %vm193, %v2239, 0.0
    %2249 = vadd.xlane.f32.xlu0 %v2248
    %v2250 = vpop.xlane.xlu0 %2249
    %v2251 = vsel %vm193, %v2241, 0.0
    %2252 = vadd.xlane.f32.xlu0 %v2251
    %v2253 = vpop.xlane.xlu0 %2252
    %v2254 = vrcp.pop %v2244
    %v2255 = vrcp.pop %v2247
    %v2256 = vrcp.pop %v2250
    %v2257 = vrcp.pop %v2253
    %v2258 = vmul.f32 %v2235, %v2254
    %v2259 = vmul.f32 %v2237, %v2255
    %v2260 = vmul.f32 %v2239, %v2256
    %v2261 = vmul.f32 %v2241, %v2257
    %v2262 = vmul.f32 %v1846, %v2163
    %v2263 = vmul.f32 %v1849, %v2163
    %v2264 = vmul.f32 %v1852, %v2163
    %v2265 = vmul.f32 %v1855, %v2163
    %v2267 = vsel %vm193, %v2258, 0
    %v2270 = vsel %vm193, %v2259, 0
    %v2273 = vsel %vm193, %v2260, 0
    %v2276 = vsel %vm193, %v2261, 0
    %2278 = vmatpush.msra.mxu0 0.0
    %2279 = vmatpush.msra.mxu0 0.0
    %2280 = vmatpush.msra.mxu0 0.0
    %2281 = vmatpush.msra.mxu0 0.0
    %2282 = vmatpush.msra.mxu0 0.0
    %2283 = vmatpush.msra.mxu0 0.0
    %2284 = vmatpush.msra.mxu0 0.0
    %2285 = vmatpush.msra.mxu0 0.0
    %2286 = vmatpush.msra.mxu0 0.0
    %2287 = vmatpush.msra.mxu0 0.0
    %2288 = vmatpush.msra.mxu0 0.0
    %2289 = vmatpush.msra.mxu0 0.0
    %2290 = vmatpush.msra.mxu0 %v2265
    %2291 = vmatpush.msra.mxu0 %v2264
    %2292 = vmatpush.msra.mxu0 %v2263
    %2293 = vmatpush.msra.mxu0 %v2262
    %2294 = vmatmul.f32.gmra.mxu0 %v2267
    %v2295 = vpop.f32.mrf.mxu0
    %v2296 = vadd.f32 0.0, %v2295
    %2297 = vmatmul.f32.gmra.mxu0 %v2270
    %v2298 = vpop.f32.mrf.mxu0
    %v2299 = vadd.f32 0.0, %v2298
    %2300 = vmatmul.f32.gmra.mxu0 %v2273
    %v2301 = vpop.f32.mrf.mxu0
    %v2302 = vadd.f32 0.0, %v2301
    %2303 = vmatmul.f32.gmra.mxu0 %v2276
    %v2304 = vpop.f32.mrf.mxu0
    %v2305 = vadd.f32 0.0, %v2304
    %2306 = vdwg.mxu0
    %v2307 = vadd.f32 %v2150, %v2296
    %v2308 = vadd.f32 %v2153, %v2299
    %v2309 = vadd.f32 %v2156, %v2302
    %v2310 = vadd.f32 %v2159, %v2305
    %v2311 = vld [vmem:[%s988] sm:$0x1]
    %v2313 = vperm.slane %v2311, 0
    %v2315 = vmul.f32 %v1722, %v2313
    %v2316 = vmul.f32 %v1723, %v2313
    %v2317 = vmul.f32 %v1724, %v2313
    %v2318 = vmul.f32 %v1725, %v2313
    %v2320 = vsel %vm193, %v2315, 0
    %v2323 = vsel %vm193, %v2316, 0
    %v2326 = vsel %vm193, %v2317, 0
    %v2329 = vsel %vm193, %v2318, 0
    %2331 = vmatpush.xpose.msra.mxu0 0.0
    %2332 = vmatpush.xpose.msra.mxu0 0.0
    %2333 = vmatpush.xpose.msra.mxu0 0.0
    %2334 = vmatpush.xpose.msra.mxu0 0.0
    %2335 = vmatpush.xpose.msra.mxu0 0.0
    %2336 = vmatpush.xpose.msra.mxu0 0.0
    %2337 = vmatpush.xpose.msra.mxu0 0.0
    %2338 = vmatpush.xpose.msra.mxu0 0.0
    %2339 = vmatpush.xpose.msra.mxu0 0.0
    %2340 = vmatpush.xpose.msra.mxu0 0.0
    %2341 = vmatpush.xpose.msra.mxu0 0.0
    %2342 = vmatpush.xpose.msra.mxu0 0.0
    %2343 = vmatpush.xpose.msra.mxu0 %v1887
    %2344 = vmatpush.xpose.msra.mxu0 %v1884
    %2345 = vmatpush.xpose.msra.mxu0 %v1881
    %2346 = vmatpush.xpose.msra.mxu0 %v1878
    %2347 = vmatmul.f32.gmra.mxu0 %v2320
    %v2348 = vpop.f32.mrf.mxu0
    %v2349 = vadd.f32 0.0, %v2348
    %2350 = vmatmul.f32.gmra.mxu0 %v2323
    %v2351 = vpop.f32.mrf.mxu0
    %v2352 = vadd.f32 0.0, %v2351
    %2353 = vmatmul.f32.gmra.mxu0 %v2326
    %v2354 = vpop.f32.mrf.mxu0
    %v2355 = vadd.f32 0.0, %v2354
    %2356 = vmatmul.f32.gmra.mxu0 %v2329
    %v2357 = vpop.f32.mrf.mxu0
    %v2358 = vadd.f32 0.0, %v2357
    %2359 = vdwg.mxu0
    %v2360 = vmul.f32 %v2349, 0.35355338
    %v2361 = vmul.f32 %v2352, 0.35355338
    %v2362 = vmul.f32 %v2355, 0.35355338
    %v2363 = vmul.f32 %v2358, 0.35355338
    %v2364 = vadd.f32 %v2360, %v171
    %v2365 = vadd.f32 %v2361, %v172
    %v2366 = vadd.f32 %v2362, %v173
    %v2367 = vadd.f32 %v2363, %v174
    %v2368 = vsel %vm193, %v2364, -inf
    %2369 = vmax.xlane.f32.xlu0 %v2368
    %v2370 = vpop.xlane.xlu0 %2369
    %v2371 = vsel %vm193, %v2365, -inf
    %2372 = vmax.xlane.f32.xlu0 %v2371
    %v2373 = vpop.xlane.xlu0 %2372
    %v2374 = vsel %vm193, %v2366, -inf
    %2375 = vmax.xlane.f32.xlu0 %v2374
    %v2376 = vpop.xlane.xlu0 %2375
    %v2377 = vsel %vm193, %v2367, -inf
    %2378 = vmax.xlane.f32.xlu0 %v2377
    %v2379 = vpop.xlane.xlu0 %2378
    %v2380 = vsub.f32 %v2364, %v2370
    %v2381 = vsub.f32 %v2365, %v2373
    %v2382 = vsub.f32 %v2366, %v2376
    %v2383 = vsub.f32 %v2367, %v2379
    %v2384 = vmul.f32 %v2380, 1.442695
    %v2385 = vpow.pop %v2384
    %v2386 = vmul.f32 %v2381, 1.442695
    %v2387 = vpow.pop %v2386
    %v2388 = vmul.f32 %v2382, 1.442695
    %v2389 = vpow.pop %v2388
    %v2390 = vmul.f32 %v2383, 1.442695
    %v2391 = vpow.pop %v2390
    %v2392 = vsel %vm193, %v2385, 0.0
    %2393 = vadd.xlane.f32.xlu0 %v2392
    %v2394 = vpop.xlane.xlu0 %2393
    %v2395 = vsel %vm193, %v2387, 0.0
    %2396 = vadd.xlane.f32.xlu0 %v2395
    %v2397 = vpop.xlane.xlu0 %2396
    %v2398 = vsel %vm193, %v2389, 0.0
    %2399 = vadd.xlane.f32.xlu0 %v2398
    %v2400 = vpop.xlane.xlu0 %2399
    %v2401 = vsel %vm193, %v2391, 0.0
    %2402 = vadd.xlane.f32.xlu0 %v2401
    %v2403 = vpop.xlane.xlu0 %2402
    %v2404 = vrcp.pop %v2394
    %v2405 = vrcp.pop %v2397
    %v2406 = vrcp.pop %v2400
    %v2407 = vrcp.pop %v2403
    %v2408 = vmul.f32 %v2385, %v2404
    %v2409 = vmul.f32 %v2387, %v2405
    %v2410 = vmul.f32 %v2389, %v2406
    %v2411 = vmul.f32 %v2391, %v2407
    %v2412 = vmul.f32 %v1846, %v2313
    %v2413 = vmul.f32 %v1849, %v2313
    %v2414 = vmul.f32 %v1852, %v2313
    %v2415 = vmul.f32 %v1855, %v2313
    %v2417 = vsel %vm193, %v2408, 0
    %v2420 = vsel %vm193, %v2409, 0
    %v2423 = vsel %vm193, %v2410, 0
    %v2426 = vsel %vm193, %v2411, 0
    %2428 = vmatpush.msra.mxu0 0.0
    %2429 = vmatpush.msra.mxu0 0.0
    %2430 = vmatpush.msra.mxu0 0.0
    %2431 = vmatpush.msra.mxu0 0.0
    %2432 = vmatpush.msra.mxu0 0.0
    %2433 = vmatpush.msra.mxu0 0.0
    %2434 = vmatpush.msra.mxu0 0.0
    %2435 = vmatpush.msra.mxu0 0.0
    %2436 = vmatpush.msra.mxu0 0.0
    %2437 = vmatpush.msra.mxu0 0.0
    %2438 = vmatpush.msra.mxu0 0.0
    %2439 = vmatpush.msra.mxu0 0.0
    %2440 = vmatpush.msra.mxu0 %v2415
    %2441 = vmatpush.msra.mxu0 %v2414
    %2442 = vmatpush.msra.mxu0 %v2413
    %2443 = vmatpush.msra.mxu0 %v2412
    %2444 = vmatmul.f32.gmra.mxu0 %v2417
    %v2445 = vpop.f32.mrf.mxu0
    %v2446 = vadd.f32 0.0, %v2445
    %2447 = vmatmul.f32.gmra.mxu0 %v2420
    %v2448 = vpop.f32.mrf.mxu0
    %v2449 = vadd.f32 0.0, %v2448
    %2450 = vmatmul.f32.gmra.mxu0 %v2423
    %v2451 = vpop.f32.mrf.mxu0
    %v2452 = vadd.f32 0.0, %v2451
    %2453 = vmatmul.f32.gmra.mxu0 %v2426
    %v2454 = vpop.f32.mrf.mxu0
    %v2455 = vadd.f32 0.0, %v2454
    %2456 = vdwg.mxu0
    %v2457 = vadd.f32 %v2307, %v2446
    %v2458 = vadd.f32 %v2308, %v2449
    %v2459 = vadd.f32 %v2309, %v2452
    %v2460 = vadd.f32 %v2310, %v2455
    %s2461 = scalar_lea.vmem %s35, 32
    %v2462 = vld [vmem:[%s2461] sm:$0xff]
    %v2463 = vld [vmem:[%s2461 + $0x8] sm:$0xff]
    %v2464 = vld [vmem:[%s2461 + $0x10] sm:$0xff]
    %v2465 = vld [vmem:[%s2461 + $0x18] sm:$0xff]
    %v2467 = vsel %vm193, %v2457, 0
    %v2470 = vsel %vm193, %v2458, 0
    %v2473 = vsel %vm193, %v2459, 0
    %v2476 = vsel %vm193, %v2460, 0
    %2478 = vmatpush.msra.mxu0 0.0
    %2479 = vmatpush.msra.mxu0 0.0
    %2480 = vmatpush.msra.mxu0 0.0
    %2481 = vmatpush.msra.mxu0 0.0
    %2482 = vmatpush.msra.mxu0 0.0
    %2483 = vmatpush.msra.mxu0 0.0
    %2484 = vmatpush.msra.mxu0 0.0
    %2485 = vmatpush.msra.mxu0 0.0
    %2486 = vmatpush.msra.mxu0 0.0
    %2487 = vmatpush.msra.mxu0 0.0
    %2488 = vmatpush.msra.mxu0 0.0
    %2489 = vmatpush.msra.mxu0 0.0
    %2490 = vmatpush.msra.mxu0 %v2465
    %2491 = vmatpush.msra.mxu0 %v2464
    %2492 = vmatpush.msra.mxu0 %v2463
    %2493 = vmatpush.msra.mxu0 %v2462
    %2494 = vmatmul.f32.gmra.mxu0 %v2467
    %v2495 = vpop.f32.mrf.mxu0
    %v2496 = vadd.f32 0.0, %v2495
    %2497 = vmatmul.f32.gmra.mxu0 %v2470
    %v2498 = vpop.f32.mrf.mxu0
    %v2499 = vadd.f32 0.0, %v2498
    %2500 = vmatmul.f32.gmra.mxu0 %v2473
    %v2501 = vpop.f32.mrf.mxu0
    %v2502 = vadd.f32 0.0, %v2501
    %2503 = vmatmul.f32.gmra.mxu0 %v2476
    %v2504 = vpop.f32.mrf.mxu0
    %v2505 = vadd.f32 0.0, %v2504
    %2506 = vdwg.mxu0
    %v2507 = vadd.f32 %v1512, %v2496
    %v2508 = vadd.f32 %v1513, %v2499
    %v2509 = vadd.f32 %v1514, %v2502
    %v2510 = vadd.f32 %v1515, %v2505
    %s2511 = scalar_lea.vmem %s37, 1
    %v2512 = vld [vmem:[%s2511] sm:$0x1]
    %v2514 = vperm.slane %v2512, 0
    %v2516 = vadd.f32 %v2507, %v2514
    %v2517 = vadd.f32 %v2508, %v2514
    %v2518 = vadd.f32 %v2509, %v2514
    %v2519 = vadd.f32 %v2510, %v2514
    %s2520 = scalar_lea.vmem %s39, 1
    %v2521 = vld [vmem:[%s2520] sm:$0x1]
    %s2522 = scalar_lea.vmem %s41, 1
    %v2523 = vld [vmem:[%s2522] sm:$0x1]
    %v2524 = vsel %vm193, %v2516, 0.0
    %2525 = vadd.xlane.f32.xlu0 %v2524
    %v2526 = vpop.xlane.xlu0 %2525
    %v2527 = vsel %vm193, %v2517, 0.0
    %2528 = vadd.xlane.f32.xlu0 %v2527
    %v2529 = vpop.xlane.xlu0 %2528
    %v2530 = vsel %vm193, %v2518, 0.0
    %2531 = vadd.xlane.f32.xlu0 %v2530
    %v2532 = vpop.xlane.xlu0 %2531
    %v2533 = vsel %vm193, %v2519, 0.0
    %2534 = vadd.xlane.f32.xlu0 %v2533
    %v2535 = vpop.xlane.xlu0 %2534
    %v2536 = vmul.f32 %v2526, %v212
    %v2537 = vmul.f32 %v2529, %v212
    %v2538 = vmul.f32 %v2532, %v212
    %v2539 = vmul.f32 %v2535, %v212
    %v2540 = vsub.f32 %v2516, %v2536
    %v2541 = vsub.f32 %v2517, %v2537
    %v2542 = vsub.f32 %v2518, %v2538
    %v2543 = vsub.f32 %v2519, %v2539
    %v2544 = vmul.f32 %v2540, %v2540
    %v2545 = vmul.f32 %v2541, %v2541
    %v2546 = vmul.f32 %v2542, %v2542
    %v2547 = vmul.f32 %v2543, %v2543
    %v2548 = vsel %vm193, %v2544, 0.0
    %2549 = vadd.xlane.f32.xlu0 %v2548
    %v2550 = vpop.xlane.xlu0 %2549
    %v2551 = vsel %vm193, %v2545, 0.0
    %2552 = vadd.xlane.f32.xlu0 %v2551
    %v2553 = vpop.xlane.xlu0 %2552
    %v2554 = vsel %vm193, %v2546, 0.0
    %2555 = vadd.xlane.f32.xlu0 %v2554
    %v2556 = vpop.xlane.xlu0 %2555
    %v2557 = vsel %vm193, %v2547, 0.0
    %2558 = vadd.xlane.f32.xlu0 %v2557
    %v2559 = vpop.xlane.xlu0 %2558
    %v2560 = vmul.f32 %v2550, %v212
    %v2561 = vmul.f32 %v2553, %v212
    %v2562 = vmul.f32 %v2556, %v212
    %v2563 = vmul.f32 %v2559, %v212
    %v2564 = vadd.f32 %v2560, 1e-05
    %v2565 = vadd.f32 %v2561, 1e-05
    %v2566 = vadd.f32 %v2562, 1e-05
    %v2567 = vadd.f32 %v2563, 1e-05
    %v2568 = vrsqrt.pop %v2564
    %v2569 = vmul.f32 %v2568, %v2564
    %v2570 = vmul.f32 %v2569, %v2568
    %v2571 = vmul.f32 0.5, %v2570
    %v2572 = vsub.f32 1.5, %v2571
    %v2573 = vmul.f32 %v2568, %v2572
    %vm2574 = vweird.f32 %v2564
    %vm2575 = vweird.f32 %v2568
    %vm2576 = vmor %vm2574, %vm2575
    %v2577 = vsel %vm2576, %v2568, %v2573
    %v2578 = vrsqrt.pop %v2565
    %v2579 = vmul.f32 %v2578, %v2565
    %v2580 = vmul.f32 %v2579, %v2578
    %v2581 = vmul.f32 0.5, %v2580
    %v2582 = vsub.f32 1.5, %v2581
    %v2583 = vmul.f32 %v2578, %v2582
    %vm2584 = vweird.f32 %v2565
    %vm2585 = vweird.f32 %v2578
    %vm2586 = vmor %vm2584, %vm2585
    %v2587 = vsel %vm2586, %v2578, %v2583
    %v2588 = vrsqrt.pop %v2566
    %v2589 = vmul.f32 %v2588, %v2566
    %v2590 = vmul.f32 %v2589, %v2588
    %v2591 = vmul.f32 0.5, %v2590
    %v2592 = vsub.f32 1.5, %v2591
    %v2593 = vmul.f32 %v2588, %v2592
    %vm2594 = vweird.f32 %v2566
    %vm2595 = vweird.f32 %v2588
    %vm2596 = vmor %vm2594, %vm2595
    %v2597 = vsel %vm2596, %v2588, %v2593
    %v2598 = vrsqrt.pop %v2567
    %v2599 = vmul.f32 %v2598, %v2567
    %v2600 = vmul.f32 %v2599, %v2598
    %v2601 = vmul.f32 0.5, %v2600
    %v2602 = vsub.f32 1.5, %v2601
    %v2603 = vmul.f32 %v2598, %v2602
    %vm2604 = vweird.f32 %v2567
    %vm2605 = vweird.f32 %v2598
    %vm2606 = vmor %vm2604, %vm2605
    %v2607 = vsel %vm2606, %v2598, %v2603
    %v2608 = vmul.f32 %v2540, %v2577
    %v2609 = vmul.f32 %v2541, %v2587
    %v2610 = vmul.f32 %v2542, %v2597
    %v2611 = vmul.f32 %v2543, %v2607
    %v2613 = vperm.slane %v2521, 0
    %v2615 = vmul.f32 %v2608, %v2613
    %v2616 = vmul.f32 %v2609, %v2613
    %v2617 = vmul.f32 %v2610, %v2613
    %v2618 = vmul.f32 %v2611, %v2613
    %v2620 = vperm.slane %v2523, 0
    %v2622 = vadd.f32 %v2615, %v2620
    %v2623 = vadd.f32 %v2616, %v2620
    %v2624 = vadd.f32 %v2617, %v2620
    %v2625 = vadd.f32 %v2618, %v2620
    %s2626 = scalar_lea.vmem %s43, 32
    %v2627 = vld [vmem:[%s2626] sm:$0xff]
    %v2628 = vld [vmem:[%s2626 + $0x8] sm:$0xff]
    %v2629 = vld [vmem:[%s2626 + $0x10] sm:$0xff]
    %v2630 = vld [vmem:[%s2626 + $0x18] sm:$0xff]
    %v2632 = vsel %vm193, %v2622, 0
    %v2635 = vsel %vm193, %v2623, 0
    %v2638 = vsel %vm193, %v2624, 0
    %v2641 = vsel %vm193, %v2625, 0
    %2643 = vmatpush.msra.mxu0 0.0
    %2644 = vmatpush.msra.mxu0 0.0
    %2645 = vmatpush.msra.mxu0 0.0
    %2646 = vmatpush.msra.mxu0 0.0
    %2647 = vmatpush.msra.mxu0 0.0
    %2648 = vmatpush.msra.mxu0 0.0
    %2649 = vmatpush.msra.mxu0 0.0
    %2650 = vmatpush.msra.mxu0 0.0
    %2651 = vmatpush.msra.mxu0 0.0
    %2652 = vmatpush.msra.mxu0 0.0
    %2653 = vmatpush.msra.mxu0 0.0
    %2654 = vmatpush.msra.mxu0 0.0
    %2655 = vmatpush.msra.mxu0 %v2630
    %2656 = vmatpush.msra.mxu0 %v2629
    %2657 = vmatpush.msra.mxu0 %v2628
    %2658 = vmatpush.msra.mxu0 %v2627
    %2659 = vmatmul.f32.gmra.mxu0 %v2632
    %v2660 = vpop.f32.mrf.mxu0
    %v2661 = vadd.f32 0.0, %v2660
    %2662 = vmatmul.f32.gmra.mxu0 %v2635
    %v2663 = vpop.f32.mrf.mxu0
    %v2664 = vadd.f32 0.0, %v2663
    %2665 = vmatmul.f32.gmra.mxu0 %v2638
    %v2666 = vpop.f32.mrf.mxu0
    %v2667 = vadd.f32 0.0, %v2666
    %2668 = vmatmul.f32.gmra.mxu0 %v2641
    %v2669 = vpop.f32.mrf.mxu0
    %v2670 = vadd.f32 0.0, %v2669
    %2671 = vdwg.mxu0
    %s2672 = scalar_lea.vmem %s45, 32
    %v2673 = vld [vmem:[%s2672] sm:$0xff]
    %v2674 = vld [vmem:[%s2672 + $0x8] sm:$0xff]
    %v2675 = vld [vmem:[%s2672 + $0x10] sm:$0xff]
    %v2676 = vld [vmem:[%s2672 + $0x18] sm:$0xff]
    %2677 = vmatpush.msra.mxu0 0.0
    %2678 = vmatpush.msra.mxu0 0.0
    %2679 = vmatpush.msra.mxu0 0.0
    %2680 = vmatpush.msra.mxu0 0.0
    %2681 = vmatpush.msra.mxu0 0.0
    %2682 = vmatpush.msra.mxu0 0.0
    %2683 = vmatpush.msra.mxu0 0.0
    %2684 = vmatpush.msra.mxu0 0.0
    %2685 = vmatpush.msra.mxu0 0.0
    %2686 = vmatpush.msra.mxu0 0.0
    %2687 = vmatpush.msra.mxu0 0.0
    %2688 = vmatpush.msra.mxu0 0.0
    %2689 = vmatpush.msra.mxu0 %v2676
    %2690 = vmatpush.msra.mxu0 %v2675
    %2691 = vmatpush.msra.mxu0 %v2674
    %2692 = vmatpush.msra.mxu0 %v2673
    %2693 = vmatmul.f32.gmra.mxu0 %v2632
    %v2694 = vpop.f32.mrf.mxu0
    %v2695 = vadd.f32 0.0, %v2694
    %2696 = vmatmul.f32.gmra.mxu0 %v2635
    %v2697 = vpop.f32.mrf.mxu0
    %v2698 = vadd.f32 0.0, %v2697
    %2699 = vmatmul.f32.gmra.mxu0 %v2638
    %v2700 = vpop.f32.mrf.mxu0
    %v2701 = vadd.f32 0.0, %v2700
    %2702 = vmatmul.f32.gmra.mxu0 %v2641
    %v2703 = vpop.f32.mrf.mxu0
    %v2704 = vadd.f32 0.0, %v2703
    %2705 = vdwg.mxu0
    %v2706 = vsub.f32 0.0, %v2661
    %v2707 = vsub.f32 0.0, %v2664
    %v2708 = vsub.f32 0.0, %v2667
    %v2709 = vsub.f32 0.0, %v2670
    %v2710 = vmul.f32 %v2706, 1.442695
    %v2711 = vpow.pop %v2710
    %v2712 = vmul.f32 %v2707, 1.442695
    %v2713 = vpow.pop %v2712
    %v2714 = vmul.f32 %v2708, 1.442695
    %v2715 = vpow.pop %v2714
    %v2716 = vmul.f32 %v2709, 1.442695
    %v2717 = vpow.pop %v2716
    %v2718 = vadd.f32 %v2711, 1.0
    %v2719 = vadd.f32 %v2713, 1.0
    %v2720 = vadd.f32 %v2715, 1.0
    %v2721 = vadd.f32 %v2717, 1.0
    %v2722 = vrcp.pop %v2718
    %v2723 = vmul.f32 %v2718, %v2722
    %v2724 = vsub.f32 1.0, %v2723
    %v2725 = vmul.f32 %v2722, %v2724
    %v2726 = vadd.f32 %v2722, %v2725
    %vm2727 = vweird.f32 %v2718
    %vm2728 = vweird.f32 %v2722
    %vm2729 = vmor %vm2727, %vm2728
    %v2730 = vsel %vm2729, %v2722, %v2726
    %v2731 = vand.u32 2147483647, %v2718
    %vm2732 = vcmp.eq.f32.partialorder %v2731, 8.507059e+37
    %v2733 = vand.u32 %v2718, 2147483648
    %v2734 = vor.u32 1.1754944e-38, %v2733
    %v2735 = vsel %vm2732, %v2734, %v2730
    %v2736 = vmul.f32 1.0, %v2735
    %v2737 = vrcp.pop %v2719
    %v2738 = vmul.f32 %v2719, %v2737
    %v2739 = vsub.f32 1.0, %v2738
    %v2740 = vmul.f32 %v2737, %v2739
    %v2741 = vadd.f32 %v2737, %v2740
    %vm2742 = vweird.f32 %v2719
    %vm2743 = vweird.f32 %v2737
    %vm2744 = vmor %vm2742, %vm2743
    %v2745 = vsel %vm2744, %v2737, %v2741
    %v2746 = vand.u32 2147483647, %v2719
    %vm2747 = vcmp.eq.f32.partialorder %v2746, 8.507059e+37
    %v2748 = vand.u32 %v2719, 2147483648
    %v2749 = vor.u32 1.1754944e-38, %v2748
    %v2750 = vsel %vm2747, %v2749, %v2745
    %v2751 = vmul.f32 1.0, %v2750
    %v2752 = vrcp.pop %v2720
    %v2753 = vmul.f32 %v2720, %v2752
    %v2754 = vsub.f32 1.0, %v2753
    %v2755 = vmul.f32 %v2752, %v2754
    %v2756 = vadd.f32 %v2752, %v2755
    %vm2757 = vweird.f32 %v2720
    %vm2758 = vweird.f32 %v2752
    %vm2759 = vmor %vm2757, %vm2758
    %v2760 = vsel %vm2759, %v2752, %v2756
    %v2761 = vand.u32 2147483647, %v2720
    %vm2762 = vcmp.eq.f32.partialorder %v2761, 8.507059e+37
    %v2763 = vand.u32 %v2720, 2147483648
    %v2764 = vor.u32 1.1754944e-38, %v2763
    %v2765 = vsel %vm2762, %v2764, %v2760
    %v2766 = vmul.f32 1.0, %v2765
    %v2767 = vrcp.pop %v2721
    %v2768 = vmul.f32 %v2721, %v2767
    %v2769 = vsub.f32 1.0, %v2768
    %v2770 = vmul.f32 %v2767, %v2769
    %v2771 = vadd.f32 %v2767, %v2770
    %vm2772 = vweird.f32 %v2721
    %vm2773 = vweird.f32 %v2767
    %vm2774 = vmor %vm2772, %vm2773
    %v2775 = vsel %vm2774, %v2767, %v2771
    %v2776 = vand.u32 2147483647, %v2721
    %vm2777 = vcmp.eq.f32.partialorder %v2776, 8.507059e+37
    %v2778 = vand.u32 %v2721, 2147483648
    %v2779 = vor.u32 1.1754944e-38, %v2778
    %v2780 = vsel %vm2777, %v2779, %v2775
    %v2781 = vmul.f32 1.0, %v2780
    %v2782 = vmul.f32 %v2661, %v2736
    %v2783 = vmul.f32 %v2664, %v2751
    %v2784 = vmul.f32 %v2667, %v2766
    %v2785 = vmul.f32 %v2670, %v2781
    %v2786 = vmul.f32 %v2782, %v2695
    %v2787 = vmul.f32 %v2783, %v2698
    %v2788 = vmul.f32 %v2784, %v2701
    %v2789 = vmul.f32 %v2785, %v2704
    %s2790 = scalar_lea.vmem %s47, 64
    %v2791 = vld [vmem:[%s2790] sm:$0xff]
    %v2792 = vld [vmem:[%s2790 + $0x8] sm:$0xff]
    %v2793 = vld [vmem:[%s2790 + $0x10] sm:$0xff]
    %v2794 = vld [vmem:[%s2790 + $0x18] sm:$0xff]
    %v2795 = vld [vmem:[%s2790 + $0x20] sm:$0xff]
    %v2796 = vld [vmem:[%s2790 + $0x28] sm:$0xff]
    %v2797 = vld [vmem:[%s2790 + $0x30] sm:$0xff]
    %v2798 = vld [vmem:[%s2790 + $0x38] sm:$0xff]
    %v2800 = vsel %vm1470, %v2786, 0
    %v2803 = vsel %vm1470, %v2787, 0
    %v2806 = vsel %vm1470, %v2788, 0
    %v2809 = vsel %vm1470, %v2789, 0
    %2811 = vmatpush.msra.mxu0 0.0
    %2812 = vmatpush.msra.mxu0 0.0
    %2813 = vmatpush.msra.mxu0 0.0
    %2814 = vmatpush.msra.mxu0 0.0
    %2815 = vmatpush.msra.mxu0 0.0
    %2816 = vmatpush.msra.mxu0 0.0
    %2817 = vmatpush.msra.mxu0 0.0
    %2818 = vmatpush.msra.mxu0 0.0
    %2819 = vmatpush.msra.mxu0 %v2798
    %2820 = vmatpush.msra.mxu0 %v2797
    %2821 = vmatpush.msra.mxu0 %v2796
    %2822 = vmatpush.msra.mxu0 %v2795
    %2823 = vmatpush.msra.mxu0 %v2794
    %2824 = vmatpush.msra.mxu0 %v2793
    %2825 = vmatpush.msra.mxu0 %v2792
    %2826 = vmatpush.msra.mxu0 %v2791
    %2827 = vmatmul.f32.gmra.mxu0 %v2800
    %v2828 = vpop.f32.mrf.mxu0
    %v2829 = vadd.f32 0.0, %v2828
    %2830 = vmatmul.f32.gmra.mxu0 %v2803
    %v2831 = vpop.f32.mrf.mxu0
    %v2832 = vadd.f32 0.0, %v2831
    %2833 = vmatmul.f32.gmra.mxu0 %v2806
    %v2834 = vpop.f32.mrf.mxu0
    %v2835 = vadd.f32 0.0, %v2834
    %2836 = vmatmul.f32.gmra.mxu0 %v2809
    %v2837 = vpop.f32.mrf.mxu0
    %v2838 = vadd.f32 0.0, %v2837
    %2839 = vdwg.mxu0
    %v2840 = vadd.f32 %v2516, %v2829
    %v2841 = vadd.f32 %v2517, %v2832
    %v2842 = vadd.f32 %v2518, %v2835
    %v2843 = vadd.f32 %v2519, %v2838
    %v2844 = vld [vmem:[%s49] sm:$0x1]
    %v2845 = vld [vmem:[%s51] sm:$0x1]
    %v2846 = vsel %vm193, %v2840, 0.0
    %2847 = vadd.xlane.f32.xlu0 %v2846
    %v2848 = vpop.xlane.xlu0 %2847
    %v2849 = vsel %vm193, %v2841, 0.0
    %2850 = vadd.xlane.f32.xlu0 %v2849
    %v2851 = vpop.xlane.xlu0 %2850
    %v2852 = vsel %vm193, %v2842, 0.0
    %2853 = vadd.xlane.f32.xlu0 %v2852
    %v2854 = vpop.xlane.xlu0 %2853
    %v2855 = vsel %vm193, %v2843, 0.0
    %2856 = vadd.xlane.f32.xlu0 %v2855
    %v2857 = vpop.xlane.xlu0 %2856
    %v2858 = vmul.f32 %v2848, %v212
    %v2859 = vmul.f32 %v2851, %v212
    %v2860 = vmul.f32 %v2854, %v212
    %v2861 = vmul.f32 %v2857, %v212
    %v2862 = vsub.f32 %v2840, %v2858
    %v2863 = vsub.f32 %v2841, %v2859
    %v2864 = vsub.f32 %v2842, %v2860
    %v2865 = vsub.f32 %v2843, %v2861
    %v2866 = vmul.f32 %v2862, %v2862
    %v2867 = vmul.f32 %v2863, %v2863
    %v2868 = vmul.f32 %v2864, %v2864
    %v2869 = vmul.f32 %v2865, %v2865
    %v2870 = vsel %vm193, %v2866, 0.0
    %2871 = vadd.xlane.f32.xlu0 %v2870
    %v2872 = vpop.xlane.xlu0 %2871
    %v2873 = vsel %vm193, %v2867, 0.0
    %2874 = vadd.xlane.f32.xlu0 %v2873
    %v2875 = vpop.xlane.xlu0 %2874
    %v2876 = vsel %vm193, %v2868, 0.0
    %2877 = vadd.xlane.f32.xlu0 %v2876
    %v2878 = vpop.xlane.xlu0 %2877
    %v2879 = vsel %vm193, %v2869, 0.0
    %2880 = vadd.xlane.f32.xlu0 %v2879
    %v2881 = vpop.xlane.xlu0 %2880
    %v2882 = vmul.f32 %v2872, %v212
    %v2883 = vmul.f32 %v2875, %v212
    %v2884 = vmul.f32 %v2878, %v212
    %v2885 = vmul.f32 %v2881, %v212
    %v2886 = vadd.f32 %v2882, 1e-05
    %v2887 = vadd.f32 %v2883, 1e-05
    %v2888 = vadd.f32 %v2884, 1e-05
    %v2889 = vadd.f32 %v2885, 1e-05
    %v2890 = vrsqrt.pop %v2886
    %v2891 = vmul.f32 %v2890, %v2886
    %v2892 = vmul.f32 %v2891, %v2890
    %v2893 = vmul.f32 0.5, %v2892
    %v2894 = vsub.f32 1.5, %v2893
    %v2895 = vmul.f32 %v2890, %v2894
    %vm2896 = vweird.f32 %v2886
    %vm2897 = vweird.f32 %v2890
    %vm2898 = vmor %vm2896, %vm2897
    %v2899 = vsel %vm2898, %v2890, %v2895
    %v2900 = vrsqrt.pop %v2887
    %v2901 = vmul.f32 %v2900, %v2887
    %v2902 = vmul.f32 %v2901, %v2900
    %v2903 = vmul.f32 0.5, %v2902
    %v2904 = vsub.f32 1.5, %v2903
    %v2905 = vmul.f32 %v2900, %v2904
    %vm2906 = vweird.f32 %v2887
    %vm2907 = vweird.f32 %v2900
    %vm2908 = vmor %vm2906, %vm2907
    %v2909 = vsel %vm2908, %v2900, %v2905
    %v2910 = vrsqrt.pop %v2888
    %v2911 = vmul.f32 %v2910, %v2888
    %v2912 = vmul.f32 %v2911, %v2910
    %v2913 = vmul.f32 0.5, %v2912
    %v2914 = vsub.f32 1.5, %v2913
    %v2915 = vmul.f32 %v2910, %v2914
    %vm2916 = vweird.f32 %v2888
    %vm2917 = vweird.f32 %v2910
    %vm2918 = vmor %vm2916, %vm2917
    %v2919 = vsel %vm2918, %v2910, %v2915
    %v2920 = vrsqrt.pop %v2889
    %v2921 = vmul.f32 %v2920, %v2889
    %v2922 = vmul.f32 %v2921, %v2920
    %v2923 = vmul.f32 0.5, %v2922
    %v2924 = vsub.f32 1.5, %v2923
    %v2925 = vmul.f32 %v2920, %v2924
    %vm2926 = vweird.f32 %v2889
    %vm2927 = vweird.f32 %v2920
    %vm2928 = vmor %vm2926, %vm2927
    %v2929 = vsel %vm2928, %v2920, %v2925
    %v2930 = vmul.f32 %v2862, %v2899
    %v2931 = vmul.f32 %v2863, %v2909
    %v2932 = vmul.f32 %v2864, %v2919
    %v2933 = vmul.f32 %v2865, %v2929
    %v2935 = vperm.slane %v2844, 0
    %v2937 = vmul.f32 %v2930, %v2935
    %v2938 = vmul.f32 %v2931, %v2935
    %v2939 = vmul.f32 %v2932, %v2935
    %v2940 = vmul.f32 %v2933, %v2935
    %v2942 = vperm.slane %v2845, 0
    %v2944 = vadd.f32 %v2937, %v2942
    %v2945 = vadd.f32 %v2938, %v2942
    %v2946 = vadd.f32 %v2939, %v2942
    %v2947 = vadd.f32 %v2940, %v2942
    %2949 = vset.pattern.permute.xlu0 0
    %2950 = vperm.xlu0 %2949, %v175
    %v2951 = vpop.permute.xlu0 %2950
    %2954 = vset.pattern.permute.xlu0 0
    %2955 = vperm.xlu0 %2954, %v176
    %v2956 = vpop.permute.xlu0 %2955
    %2959 = vset.pattern.permute.xlu0 0
    %2960 = vperm.xlu0 %2959, %v177
    %v2961 = vpop.permute.xlu0 %2960
    %2964 = vset.pattern.permute.xlu0 0
    %2965 = vperm.xlu0 %2964, %v178
    %v2966 = vpop.permute.xlu0 %2965
    %v2968 = vmul.f32 %v2944, %v2951
    %v2969 = vmul.f32 %v2945, %v2956
    %v2970 = vmul.f32 %v2946, %v2961
    %v2971 = vmul.f32 %v2947, %v2966
    %v2972 = vld [vmem:[%s53] sm:$0xff]
    %v2973 = vld [vmem:[%s53 + $0x8] sm:$0xff]
    %v2974 = vld [vmem:[%s53 + $0x10] sm:$0xff]
    %v2975 = vld [vmem:[%s53 + $0x18] sm:$0xff]
    %v2976 = vld [vmem:[%s55] sm:$0x1]
    %v2978 = vperm.slane %v2976, 0
    %v2981 = vsel %vm193, %v2968, 0
    %v2984 = vsel %vm193, %v2969, 0
    %v2987 = vsel %vm193, %v2970, 0
    %v2990 = vsel %vm193, %v2971, 0
    %2992 = vmatpush.msra.mxu0 0.0
    %2993 = vmatpush.msra.mxu0 0.0
    %2994 = vmatpush.msra.mxu0 0.0
    %2995 = vmatpush.msra.mxu0 0.0
    %2996 = vmatpush.msra.mxu0 0.0
    %2997 = vmatpush.msra.mxu0 0.0
    %2998 = vmatpush.msra.mxu0 0.0
    %2999 = vmatpush.msra.mxu0 0.0
    %3000 = vmatpush.msra.mxu0 0.0
    %3001 = vmatpush.msra.mxu0 0.0
    %3002 = vmatpush.msra.mxu0 0.0
    %3003 = vmatpush.msra.mxu0 0.0
    %3004 = vmatpush.msra.mxu0 %v2975
    %3005 = vmatpush.msra.mxu0 %v2974
    %3006 = vmatpush.msra.mxu0 %v2973
    %3007 = vmatpush.msra.mxu0 %v2972
    %3008 = vmatmul.f32.gmra.mxu0 %v2981
    %v3009 = vpop.f32.mrf.mxu0
    %v3010 = vadd.f32 %v2978, %v3009
    %3011 = vmatmul.f32.gmra.mxu0 %v2984
    %v3012 = vpop.f32.mrf.mxu0
    %v3013 = vadd.f32 %v2978, %v3012
    %3014 = vmatmul.f32.gmra.mxu0 %v2987
    %v3015 = vpop.f32.mrf.mxu0
    %v3016 = vadd.f32 %v2978, %v3015
    %3017 = vmatmul.f32.gmra.mxu0 %v2990
    %v3018 = vpop.f32.mrf.mxu0
    %v3019 = vadd.f32 %v2978, %v3018
    %3020 = vdwg.mxu0
    %v3021 = vmul.f32 %v3010, %v2951
    %v3022 = vmul.f32 %v3013, %v2956
    %v3023 = vmul.f32 %v3016, %v2961
    %v3024 = vmul.f32 %v3019, %v2966
    %v3025 = vld [vmem:[%s17] sm:$0xff]
    %v3026 = vld [vmem:[%s17 + $0x8] sm:$0xff]
    %v3027 = vld [vmem:[%s17 + $0x10] sm:$0xff]
    %v3028 = vld [vmem:[%s17 + $0x18] sm:$0xff]
    %v3029 = vld [vmem:[%s17 + $0x20] sm:$0xff]
    %v3030 = vld [vmem:[%s17 + $0x28] sm:$0xff]
    %v3031 = vld [vmem:[%s17 + $0x30] sm:$0xff]
    %v3032 = vld [vmem:[%s17 + $0x38] sm:$0xff]
    %v3034 = vsel %vm193, %v3025, 0
    %v3037 = vsel %vm193, %v3026, 0
    %v3040 = vsel %vm193, %v3027, 0
    %v3043 = vsel %vm193, %v3028, 0
    %v3046 = vsel %vm193, %v3029, 0
    %v3049 = vsel %vm193, %v3030, 0
    %v3052 = vsel %vm193, %v3031, 0
    %v3055 = vsel %vm193, %v3032, 0
    %3057 = vmatpush.msra.mxu0 0.0
    %3058 = vmatpush.msra.mxu0 0.0
    %3059 = vmatpush.msra.mxu0 0.0
    %3060 = vmatpush.msra.mxu0 0.0
    %3061 = vmatpush.msra.mxu0 0.0
    %3062 = vmatpush.msra.mxu0 0.0
    %3063 = vmatpush.msra.mxu0 0.0
    %3064 = vmatpush.msra.mxu0 0.0
    %3065 = vmatpush.msra.mxu0 0.0
    %3066 = vmatpush.msra.mxu0 0.0
    %3067 = vmatpush.msra.mxu0 0.0
    %3068 = vmatpush.msra.mxu0 0.0
    %3069 = vmatpush.msra.mxu0 %v3024
    %3070 = vmatpush.msra.mxu0 %v3023
    %3071 = vmatpush.msra.mxu0 %v3022
    %3072 = vmatpush.msra.mxu0 %v3021
    %3073 = vmatmul.f32.gmra.mxu0 %v3034
    %v3074 = vpop.f32.mrf.mxu0
    %v3075 = vadd.f32 0.0, %v3074
    %3076 = vmatmul.f32.gmra.mxu0 %v3037
    %v3077 = vpop.f32.mrf.mxu0
    %v3078 = vadd.f32 0.0, %v3077
    %3079 = vmatmul.f32.gmra.mxu0 %v3040
    %v3080 = vpop.f32.mrf.mxu0
    %v3081 = vadd.f32 0.0, %v3080
    %3082 = vmatmul.f32.gmra.mxu0 %v3043
    %v3083 = vpop.f32.mrf.mxu0
    %v3084 = vadd.f32 0.0, %v3083
    %3085 = vmatmul.f32.gmra.mxu0 %v3046
    %v3086 = vpop.f32.mrf.mxu0
    %v3087 = vadd.f32 0.0, %v3086
    %3088 = vmatmul.f32.gmra.mxu0 %v3049
    %v3089 = vpop.f32.mrf.mxu0
    %v3090 = vadd.f32 0.0, %v3089
    %3091 = vmatmul.f32.gmra.mxu0 %v3052
    %v3092 = vpop.f32.mrf.mxu0
    %v3093 = vadd.f32 0.0, %v3092
    %3094 = vmatmul.f32.gmra.mxu0 %v3055
    %v3095 = vpop.f32.mrf.mxu0
    %v3096 = vadd.f32 0.0, %v3095
    %3097 = vdwg.mxu0
    %v3098 = vld [vmem:[#allocation5] sm:$0xff]
    %v3099 = vld [vmem:[#allocation5 + $0x8] sm:$0xff]
    %v3100 = vld [vmem:[#allocation5 + $0x10] sm:$0xff]
    %v3101 = vld [vmem:[#allocation5 + $0x18] sm:$0xff]
    %s3102 = scalar_lea.vmem [#allocation5], 32
    %v3103 = vld [vmem:[%s3102] sm:$0xff]
    %v3104 = vld [vmem:[%s3102 + $0x8] sm:$0xff]
    %v3105 = vld [vmem:[%s3102 + $0x10] sm:$0xff]
    %v3106 = vld [vmem:[%s3102 + $0x18] sm:$0xff]
    %v3108 = vsel %vm193, %v3021, 0
    %v3111 = vsel %vm193, %v3022, 0
    %v3114 = vsel %vm193, %v3023, 0
    %v3117 = vsel %vm193, %v3024, 0
    %3119 = vmatpush.msra.mxu0 0.0
    %3120 = vmatpush.msra.mxu0 0.0
    %3121 = vmatpush.msra.mxu0 0.0
    %3122 = vmatpush.msra.mxu0 0.0
    %3123 = vmatpush.msra.mxu0 0.0
    %3124 = vmatpush.msra.mxu0 0.0
    %3125 = vmatpush.msra.mxu0 0.0
    %3126 = vmatpush.msra.mxu0 0.0
    %3127 = vmatpush.msra.mxu0 0.0
    %3128 = vmatpush.msra.mxu0 0.0
    %3129 = vmatpush.msra.mxu0 0.0
    %3130 = vmatpush.msra.mxu0 0.0
    %3131 = vmatpush.msra.mxu0 %v3106
    %3132 = vmatpush.msra.mxu0 %v3105
    %3133 = vmatpush.msra.mxu0 %v3104
    %3134 = vmatpush.msra.mxu0 %v3103
    %3135 = vmatmul.f32.gmra.mxu0 %v3108
    %v3136 = vpop.f32.mrf.mxu0
    %v3137 = vadd.f32 0.0, %v3136
    %3138 = vmatmul.f32.gmra.mxu0 %v3111
    %v3139 = vpop.f32.mrf.mxu0
    %v3140 = vadd.f32 0.0, %v3139
    %3141 = vmatmul.f32.gmra.mxu0 %v3114
    %v3142 = vpop.f32.mrf.mxu0
    %v3143 = vadd.f32 0.0, %v3142
    %3144 = vmatmul.f32.gmra.mxu0 %v3117
    %v3145 = vpop.f32.mrf.mxu0
    %v3146 = vadd.f32 0.0, %v3145
    %3147 = vdwg.mxu0
    %v3149 = vsel %vm193, %v3075, 0
    %v3152 = vsel %vm193, %v3078, 0
    %v3155 = vsel %vm193, %v3081, 0
    %v3158 = vsel %vm193, %v3084, 0
    %3160 = vmatpush.msra.mxu0 0.0
    %3161 = vmatpush.msra.mxu0 0.0
    %3162 = vmatpush.msra.mxu0 0.0
    %3163 = vmatpush.msra.mxu0 0.0
    %3164 = vmatpush.msra.mxu0 0.0
    %3165 = vmatpush.msra.mxu0 0.0
    %3166 = vmatpush.msra.mxu0 0.0
    %3167 = vmatpush.msra.mxu0 0.0
    %3168 = vmatpush.msra.mxu0 0.0
    %3169 = vmatpush.msra.mxu0 0.0
    %3170 = vmatpush.msra.mxu0 0.0
    %3171 = vmatpush.msra.mxu0 0.0
    %3172 = vmatpush.msra.mxu0 %v3101
    %3173 = vmatpush.msra.mxu0 %v3100
    %3174 = vmatpush.msra.mxu0 %v3099
    %3175 = vmatpush.msra.mxu0 %v3098
    %3176 = vmatmul.f32.gmra.mxu0 %v3149
    %v3177 = vpop.f32.mrf.mxu0
    %v3178 = vadd.f32 %v3137, %v3177
    %3179 = vmatmul.f32.gmra.mxu0 %v3152
    %v3180 = vpop.f32.mrf.mxu0
    %v3181 = vadd.f32 %v3140, %v3180
    %3182 = vmatmul.f32.gmra.mxu0 %v3155
    %v3183 = vpop.f32.mrf.mxu0
    %v3184 = vadd.f32 %v3143, %v3183
    %3185 = vmatmul.f32.gmra.mxu0 %v3158
    %v3186 = vpop.f32.mrf.mxu0
    %v3187 = vadd.f32 %v3146, %v3186
    %3188 = vdwg.mxu0
    %s3189 = scalar_lea.vmem [#allocation5], 64
    %v3190 = vld [vmem:[%s3189] sm:$0xff]
    %v3191 = vld [vmem:[%s3189 + $0x8] sm:$0xff]
    %v3192 = vld [vmem:[%s3189 + $0x10] sm:$0xff]
    %v3193 = vld [vmem:[%s3189 + $0x18] sm:$0xff]
    %v3195 = vsel %vm193, %v3087, 0
    %v3198 = vsel %vm193, %v3090, 0
    %v3201 = vsel %vm193, %v3093, 0
    %v3204 = vsel %vm193, %v3096, 0
    %3206 = vmatpush.msra.mxu0 0.0
    %3207 = vmatpush.msra.mxu0 0.0
    %3208 = vmatpush.msra.mxu0 0.0
    %3209 = vmatpush.msra.mxu0 0.0
    %3210 = vmatpush.msra.mxu0 0.0
    %3211 = vmatpush.msra.mxu0 0.0
    %3212 = vmatpush.msra.mxu0 0.0
    %3213 = vmatpush.msra.mxu0 0.0
    %3214 = vmatpush.msra.mxu0 0.0
    %3215 = vmatpush.msra.mxu0 0.0
    %3216 = vmatpush.msra.mxu0 0.0
    %3217 = vmatpush.msra.mxu0 0.0
    %3218 = vmatpush.msra.mxu0 %v3193
    %3219 = vmatpush.msra.mxu0 %v3192
    %3220 = vmatpush.msra.mxu0 %v3191
    %3221 = vmatpush.msra.mxu0 %v3190
    %3222 = vmatmul.f32.gmra.mxu0 %v3195
    %v3223 = vpop.f32.mrf.mxu0
    %v3224 = vadd.f32 0.0, %v3223
    %3225 = vmatmul.f32.gmra.mxu0 %v3198
    %v3226 = vpop.f32.mrf.mxu0
    %v3227 = vadd.f32 0.0, %v3226
    %3228 = vmatmul.f32.gmra.mxu0 %v3201
    %v3229 = vpop.f32.mrf.mxu0
    %v3230 = vadd.f32 0.0, %v3229
    %3231 = vmatmul.f32.gmra.mxu0 %v3204
    %v3232 = vpop.f32.mrf.mxu0
    %v3233 = vadd.f32 0.0, %v3232
    %3234 = vdwg.mxu0
    %v3235 = vadd.f32 %v3178, %v3224
    %v3236 = vadd.f32 %v3181, %v3227
    %v3237 = vadd.f32 %v3184, %v3230
    %v3238 = vadd.f32 %v3187, %v3233
    %v3239 = vld [vmem:[%s59] sm:$0x1]
    %v3241 = vperm.slane %v3239, 0
    %v3243 = vadd.f32 %v3235, %v3241
    %v3244 = vadd.f32 %v3236, %v3241
    %v3245 = vadd.f32 %v3237, %v3241
    %v3246 = vadd.f32 %v3238, %v3241
    %v3247 = vmax.f32 %v3243, 0.0
    %v3248 = vmax.f32 %v3244, 0.0
    %v3249 = vmax.f32 %v3245, 0.0
    %v3250 = vmax.f32 %v3246, 0.0
    %v3251 = vadd.f32 %v3021, %v3247
    %v3252 = vadd.f32 %v3022, %v3248
    %v3253 = vadd.f32 %v3023, %v3249
    %v3254 = vadd.f32 %v3024, %v3250
    %v3255 = vmul.f32 %v3251, %v2951
    %v3256 = vmul.f32 %v3252, %v2956
    %v3257 = vmul.f32 %v3253, %v2961
    %v3258 = vmul.f32 %v3254, %v2966
    %3259 = vmatpush.msra.mxu0 0.0
    %3260 = vmatpush.msra.mxu0 0.0
    %3261 = vmatpush.msra.mxu0 0.0
    %3262 = vmatpush.msra.mxu0 0.0
    %3263 = vmatpush.msra.mxu0 0.0
    %3264 = vmatpush.msra.mxu0 0.0
    %3265 = vmatpush.msra.mxu0 0.0
    %3266 = vmatpush.msra.mxu0 0.0
    %3267 = vmatpush.msra.mxu0 0.0
    %3268 = vmatpush.msra.mxu0 0.0
    %3269 = vmatpush.msra.mxu0 0.0
    %3270 = vmatpush.msra.mxu0 0.0
    %3271 = vmatpush.msra.mxu0 %v3258
    %3272 = vmatpush.msra.mxu0 %v3257
    %3273 = vmatpush.msra.mxu0 %v3256
    %3274 = vmatpush.msra.mxu0 %v3255
    %3275 = vmatmul.f32.gmra.mxu0 %v3034
    %v3276 = vpop.f32.mrf.mxu0
    %v3277 = vadd.f32 0.0, %v3276
    %3278 = vmatmul.f32.gmra.mxu0 %v3037
    %v3279 = vpop.f32.mrf.mxu0
    %v3280 = vadd.f32 0.0, %v3279
    %3281 = vmatmul.f32.gmra.mxu0 %v3040
    %v3282 = vpop.f32.mrf.mxu0
    %v3283 = vadd.f32 0.0, %v3282
    %3284 = vmatmul.f32.gmra.mxu0 %v3043
    %v3285 = vpop.f32.mrf.mxu0
    %v3286 = vadd.f32 0.0, %v3285
    %3287 = vmatmul.f32.gmra.mxu0 %v3046
    %v3288 = vpop.f32.mrf.mxu0
    %v3289 = vadd.f32 0.0, %v3288
    %3290 = vmatmul.f32.gmra.mxu0 %v3049
    %v3291 = vpop.f32.mrf.mxu0
    %v3292 = vadd.f32 0.0, %v3291
    %3293 = vmatmul.f32.gmra.mxu0 %v3052
    %v3294 = vpop.f32.mrf.mxu0
    %v3295 = vadd.f32 0.0, %v3294
    %3296 = vmatmul.f32.gmra.mxu0 %v3055
    %v3297 = vpop.f32.mrf.mxu0
    %v3298 = vadd.f32 0.0, %v3297
    %3299 = vdwg.mxu0
    %s3300 = scalar_lea.vmem [#allocation5], 96
    %v3301 = vld [vmem:[%s3300] sm:$0xff]
    %v3302 = vld [vmem:[%s3300 + $0x8] sm:$0xff]
    %v3303 = vld [vmem:[%s3300 + $0x10] sm:$0xff]
    %v3304 = vld [vmem:[%s3300 + $0x18] sm:$0xff]
    %s3305 = scalar_lea.vmem [#allocation5], 128
    %v3306 = vld [vmem:[%s3305] sm:$0xff]
    %v3307 = vld [vmem:[%s3305 + $0x8] sm:$0xff]
    %v3308 = vld [vmem:[%s3305 + $0x10] sm:$0xff]
    %v3309 = vld [vmem:[%s3305 + $0x18] sm:$0xff]
    %v3311 = vsel %vm193, %v3255, 0
    %v3314 = vsel %vm193, %v3256, 0
    %v3317 = vsel %vm193, %v3257, 0
    %v3320 = vsel %vm193, %v3258, 0
    %3322 = vmatpush.msra.mxu0 0.0
    %3323 = vmatpush.msra.mxu0 0.0
    %3324 = vmatpush.msra.mxu0 0.0
    %3325 = vmatpush.msra.mxu0 0.0
    %3326 = vmatpush.msra.mxu0 0.0
    %3327 = vmatpush.msra.mxu0 0.0
    %3328 = vmatpush.msra.mxu0 0.0
    %3329 = vmatpush.msra.mxu0 0.0
    %3330 = vmatpush.msra.mxu0 0.0
    %3331 = vmatpush.msra.mxu0 0.0
    %3332 = vmatpush.msra.mxu0 0.0
    %3333 = vmatpush.msra.mxu0 0.0
    %3334 = vmatpush.msra.mxu0 %v3309
    %3335 = vmatpush.msra.mxu0 %v3308
    %3336 = vmatpush.msra.mxu0 %v3307
    %3337 = vmatpush.msra.mxu0 %v3306
    %3338 = vmatmul.f32.gmra.mxu0 %v3311
    %v3339 = vpop.f32.mrf.mxu0
    %v3340 = vadd.f32 0.0, %v3339
    %3341 = vmatmul.f32.gmra.mxu0 %v3314
    %v3342 = vpop.f32.mrf.mxu0
    %v3343 = vadd.f32 0.0, %v3342
    %3344 = vmatmul.f32.gmra.mxu0 %v3317
    %v3345 = vpop.f32.mrf.mxu0
    %v3346 = vadd.f32 0.0, %v3345
    %3347 = vmatmul.f32.gmra.mxu0 %v3320
    %v3348 = vpop.f32.mrf.mxu0
    %v3349 = vadd.f32 0.0, %v3348
    %3350 = vdwg.mxu0
    %v3352 = vsel %vm193, %v3277, 0
    %v3355 = vsel %vm193, %v3280, 0
    %v3358 = vsel %vm193, %v3283, 0
    %v3361 = vsel %vm193, %v3286, 0
    %3363 = vmatpush.msra.mxu0 0.0
    %3364 = vmatpush.msra.mxu0 0.0
    %3365 = vmatpush.msra.mxu0 0.0
    %3366 = vmatpush.msra.mxu0 0.0
    %3367 = vmatpush.msra.mxu0 0.0
    %3368 = vmatpush.msra.mxu0 0.0
    %3369 = vmatpush.msra.mxu0 0.0
    %3370 = vmatpush.msra.mxu0 0.0
    %3371 = vmatpush.msra.mxu0 0.0
    %3372 = vmatpush.msra.mxu0 0.0
    %3373 = vmatpush.msra.mxu0 0.0
    %3374 = vmatpush.msra.mxu0 0.0
    %3375 = vmatpush.msra.mxu0 %v3304
    %3376 = vmatpush.msra.mxu0 %v3303
    %3377 = vmatpush.msra.mxu0 %v3302
    %3378 = vmatpush.msra.mxu0 %v3301
    %3379 = vmatmul.f32.gmra.mxu0 %v3352
    %v3380 = vpop.f32.mrf.mxu0
    %v3381 = vadd.f32 %v3340, %v3380
    %3382 = vmatmul.f32.gmra.mxu0 %v3355
    %v3383 = vpop.f32.mrf.mxu0
    %v3384 = vadd.f32 %v3343, %v3383
    %3385 = vmatmul.f32.gmra.mxu0 %v3358
    %v3386 = vpop.f32.mrf.mxu0
    %v3387 = vadd.f32 %v3346, %v3386
    %3388 = vmatmul.f32.gmra.mxu0 %v3361
    %v3389 = vpop.f32.mrf.mxu0
    %v3390 = vadd.f32 %v3349, %v3389
    %3391 = vdwg.mxu0
    %s3392 = scalar_lea.vmem [#allocation5], 160
    %v3393 = vld [vmem:[%s3392] sm:$0xff]
    %v3394 = vld [vmem:[%s3392 + $0x8] sm:$0xff]
    %v3395 = vld [vmem:[%s3392 + $0x10] sm:$0xff]
    %v3396 = vld [vmem:[%s3392 + $0x18] sm:$0xff]
    %v3398 = vsel %vm193, %v3289, 0
    %v3401 = vsel %vm193, %v3292, 0
    %v3404 = vsel %vm193, %v3295, 0
    %v3407 = vsel %vm193, %v3298, 0
    %3409 = vmatpush.msra.mxu0 0.0
    %3410 = vmatpush.msra.mxu0 0.0
    %3411 = vmatpush.msra.mxu0 0.0
    %3412 = vmatpush.msra.mxu0 0.0
    %3413 = vmatpush.msra.mxu0 0.0
    %3414 = vmatpush.msra.mxu0 0.0
    %3415 = vmatpush.msra.mxu0 0.0
    %3416 = vmatpush.msra.mxu0 0.0
    %3417 = vmatpush.msra.mxu0 0.0
    %3418 = vmatpush.msra.mxu0 0.0
    %3419 = vmatpush.msra.mxu0 0.0
    %3420 = vmatpush.msra.mxu0 0.0
    %3421 = vmatpush.msra.mxu0 %v3396
    %3422 = vmatpush.msra.mxu0 %v3395
    %3423 = vmatpush.msra.mxu0 %v3394
    %3424 = vmatpush.msra.mxu0 %v3393
    %3425 = vmatmul.f32.gmra.mxu0 %v3398
    %v3426 = vpop.f32.mrf.mxu0
    %v3427 = vadd.f32 0.0, %v3426
    %3428 = vmatmul.f32.gmra.mxu0 %v3401
    %v3429 = vpop.f32.mrf.mxu0
    %v3430 = vadd.f32 0.0, %v3429
    %3431 = vmatmul.f32.gmra.mxu0 %v3404
    %v3432 = vpop.f32.mrf.mxu0
    %v3433 = vadd.f32 0.0, %v3432
    %3434 = vmatmul.f32.gmra.mxu0 %v3407
    %v3435 = vpop.f32.mrf.mxu0
    %v3436 = vadd.f32 0.0, %v3435
    %3437 = vdwg.mxu0
    %v3438 = vadd.f32 %v3381, %v3427
    %v3439 = vadd.f32 %v3384, %v3430
    %v3440 = vadd.f32 %v3387, %v3433
    %v3441 = vadd.f32 %v3390, %v3436
    %s3442 = scalar_lea.vmem %s59, 1
    %v3443 = vld [vmem:[%s3442] sm:$0x1]
    %v3445 = vperm.slane %v3443, 0
    %v3447 = vadd.f32 %v3438, %v3445
    %v3448 = vadd.f32 %v3439, %v3445
    %v3449 = vadd.f32 %v3440, %v3445
    %v3450 = vadd.f32 %v3441, %v3445
    %v3451 = vmax.f32 %v3447, 0.0
    %v3452 = vmax.f32 %v3448, 0.0
    %v3453 = vmax.f32 %v3449, 0.0
    %v3454 = vmax.f32 %v3450, 0.0
    %v3455 = vadd.f32 %v3255, %v3451
    %v3456 = vadd.f32 %v3256, %v3452
    %v3457 = vadd.f32 %v3257, %v3453
    %v3458 = vadd.f32 %v3258, %v3454
    %v3459 = vmul.f32 %v3455, %v2951
    %v3460 = vmul.f32 %v3456, %v2956
    %v3461 = vmul.f32 %v3457, %v2961
    %v3462 = vmul.f32 %v3458, %v2966
    %3463 = vmatpush.msra.mxu0 0.0
    %3464 = vmatpush.msra.mxu0 0.0
    %3465 = vmatpush.msra.mxu0 0.0
    %3466 = vmatpush.msra.mxu0 0.0
    %3467 = vmatpush.msra.mxu0 0.0
    %3468 = vmatpush.msra.mxu0 0.0
    %3469 = vmatpush.msra.mxu0 0.0
    %3470 = vmatpush.msra.mxu0 0.0
    %3471 = vmatpush.msra.mxu0 0.0
    %3472 = vmatpush.msra.mxu0 0.0
    %3473 = vmatpush.msra.mxu0 0.0
    %3474 = vmatpush.msra.mxu0 0.0
    %3475 = vmatpush.msra.mxu0 %v3462
    %3476 = vmatpush.msra.mxu0 %v3461
    %3477 = vmatpush.msra.mxu0 %v3460
    %3478 = vmatpush.msra.mxu0 %v3459
    %3479 = vmatmul.f32.gmra.mxu0 %v3034
    %v3480 = vpop.f32.mrf.mxu0
    %v3481 = vadd.f32 0.0, %v3480
    %3482 = vmatmul.f32.gmra.mxu0 %v3037
    %v3483 = vpop.f32.mrf.mxu0
    %v3484 = vadd.f32 0.0, %v3483
    %3485 = vmatmul.f32.gmra.mxu0 %v3040
    %v3486 = vpop.f32.mrf.mxu0
    %v3487 = vadd.f32 0.0, %v3486
    %3488 = vmatmul.f32.gmra.mxu0 %v3043
    %v3489 = vpop.f32.mrf.mxu0
    %v3490 = vadd.f32 0.0, %v3489
    %3491 = vmatmul.f32.gmra.mxu0 %v3046
    %v3492 = vpop.f32.mrf.mxu0
    %v3493 = vadd.f32 0.0, %v3492
    %3494 = vmatmul.f32.gmra.mxu0 %v3049
    %v3495 = vpop.f32.mrf.mxu0
    %v3496 = vadd.f32 0.0, %v3495
    %3497 = vmatmul.f32.gmra.mxu0 %v3052
    %v3498 = vpop.f32.mrf.mxu0
    %v3499 = vadd.f32 0.0, %v3498
    %3500 = vmatmul.f32.gmra.mxu0 %v3055
    %v3501 = vpop.f32.mrf.mxu0
    %v3502 = vadd.f32 0.0, %v3501
    %3503 = vdwg.mxu0
    %s3504 = scalar_lea.vmem [#allocation5], 192
    %v3505 = vld [vmem:[%s3504] sm:$0xff]
    %v3506 = vld [vmem:[%s3504 + $0x8] sm:$0xff]
    %v3507 = vld [vmem:[%s3504 + $0x10] sm:$0xff]
    %v3508 = vld [vmem:[%s3504 + $0x18] sm:$0xff]
    %s3509 = scalar_lea.vmem [#allocation5], 224
    %v3510 = vld [vmem:[%s3509] sm:$0xff]
    %v3511 = vld [vmem:[%s3509 + $0x8] sm:$0xff]
    %v3512 = vld [vmem:[%s3509 + $0x10] sm:$0xff]
    %v3513 = vld [vmem:[%s3509 + $0x18] sm:$0xff]
    %v3515 = vsel %vm193, %v3459, 0
    %v3518 = vsel %vm193, %v3460, 0
    %v3521 = vsel %vm193, %v3461, 0
    %v3524 = vsel %vm193, %v3462, 0
    %3526 = vmatpush.msra.mxu0 0.0
    %3527 = vmatpush.msra.mxu0 0.0
    %3528 = vmatpush.msra.mxu0 0.0
    %3529 = vmatpush.msra.mxu0 0.0
    %3530 = vmatpush.msra.mxu0 0.0
    %3531 = vmatpush.msra.mxu0 0.0
    %3532 = vmatpush.msra.mxu0 0.0
    %3533 = vmatpush.msra.mxu0 0.0
    %3534 = vmatpush.msra.mxu0 0.0
    %3535 = vmatpush.msra.mxu0 0.0
    %3536 = vmatpush.msra.mxu0 0.0
    %3537 = vmatpush.msra.mxu0 0.0
    %3538 = vmatpush.msra.mxu0 %v3513
    %3539 = vmatpush.msra.mxu0 %v3512
    %3540 = vmatpush.msra.mxu0 %v3511
    %3541 = vmatpush.msra.mxu0 %v3510
    %3542 = vmatmul.f32.gmra.mxu0 %v3515
    %v3543 = vpop.f32.mrf.mxu0
    %v3544 = vadd.f32 0.0, %v3543
    %3545 = vmatmul.f32.gmra.mxu0 %v3518
    %v3546 = vpop.f32.mrf.mxu0
    %v3547 = vadd.f32 0.0, %v3546
    %3548 = vmatmul.f32.gmra.mxu0 %v3521
    %v3549 = vpop.f32.mrf.mxu0
    %v3550 = vadd.f32 0.0, %v3549
    %3551 = vmatmul.f32.gmra.mxu0 %v3524
    %v3552 = vpop.f32.mrf.mxu0
    %v3553 = vadd.f32 0.0, %v3552
    %3554 = vdwg.mxu0
    %v3556 = vsel %vm193, %v3481, 0
    %v3559 = vsel %vm193, %v3484, 0
    %v3562 = vsel %vm193, %v3487, 0
    %v3565 = vsel %vm193, %v3490, 0
    %3567 = vmatpush.msra.mxu0 0.0
    %3568 = vmatpush.msra.mxu0 0.0
    %3569 = vmatpush.msra.mxu0 0.0
    %3570 = vmatpush.msra.mxu0 0.0
    %3571 = vmatpush.msra.mxu0 0.0
    %3572 = vmatpush.msra.mxu0 0.0
    %3573 = vmatpush.msra.mxu0 0.0
    %3574 = vmatpush.msra.mxu0 0.0
    %3575 = vmatpush.msra.mxu0 0.0
    %3576 = vmatpush.msra.mxu0 0.0
    %3577 = vmatpush.msra.mxu0 0.0
    %3578 = vmatpush.msra.mxu0 0.0
    %3579 = vmatpush.msra.mxu0 %v3508
    %3580 = vmatpush.msra.mxu0 %v3507
    %3581 = vmatpush.msra.mxu0 %v3506
    %3582 = vmatpush.msra.mxu0 %v3505
    %3583 = vmatmul.f32.gmra.mxu0 %v3556
    %v3584 = vpop.f32.mrf.mxu0
    %v3585 = vadd.f32 %v3544, %v3584
    %3586 = vmatmul.f32.gmra.mxu0 %v3559
    %v3587 = vpop.f32.mrf.mxu0
    %v3588 = vadd.f32 %v3547, %v3587
    %3589 = vmatmul.f32.gmra.mxu0 %v3562
    %v3590 = vpop.f32.mrf.mxu0
    %v3591 = vadd.f32 %v3550, %v3590
    %3592 = vmatmul.f32.gmra.mxu0 %v3565
    %v3593 = vpop.f32.mrf.mxu0
    %v3594 = vadd.f32 %v3553, %v3593
    %3595 = vdwg.mxu0
    %s3596 = scalar_lea.vmem [#allocation5], 256
    %v3597 = vld [vmem:[%s3596] sm:$0xff]
    %v3598 = vld [vmem:[%s3596 + $0x8] sm:$0xff]
    %v3599 = vld [vmem:[%s3596 + $0x10] sm:$0xff]
    %v3600 = vld [vmem:[%s3596 + $0x18] sm:$0xff]
    %v3602 = vsel %vm193, %v3493, 0
    %v3605 = vsel %vm193, %v3496, 0
    %v3608 = vsel %vm193, %v3499, 0
    %v3611 = vsel %vm193, %v3502, 0
    %3613 = vmatpush.msra.mxu0 0.0
    %3614 = vmatpush.msra.mxu0 0.0
    %3615 = vmatpush.msra.mxu0 0.0
    %3616 = vmatpush.msra.mxu0 0.0
    %3617 = vmatpush.msra.mxu0 0.0
    %3618 = vmatpush.msra.mxu0 0.0
    %3619 = vmatpush.msra.mxu0 0.0
    %3620 = vmatpush.msra.mxu0 0.0
    %3621 = vmatpush.msra.mxu0 0.0
    %3622 = vmatpush.msra.mxu0 0.0
    %3623 = vmatpush.msra.mxu0 0.0
    %3624 = vmatpush.msra.mxu0 0.0
    %3625 = vmatpush.msra.mxu0 %v3600
    %3626 = vmatpush.msra.mxu0 %v3599
    %3627 = vmatpush.msra.mxu0 %v3598
    %3628 = vmatpush.msra.mxu0 %v3597
    %3629 = vmatmul.f32.gmra.mxu0 %v3602
    %v3630 = vpop.f32.mrf.mxu0
    %v3631 = vadd.f32 0.0, %v3630
    %3632 = vmatmul.f32.gmra.mxu0 %v3605
    %v3633 = vpop.f32.mrf.mxu0
    %v3634 = vadd.f32 0.0, %v3633
    %3635 = vmatmul.f32.gmra.mxu0 %v3608
    %v3636 = vpop.f32.mrf.mxu0
    %v3637 = vadd.f32 0.0, %v3636
    %3638 = vmatmul.f32.gmra.mxu0 %v3611
    %v3639 = vpop.f32.mrf.mxu0
    %v3640 = vadd.f32 0.0, %v3639
    %3641 = vdwg.mxu0
    %v3642 = vadd.f32 %v3585, %v3631
    %v3643 = vadd.f32 %v3588, %v3634
    %v3644 = vadd.f32 %v3591, %v3637
    %v3645 = vadd.f32 %v3594, %v3640
    %s3646 = scalar_lea.vmem %s59, 2
    %v3647 = vld [vmem:[%s3646] sm:$0x1]
    %v3649 = vperm.slane %v3647, 0
    %v3651 = vadd.f32 %v3642, %v3649
    %v3652 = vadd.f32 %v3643, %v3649
    %v3653 = vadd.f32 %v3644, %v3649
    %v3654 = vadd.f32 %v3645, %v3649
    %v3655 = vmax.f32 %v3651, 0.0
    %v3656 = vmax.f32 %v3652, 0.0
    %v3657 = vmax.f32 %v3653, 0.0
    %v3658 = vmax.f32 %v3654, 0.0
    %v3659 = vadd.f32 %v3459, %v3655
    %v3660 = vadd.f32 %v3460, %v3656
    %v3661 = vadd.f32 %v3461, %v3657
    %v3662 = vadd.f32 %v3462, %v3658
    %v3663 = vmul.f32 %v3659, %v2951
    %v3664 = vmul.f32 %v3660, %v2956
    %v3665 = vmul.f32 %v3661, %v2961
    %v3666 = vmul.f32 %v3662, %v2966
    %3667 = vmatpush.msra.mxu0 0.0
    %3668 = vmatpush.msra.mxu0 0.0
    %3669 = vmatpush.msra.mxu0 0.0
    %3670 = vmatpush.msra.mxu0 0.0
    %3671 = vmatpush.msra.mxu0 0.0
    %3672 = vmatpush.msra.mxu0 0.0
    %3673 = vmatpush.msra.mxu0 0.0
    %3674 = vmatpush.msra.mxu0 0.0
    %3675 = vmatpush.msra.mxu0 0.0
    %3676 = vmatpush.msra.mxu0 0.0
    %3677 = vmatpush.msra.mxu0 0.0
    %3678 = vmatpush.msra.mxu0 0.0
    %3679 = vmatpush.msra.mxu0 %v3666
    %3680 = vmatpush.msra.mxu0 %v3665
    %3681 = vmatpush.msra.mxu0 %v3664
    %3682 = vmatpush.msra.mxu0 %v3663
    %3683 = vmatmul.f32.gmra.mxu0 %v3034
    %v3684 = vpop.f32.mrf.mxu0
    %v3685 = vadd.f32 0.0, %v3684
    %3686 = vmatmul.f32.gmra.mxu0 %v3037
    %v3687 = vpop.f32.mrf.mxu0
    %v3688 = vadd.f32 0.0, %v3687
    %3689 = vmatmul.f32.gmra.mxu0 %v3040
    %v3690 = vpop.f32.mrf.mxu0
    %v3691 = vadd.f32 0.0, %v3690
    %3692 = vmatmul.f32.gmra.mxu0 %v3043
    %v3693 = vpop.f32.mrf.mxu0
    %v3694 = vadd.f32 0.0, %v3693
    %3695 = vmatmul.f32.gmra.mxu0 %v3046
    %v3696 = vpop.f32.mrf.mxu0
    %v3697 = vadd.f32 0.0, %v3696
    %3698 = vmatmul.f32.gmra.mxu0 %v3049
    %v3699 = vpop.f32.mrf.mxu0
    %v3700 = vadd.f32 0.0, %v3699
    %3701 = vmatmul.f32.gmra.mxu0 %v3052
    %v3702 = vpop.f32.mrf.mxu0
    %v3703 = vadd.f32 0.0, %v3702
    %3704 = vmatmul.f32.gmra.mxu0 %v3055
    %v3705 = vpop.f32.mrf.mxu0
    %v3706 = vadd.f32 0.0, %v3705
    %3707 = vdwg.mxu0
    %s3708 = scalar_lea.vmem [#allocation5], 288
    %v3709 = vld [vmem:[%s3708] sm:$0xff]
    %v3710 = vld [vmem:[%s3708 + $0x8] sm:$0xff]
    %v3711 = vld [vmem:[%s3708 + $0x10] sm:$0xff]
    %v3712 = vld [vmem:[%s3708 + $0x18] sm:$0xff]
    %s3713 = scalar_lea.vmem [#allocation5], 320
    %v3714 = vld [vmem:[%s3713] sm:$0xff]
    %v3715 = vld [vmem:[%s3713 + $0x8] sm:$0xff]
    %v3716 = vld [vmem:[%s3713 + $0x10] sm:$0xff]
    %v3717 = vld [vmem:[%s3713 + $0x18] sm:$0xff]
    %v3719 = vsel %vm193, %v3663, 0
    %v3722 = vsel %vm193, %v3664, 0
    %v3725 = vsel %vm193, %v3665, 0
    %v3728 = vsel %vm193, %v3666, 0
    %3730 = vmatpush.msra.mxu0 0.0
    %3731 = vmatpush.msra.mxu0 0.0
    %3732 = vmatpush.msra.mxu0 0.0
    %3733 = vmatpush.msra.mxu0 0.0
    %3734 = vmatpush.msra.mxu0 0.0
    %3735 = vmatpush.msra.mxu0 0.0
    %3736 = vmatpush.msra.mxu0 0.0
    %3737 = vmatpush.msra.mxu0 0.0
    %3738 = vmatpush.msra.mxu0 0.0
    %3739 = vmatpush.msra.mxu0 0.0
    %3740 = vmatpush.msra.mxu0 0.0
    %3741 = vmatpush.msra.mxu0 0.0
    %3742 = vmatpush.msra.mxu0 %v3717
    %3743 = vmatpush.msra.mxu0 %v3716
    %3744 = vmatpush.msra.mxu0 %v3715
    %3745 = vmatpush.msra.mxu0 %v3714
    %3746 = vmatmul.f32.gmra.mxu0 %v3719
    %v3747 = vpop.f32.mrf.mxu0
    %v3748 = vadd.f32 0.0, %v3747
    %3749 = vmatmul.f32.gmra.mxu0 %v3722
    %v3750 = vpop.f32.mrf.mxu0
    %v3751 = vadd.f32 0.0, %v3750
    %3752 = vmatmul.f32.gmra.mxu0 %v3725
    %v3753 = vpop.f32.mrf.mxu0
    %v3754 = vadd.f32 0.0, %v3753
    %3755 = vmatmul.f32.gmra.mxu0 %v3728
    %v3756 = vpop.f32.mrf.mxu0
    %v3757 = vadd.f32 0.0, %v3756
    %3758 = vdwg.mxu0
    %v3760 = vsel %vm193, %v3685, 0
    %v3763 = vsel %vm193, %v3688, 0
    %v3766 = vsel %vm193, %v3691, 0
    %v3769 = vsel %vm193, %v3694, 0
    %3771 = vmatpush.msra.mxu0 0.0
    %3772 = vmatpush.msra.mxu0 0.0
    %3773 = vmatpush.msra.mxu0 0.0
    %3774 = vmatpush.msra.mxu0 0.0
    %3775 = vmatpush.msra.mxu0 0.0
    %3776 = vmatpush.msra.mxu0 0.0
    %3777 = vmatpush.msra.mxu0 0.0
    %3778 = vmatpush.msra.mxu0 0.0
    %3779 = vmatpush.msra.mxu0 0.0
    %3780 = vmatpush.msra.mxu0 0.0
    %3781 = vmatpush.msra.mxu0 0.0
    %3782 = vmatpush.msra.mxu0 0.0
    %3783 = vmatpush.msra.mxu0 %v3712
    %3784 = vmatpush.msra.mxu0 %v3711
    %3785 = vmatpush.msra.mxu0 %v3710
    %3786 = vmatpush.msra.mxu0 %v3709
    %3787 = vmatmul.f32.gmra.mxu0 %v3760
    %v3788 = vpop.f32.mrf.mxu0
    %v3789 = vadd.f32 %v3748, %v3788
    %3790 = vmatmul.f32.gmra.mxu0 %v3763
    %v3791 = vpop.f32.mrf.mxu0
    %v3792 = vadd.f32 %v3751, %v3791
    %3793 = vmatmul.f32.gmra.mxu0 %v3766
    %v3794 = vpop.f32.mrf.mxu0
    %v3795 = vadd.f32 %v3754, %v3794
    %3796 = vmatmul.f32.gmra.mxu0 %v3769
    %v3797 = vpop.f32.mrf.mxu0
    %v3798 = vadd.f32 %v3757, %v3797
    %3799 = vdwg.mxu0
    %s3800 = scalar_lea.vmem [#allocation5], 352
    %v3801 = vld [vmem:[%s3800] sm:$0xff]
    %v3802 = vld [vmem:[%s3800 + $0x8] sm:$0xff]
    %v3803 = vld [vmem:[%s3800 + $0x10] sm:$0xff]
    %v3804 = vld [vmem:[%s3800 + $0x18] sm:$0xff]
    %v3806 = vsel %vm193, %v3697, 0
    %v3809 = vsel %vm193, %v3700, 0
    %v3812 = vsel %vm193, %v3703, 0
    %v3815 = vsel %vm193, %v3706, 0
    %3817 = vmatpush.msra.mxu0 0.0
    %3818 = vmatpush.msra.mxu0 0.0
    %3819 = vmatpush.msra.mxu0 0.0
    %3820 = vmatpush.msra.mxu0 0.0
    %3821 = vmatpush.msra.mxu0 0.0
    %3822 = vmatpush.msra.mxu0 0.0
    %3823 = vmatpush.msra.mxu0 0.0
    %3824 = vmatpush.msra.mxu0 0.0
    %3825 = vmatpush.msra.mxu0 0.0
    %3826 = vmatpush.msra.mxu0 0.0
    %3827 = vmatpush.msra.mxu0 0.0
    %3828 = vmatpush.msra.mxu0 0.0
    %3829 = vmatpush.msra.mxu0 %v3804
    %3830 = vmatpush.msra.mxu0 %v3803
    %3831 = vmatpush.msra.mxu0 %v3802
    %3832 = vmatpush.msra.mxu0 %v3801
    %3833 = vmatmul.f32.gmra.mxu0 %v3806
    %v3834 = vpop.f32.mrf.mxu0
    %v3835 = vadd.f32 0.0, %v3834
    %3836 = vmatmul.f32.gmra.mxu0 %v3809
    %v3837 = vpop.f32.mrf.mxu0
    %v3838 = vadd.f32 0.0, %v3837
    %3839 = vmatmul.f32.gmra.mxu0 %v3812
    %v3840 = vpop.f32.mrf.mxu0
    %v3841 = vadd.f32 0.0, %v3840
    %3842 = vmatmul.f32.gmra.mxu0 %v3815
    %v3843 = vpop.f32.mrf.mxu0
    %v3844 = vadd.f32 0.0, %v3843
    %3845 = vdwg.mxu0
    %v3846 = vadd.f32 %v3789, %v3835
    %v3847 = vadd.f32 %v3792, %v3838
    %v3848 = vadd.f32 %v3795, %v3841
    %v3849 = vadd.f32 %v3798, %v3844
    %s3850 = scalar_lea.vmem %s59, 3
    %v3851 = vld [vmem:[%s3850] sm:$0x1]
    %v3853 = vperm.slane %v3851, 0
    %v3855 = vadd.f32 %v3846, %v3853
    %v3856 = vadd.f32 %v3847, %v3853
    %v3857 = vadd.f32 %v3848, %v3853
    %v3858 = vadd.f32 %v3849, %v3853
    %v3859 = vmax.f32 %v3855, 0.0
    %v3860 = vmax.f32 %v3856, 0.0
    %v3861 = vmax.f32 %v3857, 0.0
    %v3862 = vmax.f32 %v3858, 0.0
    %v3863 = vadd.f32 %v3663, %v3859
    %v3864 = vadd.f32 %v3664, %v3860
    %v3865 = vadd.f32 %v3665, %v3861
    %v3866 = vadd.f32 %v3666, %v3862
    %v3867 = vmul.f32 %v3863, %v2951
    %v3868 = vmul.f32 %v3864, %v2956
    %v3869 = vmul.f32 %v3865, %v2961
    %v3870 = vmul.f32 %v3866, %v2966
    %3871 = vmatpush.msra.mxu0 0.0
    %3872 = vmatpush.msra.mxu0 0.0
    %3873 = vmatpush.msra.mxu0 0.0
    %3874 = vmatpush.msra.mxu0 0.0
    %3875 = vmatpush.msra.mxu0 0.0
    %3876 = vmatpush.msra.mxu0 0.0
    %3877 = vmatpush.msra.mxu0 0.0
    %3878 = vmatpush.msra.mxu0 0.0
    %3879 = vmatpush.msra.mxu0 0.0
    %3880 = vmatpush.msra.mxu0 0.0
    %3881 = vmatpush.msra.mxu0 0.0
    %3882 = vmatpush.msra.mxu0 0.0
    %3883 = vmatpush.msra.mxu0 %v3870
    %3884 = vmatpush.msra.mxu0 %v3869
    %3885 = vmatpush.msra.mxu0 %v3868
    %3886 = vmatpush.msra.mxu0 %v3867
    %3887 = vmatmul.f32.gmra.mxu0 %v3034
    %v3888 = vpop.f32.mrf.mxu0
    %v3889 = vadd.f32 0.0, %v3888
    %3890 = vmatmul.f32.gmra.mxu0 %v3037
    %v3891 = vpop.f32.mrf.mxu0
    %v3892 = vadd.f32 0.0, %v3891
    %3893 = vmatmul.f32.gmra.mxu0 %v3040
    %v3894 = vpop.f32.mrf.mxu0
    %v3895 = vadd.f32 0.0, %v3894
    %3896 = vmatmul.f32.gmra.mxu0 %v3043
    %v3897 = vpop.f32.mrf.mxu0
    %v3898 = vadd.f32 0.0, %v3897
    %3899 = vmatmul.f32.gmra.mxu0 %v3046
    %v3900 = vpop.f32.mrf.mxu0
    %v3901 = vadd.f32 0.0, %v3900
    %3902 = vmatmul.f32.gmra.mxu0 %v3049
    %v3903 = vpop.f32.mrf.mxu0
    %v3904 = vadd.f32 0.0, %v3903
    %3905 = vmatmul.f32.gmra.mxu0 %v3052
    %v3906 = vpop.f32.mrf.mxu0
    %v3907 = vadd.f32 0.0, %v3906
    %3908 = vmatmul.f32.gmra.mxu0 %v3055
    %v3909 = vpop.f32.mrf.mxu0
    %v3910 = vadd.f32 0.0, %v3909
    %3911 = vdwg.mxu0
    %s3912 = scalar_lea.vmem [#allocation5], 384
    %v3913 = vld [vmem:[%s3912] sm:$0xff]
    %v3914 = vld [vmem:[%s3912 + $0x8] sm:$0xff]
    %v3915 = vld [vmem:[%s3912 + $0x10] sm:$0xff]
    %v3916 = vld [vmem:[%s3912 + $0x18] sm:$0xff]
    %s3917 = scalar_lea.vmem [#allocation5], 416
    %v3918 = vld [vmem:[%s3917] sm:$0xff]
    %v3919 = vld [vmem:[%s3917 + $0x8] sm:$0xff]
    %v3920 = vld [vmem:[%s3917 + $0x10] sm:$0xff]
    %v3921 = vld [vmem:[%s3917 + $0x18] sm:$0xff]
    %v3923 = vsel %vm193, %v3867, 0
    %v3926 = vsel %vm193, %v3868, 0
    %v3929 = vsel %vm193, %v3869, 0
    %v3932 = vsel %vm193, %v3870, 0
    %3934 = vmatpush.msra.mxu0 0.0
    %3935 = vmatpush.msra.mxu0 0.0
    %3936 = vmatpush.msra.mxu0 0.0
    %3937 = vmatpush.msra.mxu0 0.0
    %3938 = vmatpush.msra.mxu0 0.0
    %3939 = vmatpush.msra.mxu0 0.0
    %3940 = vmatpush.msra.mxu0 0.0
    %3941 = vmatpush.msra.mxu0 0.0
    %3942 = vmatpush.msra.mxu0 0.0
    %3943 = vmatpush.msra.mxu0 0.0
    %3944 = vmatpush.msra.mxu0 0.0
    %3945 = vmatpush.msra.mxu0 0.0
    %3946 = vmatpush.msra.mxu0 %v3921
    %3947 = vmatpush.msra.mxu0 %v3920
    %3948 = vmatpush.msra.mxu0 %v3919
    %3949 = vmatpush.msra.mxu0 %v3918
    %3950 = vmatmul.f32.gmra.mxu0 %v3923
    %v3951 = vpop.f32.mrf.mxu0
    %v3952 = vadd.f32 0.0, %v3951
    %3953 = vmatmul.f32.gmra.mxu0 %v3926
    %v3954 = vpop.f32.mrf.mxu0
    %v3955 = vadd.f32 0.0, %v3954
    %3956 = vmatmul.f32.gmra.mxu0 %v3929
    %v3957 = vpop.f32.mrf.mxu0
    %v3958 = vadd.f32 0.0, %v3957
    %3959 = vmatmul.f32.gmra.mxu0 %v3932
    %v3960 = vpop.f32.mrf.mxu0
    %v3961 = vadd.f32 0.0, %v3960
    %3962 = vdwg.mxu0
    %v3964 = vsel %vm193, %v3889, 0
    %v3967 = vsel %vm193, %v3892, 0
    %v3970 = vsel %vm193, %v3895, 0
    %v3973 = vsel %vm193, %v3898, 0
    %3975 = vmatpush.msra.mxu0 0.0
    %3976 = vmatpush.msra.mxu0 0.0
    %3977 = vmatpush.msra.mxu0 0.0
    %3978 = vmatpush.msra.mxu0 0.0
    %3979 = vmatpush.msra.mxu0 0.0
    %3980 = vmatpush.msra.mxu0 0.0
    %3981 = vmatpush.msra.mxu0 0.0
    %3982 = vmatpush.msra.mxu0 0.0
    %3983 = vmatpush.msra.mxu0 0.0
    %3984 = vmatpush.msra.mxu0 0.0
    %3985 = vmatpush.msra.mxu0 0.0
    %3986 = vmatpush.msra.mxu0 0.0
    %3987 = vmatpush.msra.mxu0 %v3916
    %3988 = vmatpush.msra.mxu0 %v3915
    %3989 = vmatpush.msra.mxu0 %v3914
    %3990 = vmatpush.msra.mxu0 %v3913
    %3991 = vmatmul.f32.gmra.mxu0 %v3964
    %v3992 = vpop.f32.mrf.mxu0
    %v3993 = vadd.f32 %v3952, %v3992
    %3994 = vmatmul.f32.gmra.mxu0 %v3967
    %v3995 = vpop.f32.mrf.mxu0
    %v3996 = vadd.f32 %v3955, %v3995
    %3997 = vmatmul.f32.gmra.mxu0 %v3970
    %v3998 = vpop.f32.mrf.mxu0
    %v3999 = vadd.f32 %v3958, %v3998
    %4000 = vmatmul.f32.gmra.mxu0 %v3973
    %v4001 = vpop.f32.mrf.mxu0
    %v4002 = vadd.f32 %v3961, %v4001
    %4003 = vdwg.mxu0
    %s4004 = scalar_lea.vmem [#allocation5], 448
    %v4005 = vld [vmem:[%s4004] sm:$0xff]
    %v4006 = vld [vmem:[%s4004 + $0x8] sm:$0xff]
    %v4007 = vld [vmem:[%s4004 + $0x10] sm:$0xff]
    %v4008 = vld [vmem:[%s4004 + $0x18] sm:$0xff]
    %v4010 = vsel %vm193, %v3901, 0
    %v4013 = vsel %vm193, %v3904, 0
    %v4016 = vsel %vm193, %v3907, 0
    %v4019 = vsel %vm193, %v3910, 0
    %4021 = vmatpush.msra.mxu0 0.0
    %4022 = vmatpush.msra.mxu0 0.0
    %4023 = vmatpush.msra.mxu0 0.0
    %4024 = vmatpush.msra.mxu0 0.0
    %4025 = vmatpush.msra.mxu0 0.0
    %4026 = vmatpush.msra.mxu0 0.0
    %4027 = vmatpush.msra.mxu0 0.0
    %4028 = vmatpush.msra.mxu0 0.0
    %4029 = vmatpush.msra.mxu0 0.0
    %4030 = vmatpush.msra.mxu0 0.0
    %4031 = vmatpush.msra.mxu0 0.0
    %4032 = vmatpush.msra.mxu0 0.0
    %4033 = vmatpush.msra.mxu0 %v4008
    %4034 = vmatpush.msra.mxu0 %v4007
    %4035 = vmatpush.msra.mxu0 %v4006
    %4036 = vmatpush.msra.mxu0 %v4005
    %4037 = vmatmul.f32.gmra.mxu0 %v4010
    %v4038 = vpop.f32.mrf.mxu0
    %v4039 = vadd.f32 0.0, %v4038
    %4040 = vmatmul.f32.gmra.mxu0 %v4013
    %v4041 = vpop.f32.mrf.mxu0
    %v4042 = vadd.f32 0.0, %v4041
    %4043 = vmatmul.f32.gmra.mxu0 %v4016
    %v4044 = vpop.f32.mrf.mxu0
    %v4045 = vadd.f32 0.0, %v4044
    %4046 = vmatmul.f32.gmra.mxu0 %v4019
    %v4047 = vpop.f32.mrf.mxu0
    %v4048 = vadd.f32 0.0, %v4047
    %4049 = vdwg.mxu0
    %v4050 = vadd.f32 %v3993, %v4039
    %v4051 = vadd.f32 %v3996, %v4042
    %v4052 = vadd.f32 %v3999, %v4045
    %v4053 = vadd.f32 %v4002, %v4048
    %s4054 = scalar_lea.vmem %s59, 4
    %v4055 = vld [vmem:[%s4054] sm:$0x1]
    %v4057 = vperm.slane %v4055, 0
    %v4059 = vadd.f32 %v4050, %v4057
    %v4060 = vadd.f32 %v4051, %v4057
    %v4061 = vadd.f32 %v4052, %v4057
    %v4062 = vadd.f32 %v4053, %v4057
    %v4063 = vmax.f32 %v4059, 0.0
    %v4064 = vmax.f32 %v4060, 0.0
    %v4065 = vmax.f32 %v4061, 0.0
    %v4066 = vmax.f32 %v4062, 0.0
    %v4067 = vadd.f32 %v3867, %v4063
    %v4068 = vadd.f32 %v3868, %v4064
    %v4069 = vadd.f32 %v3869, %v4065
    %v4070 = vadd.f32 %v3870, %v4066
    %v4071 = vmul.f32 %v4067, %v2951
    %v4072 = vmul.f32 %v4068, %v2956
    %v4073 = vmul.f32 %v4069, %v2961
    %v4074 = vmul.f32 %v4070, %v2966
    %4075 = vmatpush.msra.mxu0 0.0
    %4076 = vmatpush.msra.mxu0 0.0
    %4077 = vmatpush.msra.mxu0 0.0
    %4078 = vmatpush.msra.mxu0 0.0
    %4079 = vmatpush.msra.mxu0 0.0
    %4080 = vmatpush.msra.mxu0 0.0
    %4081 = vmatpush.msra.mxu0 0.0
    %4082 = vmatpush.msra.mxu0 0.0
    %4083 = vmatpush.msra.mxu0 0.0
    %4084 = vmatpush.msra.mxu0 0.0
    %4085 = vmatpush.msra.mxu0 0.0
    %4086 = vmatpush.msra.mxu0 0.0
    %4087 = vmatpush.msra.mxu0 %v4074
    %4088 = vmatpush.msra.mxu0 %v4073
    %4089 = vmatpush.msra.mxu0 %v4072
    %4090 = vmatpush.msra.mxu0 %v4071
    %4091 = vmatmul.f32.gmra.mxu0 %v3034
    %v4092 = vpop.f32.mrf.mxu0
    %v4093 = vadd.f32 0.0, %v4092
    %4094 = vmatmul.f32.gmra.mxu0 %v3037
    %v4095 = vpop.f32.mrf.mxu0
    %v4096 = vadd.f32 0.0, %v4095
    %4097 = vmatmul.f32.gmra.mxu0 %v3040
    %v4098 = vpop.f32.mrf.mxu0
    %v4099 = vadd.f32 0.0, %v4098
    %4100 = vmatmul.f32.gmra.mxu0 %v3043
    %v4101 = vpop.f32.mrf.mxu0
    %v4102 = vadd.f32 0.0, %v4101
    %4103 = vmatmul.f32.gmra.mxu0 %v3046
    %v4104 = vpop.f32.mrf.mxu0
    %v4105 = vadd.f32 0.0, %v4104
    %4106 = vmatmul.f32.gmra.mxu0 %v3049
    %v4107 = vpop.f32.mrf.mxu0
    %v4108 = vadd.f32 0.0, %v4107
    %4109 = vmatmul.f32.gmra.mxu0 %v3052
    %v4110 = vpop.f32.mrf.mxu0
    %v4111 = vadd.f32 0.0, %v4110
    %4112 = vmatmul.f32.gmra.mxu0 %v3055
    %v4113 = vpop.f32.mrf.mxu0
    %v4114 = vadd.f32 0.0, %v4113
    %4115 = vdwg.mxu0
    %s4116 = scalar_lea.vmem [#allocation5], 480
    %v4117 = vld [vmem:[%s4116] sm:$0xff]
    %v4118 = vld [vmem:[%s4116 + $0x8] sm:$0xff]
    %v4119 = vld [vmem:[%s4116 + $0x10] sm:$0xff]
    %v4120 = vld [vmem:[%s4116 + $0x18] sm:$0xff]
    %s4121 = scalar_lea.vmem [#allocation5], 512
    %v4122 = vld [vmem:[%s4121] sm:$0xff]
    %v4123 = vld [vmem:[%s4121 + $0x8] sm:$0xff]
    %v4124 = vld [vmem:[%s4121 + $0x10] sm:$0xff]
    %v4125 = vld [vmem:[%s4121 + $0x18] sm:$0xff]
    %v4127 = vsel %vm193, %v4071, 0
    %v4130 = vsel %vm193, %v4072, 0
    %v4133 = vsel %vm193, %v4073, 0
    %v4136 = vsel %vm193, %v4074, 0
    %4138 = vmatpush.msra.mxu0 0.0
    %4139 = vmatpush.msra.mxu0 0.0
    %4140 = vmatpush.msra.mxu0 0.0
    %4141 = vmatpush.msra.mxu0 0.0
    %4142 = vmatpush.msra.mxu0 0.0
    %4143 = vmatpush.msra.mxu0 0.0
    %4144 = vmatpush.msra.mxu0 0.0
    %4145 = vmatpush.msra.mxu0 0.0
    %4146 = vmatpush.msra.mxu0 0.0
    %4147 = vmatpush.msra.mxu0 0.0
    %4148 = vmatpush.msra.mxu0 0.0
    %4149 = vmatpush.msra.mxu0 0.0
    %4150 = vmatpush.msra.mxu0 %v4125
    %4151 = vmatpush.msra.mxu0 %v4124
    %4152 = vmatpush.msra.mxu0 %v4123
    %4153 = vmatpush.msra.mxu0 %v4122
    %4154 = vmatmul.f32.gmra.mxu0 %v4127
    %v4155 = vpop.f32.mrf.mxu0
    %v4156 = vadd.f32 0.0, %v4155
    %4157 = vmatmul.f32.gmra.mxu0 %v4130
    %v4158 = vpop.f32.mrf.mxu0
    %v4159 = vadd.f32 0.0, %v4158
    %4160 = vmatmul.f32.gmra.mxu0 %v4133
    %v4161 = vpop.f32.mrf.mxu0
    %v4162 = vadd.f32 0.0, %v4161
    %4163 = vmatmul.f32.gmra.mxu0 %v4136
    %v4164 = vpop.f32.mrf.mxu0
    %v4165 = vadd.f32 0.0, %v4164
    %4166 = vdwg.mxu0
    %v4168 = vsel %vm193, %v4093, 0
    %v4171 = vsel %vm193, %v4096, 0
    %v4174 = vsel %vm193, %v4099, 0
    %v4177 = vsel %vm193, %v4102, 0
    %4179 = vmatpush.msra.mxu0 0.0
    %4180 = vmatpush.msra.mxu0 0.0
    %4181 = vmatpush.msra.mxu0 0.0
    %4182 = vmatpush.msra.mxu0 0.0
    %4183 = vmatpush.msra.mxu0 0.0
    %4184 = vmatpush.msra.mxu0 0.0
    %4185 = vmatpush.msra.mxu0 0.0
    %4186 = vmatpush.msra.mxu0 0.0
    %4187 = vmatpush.msra.mxu0 0.0
    %4188 = vmatpush.msra.mxu0 0.0
    %4189 = vmatpush.msra.mxu0 0.0
    %4190 = vmatpush.msra.mxu0 0.0
    %4191 = vmatpush.msra.mxu0 %v4120
    %4192 = vmatpush.msra.mxu0 %v4119
    %4193 = vmatpush.msra.mxu0 %v4118
    %4194 = vmatpush.msra.mxu0 %v4117
    %4195 = vmatmul.f32.gmra.mxu0 %v4168
    %v4196 = vpop.f32.mrf.mxu0
    %v4197 = vadd.f32 %v4156, %v4196
    %4198 = vmatmul.f32.gmra.mxu0 %v4171
    %v4199 = vpop.f32.mrf.mxu0
    %v4200 = vadd.f32 %v4159, %v4199
    %4201 = vmatmul.f32.gmra.mxu0 %v4174
    %v4202 = vpop.f32.mrf.mxu0
    %v4203 = vadd.f32 %v4162, %v4202
    %4204 = vmatmul.f32.gmra.mxu0 %v4177
    %v4205 = vpop.f32.mrf.mxu0
    %v4206 = vadd.f32 %v4165, %v4205
    %4207 = vdwg.mxu0
    %s4208 = scalar_lea.vmem [#allocation5], 544
    %v4209 = vld [vmem:[%s4208] sm:$0xff]
    %v4210 = vld [vmem:[%s4208 + $0x8] sm:$0xff]
    %v4211 = vld [vmem:[%s4208 + $0x10] sm:$0xff]
    %v4212 = vld [vmem:[%s4208 + $0x18] sm:$0xff]
    %v4214 = vsel %vm193, %v4105, 0
    %v4217 = vsel %vm193, %v4108, 0
    %v4220 = vsel %vm193, %v4111, 0
    %v4223 = vsel %vm193, %v4114, 0
    %4225 = vmatpush.msra.mxu0 0.0
    %4226 = vmatpush.msra.mxu0 0.0
    %4227 = vmatpush.msra.mxu0 0.0
    %4228 = vmatpush.msra.mxu0 0.0
    %4229 = vmatpush.msra.mxu0 0.0
    %4230 = vmatpush.msra.mxu0 0.0
    %4231 = vmatpush.msra.mxu0 0.0
    %4232 = vmatpush.msra.mxu0 0.0
    %4233 = vmatpush.msra.mxu0 0.0
    %4234 = vmatpush.msra.mxu0 0.0
    %4235 = vmatpush.msra.mxu0 0.0
    %4236 = vmatpush.msra.mxu0 0.0
    %4237 = vmatpush.msra.mxu0 %v4212
    %4238 = vmatpush.msra.mxu0 %v4211
    %4239 = vmatpush.msra.mxu0 %v4210
    %4240 = vmatpush.msra.mxu0 %v4209
    %4241 = vmatmul.f32.gmra.mxu0 %v4214
    %v4242 = vpop.f32.mrf.mxu0
    %v4243 = vadd.f32 0.0, %v4242
    %4244 = vmatmul.f32.gmra.mxu0 %v4217
    %v4245 = vpop.f32.mrf.mxu0
    %v4246 = vadd.f32 0.0, %v4245
    %4247 = vmatmul.f32.gmra.mxu0 %v4220
    %v4248 = vpop.f32.mrf.mxu0
    %v4249 = vadd.f32 0.0, %v4248
    %4250 = vmatmul.f32.gmra.mxu0 %v4223
    %v4251 = vpop.f32.mrf.mxu0
    %v4252 = vadd.f32 0.0, %v4251
    %4253 = vdwg.mxu0
    %v4254 = vadd.f32 %v4197, %v4243
    %v4255 = vadd.f32 %v4200, %v4246
    %v4256 = vadd.f32 %v4203, %v4249
    %v4257 = vadd.f32 %v4206, %v4252
    %s4258 = scalar_lea.vmem %s59, 5
    %v4259 = vld [vmem:[%s4258] sm:$0x1]
    %v4261 = vperm.slane %v4259, 0
    %v4263 = vadd.f32 %v4254, %v4261
    %v4264 = vadd.f32 %v4255, %v4261
    %v4265 = vadd.f32 %v4256, %v4261
    %v4266 = vadd.f32 %v4257, %v4261
    %v4267 = vmax.f32 %v4263, 0.0
    %v4268 = vmax.f32 %v4264, 0.0
    %v4269 = vmax.f32 %v4265, 0.0
    %v4270 = vmax.f32 %v4266, 0.0
    %v4271 = vadd.f32 %v4071, %v4267
    %v4272 = vadd.f32 %v4072, %v4268
    %v4273 = vadd.f32 %v4073, %v4269
    %v4274 = vadd.f32 %v4074, %v4270
    %v4275 = vmul.f32 %v4271, %v2951
    %v4276 = vmul.f32 %v4272, %v2956
    %v4277 = vmul.f32 %v4273, %v2961
    %v4278 = vmul.f32 %v4274, %v2966
    %v4279 = vld [vmem:[%s7] sm:$0x3]
    %v4281 = vsel %vm193, %v4279, 0
    %4283 = vmatpush.msra.mxu0 0.0
    %4284 = vmatpush.msra.mxu0 0.0
    %4285 = vmatpush.msra.mxu0 0.0
    %4286 = vmatpush.msra.mxu0 0.0
    %4287 = vmatpush.msra.mxu0 0.0
    %4288 = vmatpush.msra.mxu0 0.0
    %4289 = vmatpush.msra.mxu0 0.0
    %4290 = vmatpush.msra.mxu0 0.0
    %4291 = vmatpush.msra.mxu0 0.0
    %4292 = vmatpush.msra.mxu0 0.0
    %4293 = vmatpush.msra.mxu0 0.0
    %4294 = vmatpush.msra.mxu0 0.0
    %4295 = vmatpush.msra.mxu0 %v4278
    %4296 = vmatpush.msra.mxu0 %v4277
    %4297 = vmatpush.msra.mxu0 %v4276
    %4298 = vmatpush.msra.mxu0 %v4275
    %4299 = vmatmul.f32.gmra.mxu0 %v4281
    %v4300 = vpop.f32.mrf.mxu0
    %v4301 = vadd.f32 0.0, %v4300
    %4302 = vdwg.mxu0
    %v4303 = vld [vmem:[%s61] sm:$0xff]
    %v4304 = vld [vmem:[%s61 + $0x8] sm:$0xff]
    %v4305 = vld [vmem:[%s61 + $0x10] sm:$0xff]
    %v4306 = vld [vmem:[%s61 + $0x18] sm:$0xff]
    %v4307 = vld [vmem:[#allocation2] sm:$0x1]
    %v4309 = vperm.slane %v4307, 0
    %v4312 = vsel %vm193, %v4301, 0
    %4314 = vmatpush.msra.mxu0 0.0
    %4315 = vmatpush.msra.mxu0 0.0
    %4316 = vmatpush.msra.mxu0 0.0
    %4317 = vmatpush.msra.mxu0 0.0
    %4318 = vmatpush.msra.mxu0 0.0
    %4319 = vmatpush.msra.mxu0 0.0
    %4320 = vmatpush.msra.mxu0 0.0
    %4321 = vmatpush.msra.mxu0 0.0
    %4322 = vmatpush.msra.mxu0 0.0
    %4323 = vmatpush.msra.mxu0 0.0
    %4324 = vmatpush.msra.mxu0 0.0
    %4325 = vmatpush.msra.mxu0 0.0
    %4326 = vmatpush.msra.mxu0 %v4306
    %4327 = vmatpush.msra.mxu0 %v4305
    %4328 = vmatpush.msra.mxu0 %v4304
    %4329 = vmatpush.msra.mxu0 %v4303
    %4330 = vmatmul.f32.gmra.mxu0 %v4312
    %v4331 = vpop.f32.mrf.mxu0
    %v4332 = vadd.f32 %v4309, %v4331
    %4333 = vdwg.mxu0
    %vm4334 = vcmask 1024
    %4335 = vst.msk [vmem:[%s69] sm:$0x3] %vm4334, %v4332
    %v4336 = vld [vmem:[#allocation4] sm:$0x1]
    %v4338 = vperm.slane %v4336, 0
    %v4340 = vmul.f32 %v4332, %v4338
    %v4341 = vld [vmem:[#allocation3] sm:$0x1]
    %v4343 = vperm.slane %v4341, 0
    %v4345 = vadd.f32 %v4340, %v4343
    %4346 = vst.msk [vmem:[%s71] sm:$0x3] %vm4334, %v4345
    // Predicated region
    $region142: #{forward.1} parent=1 // pred_check
      _
    $region143: #{forward.1} parent=1 // pred_check_branch
      %4348 = sbr.rel (0) target = $region145
    $region144: #{forward.1} parent=1 // pred_region
      _
    $region145: #{forward.1} parent=1 // pred_fallthru
      _
    // Predicated region
    $region146: #{forward.1} parent=1 // pred_check
      _
    $region147: #{forward.1} parent=1 // pred_check_branch
      %4350 = sbr.rel (0) target = $region149
    $region148: #{forward.1} parent=1 // pred_region
      _
    $region149: #{forward.1} parent=1 // pred_fallthru
      _
    // Predicated region
    $region150: #{forward.1} parent=1 // pred_check
      _
    $region151: #{forward.1} parent=1 // pred_check_branch
      %4352 = sbr.rel (0) target = $region153
    $region152: #{forward.1} parent=1 // pred_region
      _
    $region153: #{forward.1} parent=1 // pred_fallthru
      _
    // Predicated region
    $region154: #{forward.1} parent=1 // pred_check
      _
    $region155: #{forward.1} parent=1 // pred_check_branch
      %4354 = sbr.rel (0) target = $region157
    $region156: #{forward.1} parent=1 // pred_region
      _
    $region157: #{forward.1} parent=1 // pred_fallthru
      _
    %4355 = vsyncpa [#allocation6], 1

</llo_original>
